<compile_context>
chip_gen: v6e
topology: v6e:2x2x1
jax: 0.10.0
libtpu: 0.0.40
codegen_flags: <defaults>
</compile_context>

<pallas_src>
import jax
import jax.numpy as jnp
from jax.experimental import pallas as pl
from jax.experimental.pallas import tpu as pltpu

_EPS = 1e-5
_NEG = -1e30
_OUT_PAD = 128          # lane-dense logits padding (real logits in lanes 0:2)

# rows of the packed small-parameter block
_R_LN_G, _R_LN_B, _R_BN, _R_WASRC, _R_WADST, _R_BG = 0, 1, 2, 3, 4, 5
_R_BIN, _R_BO, _R_B1, _R_B2, _R_BLSTM = 6, 7, 8, 9, 10
_VEC_ROWS = 16          # padded to a multiple of 8


def _round_up(x, m):
    return ((x + m - 1) // m) * m


def _mm(a, w):
    """f32 activations x pre-transposed (in, out) bf16 weight, f32 MXU accum."""
    return jnp.dot(a.astype(jnp.bfloat16), w, preferred_element_type=jnp.float32)


def _layernorm(x, g, b):
    mu = jnp.mean(x, axis=-1, keepdims=True)
    var = jnp.mean((x - mu) ** 2, axis=-1, keepdims=True)
    return (x - mu) * jax.lax.rsqrt(var + _EPS) * g + b


def _leaky(z):
    return jnp.where(z > 0, z, 0.2 * z)


def social_lstm_kernel(tgt_ref, oth_ref, msk_ref, vec_ref,
                       w_ih_ref, w_hh_ref, wn_ref, wg_ref,
                       w_in_ref, wo_ref, w1_ref, w2_ref,
                       out_ref, hs_ref):
    T, TB, F = tgt_ref.shape
    Nmax = oth_ref.shape[0]
    H = w_hh_ref.shape[0]
    N = T * TB
    H3 = 3 * H

    # -------- unpack parameters (one small f32 block + bf16 weights) --------
    vec = vec_ref[...]
    ln_g   = vec[_R_LN_G:_R_LN_G + 1, :F]
    ln_b   = vec[_R_LN_B:_R_LN_B + 1, :F]
    bn     = vec[_R_BN:_R_BN + 1, :H]
    wa_src = vec[_R_WASRC:_R_WASRC + 1, :H]      # = wg.T @ att_src
    wa_dst = vec[_R_WADST:_R_WADST + 1, :H]      # = wg.T @ att_dst
    bg     = vec[_R_BG:_R_BG + 1, :H]
    b_in   = vec[_R_BIN:_R_BIN + 1, :H3]
    bo     = vec[_R_BO:_R_BO + 1, :H]
    b1     = vec[_R_B1:_R_B1 + 1, :H]
    b2     = vec[_R_B2:_R_B2 + 1, :out_ref.shape[1]]
    b_lstm = vec[_R_BLSTM:_R_BLSTM + 1, :4 * H]

    w_ih = w_ih_ref[...]   # (F, 4H), gate order [i, f, o, g], bf16
    w_hh = w_hh_ref[...]   # (H, 4H)
    wn   = wn_ref[...]     # (F, H)
    wg   = wg_ref[...]     # (H, H)   (= module wg transposed -> (in, out))
    w_in = w_in_ref[...]   # (H, 3H)
    wo   = wo_ref[...]     # (H, H)
    w1   = w1_ref[...]     # (H, H)
    w2   = w2_ref[...]     # (H, OUT_PAD), zero-padded beyond lane 2

    # -------- LayerNorm(target) + hoisted LSTM input projection --------
    x = tgt_ref[...].reshape(N, F)               # t-major: row = t*TB + b
    xn = _layernorm(x, ln_g, ln_b)
    xw = (_mm(xn, w_ih) + b_lstm).reshape(T, TB, 4 * H)   # bias folded once

    # -------- LSTM recurrence (T small, unrolled), h staged into scratch ----
    h = jnp.zeros((TB, H), jnp.float32)
    c = jnp.zeros((TB, H), jnp.float32)
    for t in range(T):
        gates = xw[t] + _mm(h, w_hh)             # (TB, 4H) lane-dense
        sig = jax.nn.sigmoid(gates[:, :H3])      # i, f, o only (g excluded)
        i_g = sig[:, 0:H]
        f_g = sig[:, H:2 * H]
        o_g = sig[:, 2 * H:H3]
        g_g = jnp.tanh(gates[:, H3:])
        c = f_g * c + i_g * g_g
        h = o_g * jnp.tanh(c)
        hs_ref[t] = h                            # bound live range in VMEM
    hs = hs_ref[...].reshape(N, H)

    # -------- star-GAT over neighbor slots (projection matmul eliminated) ---
    valid = msk_ref[...].reshape(Nmax, N, 1)     # 1.0 iff slot j < count
    has_nb = valid[0]                            # count > 0

    asrc_t = jnp.sum(hs * wa_src, axis=-1, keepdims=True)   # (N, 1)
    adst_t = jnp.sum(hs * wa_dst, axis=-1, keepdims=True)
    e_self = _leaky(asrc_t + adst_t)             # self-loop edge 0->0

    oth = oth_ref[...].reshape(Nmax * N, F)
    on = _layernorm(oth, ln_g, ln_b)
    ho = jnp.maximum(_mm(on, wn) + bn, 0.0)      # neighbor_fc, (Nmax*N, H)
    ho3 = ho.reshape(Nmax, N, H)
    e_nb = _leaky(jnp.sum(ho3 * wa_src, axis=-1, keepdims=True) + adst_t)
    e_nb = jnp.where(valid > 0.5, e_nb, _NEG)    # (Nmax, N, 1)

    m = jnp.maximum(e_self, jnp.max(e_nb, axis=0))           # (N, 1)
    p_self = jnp.exp(e_self - m)
    p_nb = jnp.exp(e_nb - m)                                 # ~0 when masked
    denom = p_self + jnp.sum(p_nb, axis=0)
    mix = p_self * hs + jnp.sum(p_nb * ho3, axis=0)          # (N, H)
    gat = _mm(mix, wg) * pl.reciprocal(denom, approx=True) + bg
    comb = jnp.where(has_nb > 0.5, gat, hs)                  # (N, H)

    # -------- single-head temporal attention (query = last step) --------
    qkv = (_mm(comb, w_in) + b_in).reshape(T, TB, H3)
    q = qkv[T - 1, :, 0:H]                       # (TB, H)
    k = qkv[:, :, H:2 * H]                       # (T, TB, H)
    v = qkv[:, :, 2 * H:H3]                      # (T, TB, H)

    scores = jnp.sum(q * k, axis=-1, keepdims=True) * (float(H) ** -0.5)
    sm = jnp.max(scores, axis=0, keepdims=True)
    sp = jnp.exp(scores - sm)
    attn = sp * pl.reciprocal(jnp.sum(sp, axis=0, keepdims=True), approx=True)
    att = _mm(jnp.sum(attn * v, axis=0), wo) + bo            # (TB, H)

    # -------- classifier, lane-dense padded logits store --------
    h1 = jnp.maximum(_mm(att, w1) + b1, 0.0)
    out_ref[...] = _mm(h1, w2) + b2                          # (TB, OUT_PAD)


def _reorder_gates(a):
    """PyTorch LSTM gate order [i, f, g, o] -> [i, f, o, g] along axis 0."""
    H = a.shape[0] // 4
    return jnp.concatenate([a[:2 * H], a[3 * H:], a[2 * H:3 * H]], axis=0)


def social_lstm_classifier(target, others, counts, p, tb=128):
    """target (B,T,F), others (B,T,Nmax,F) zero-padded, counts (B,T)."""
    B, T, F = target.shape
    Nmax = others.shape[2]
    H = p["wg"].shape[0]

    # batch tile: large for MXU M-fill, clamped so tiny batches do not blow up.
    # Sweep 64-256 on real workloads; keep footprint in mind for v7x (64 MiB VMEM).
    TB = _round_up(min(tb, _round_up(B, 8)), 8)
    Bp = _round_up(B, TB)
    pad = Bp - B
    counts = counts.astype(jnp.int32)
    if pad:
        target = jnp.pad(target, ((0, pad), (0, 0), (0, 0)))
        others = jnp.pad(others, ((0, pad), (0, 0), (0, 0), (0, 0)))
        counts = jnp.pad(counts, ((0, pad), (0, 0)))

    # time-major layouts so per-step slices are leading-axis reads
    tgt_tbf = jnp.transpose(target, (1, 0, 2))                    # (T, Bp, F)
    oth_ntbf = jnp.transpose(others, (2, 1, 0, 3))                # (Nmax, T, Bp, F)
    cnt_tb = jnp.transpose(counts, (1, 0))                        # (T, Bp)
    mask = (cnt_tb[None, :, :] >
            jnp.arange(Nmax, dtype=jnp.int32)[:, None, None])
    mask = mask.astype(jnp.float32)[..., None]                    # (Nmax, T, Bp, 1)

    # pack all small vector params into one (16, LW) f32 block (1 DMA)
    f32, bf16 = jnp.float32, jnp.bfloat16
    LW = _round_up(max(_OUT_PAD, 4 * H, 3 * H, F), 128)
    wa_src = p["wg"].astype(f32).T @ p["att_src"].astype(f32)     # wg^T a_src
    wa_dst = p["wg"].astype(f32).T @ p["att_dst"].astype(f32)
    vec = jnp.zeros((_VEC_ROWS, LW), f32)
    packed = [
        (_R_LN_G, p["ln_g"]), (_R_LN_B, p["ln_b"]), (_R_BN, p["bn"]),
        (_R_WASRC, wa_src), (_R_WADST, wa_dst), (_R_BG, p["bg"]),
        (_R_BIN, p["b_in"]), (_R_BO, p["bo"]), (_R_B1, p["b1"]),
        (_R_B2, p["b2"]),
        (_R_BLSTM, _reorder_gates(p["b_ih"] + p["b_hh"])),
    ]
    for r, v in packed:
        vec = vec.at[r, :v.shape[0]].set(v.astype(f32))

    # weights: gate-reordered, pre-transposed to (in, out), cast to bf16
    w2_pad = jnp.zeros((H, _OUT_PAD), f32).at[:, :2].set(p["w2"].astype(f32).T)
    mats = [
        _reorder_gates(p["w_ih"]).T.astype(bf16),   # (F, 4H)
        _reorder_gates(p["w_hh"]).T.astype(bf16),   # (H, 4H)
        p["wn"].T.astype(bf16),                     # (F, H)
        p["wg"].T.astype(bf16),                     # (H, H)
        p["w_in"].T.astype(bf16),                   # (H, 3H)
        p["wo"].T.astype(bf16),                     # (H, H)
        p["w1"].T.astype(bf16),                     # (H, H)
        w2_pad.astype(bf16),                        # (H, OUT_PAD)
    ]

    def rep_spec(shape):
        zero = (0,) * len(shape)
        return pl.BlockSpec(shape, lambda b, _z=zero: _z)

    in_specs = [
        pl.BlockSpec((T, TB, F), lambda b: (0, b, 0)),
        pl.BlockSpec((Nmax, T, TB, F), lambda b: (0, 0, b, 0)),
        pl.BlockSpec((Nmax, T, TB, 1), lambda b: (0, 0, b, 0)),
        rep_spec((_VEC_ROWS, LW)),
    ] + [rep_spec(tuple(m.shape)) for m in mats]

    grid_spec = pltpu.PrefetchScalarGridSpec(
        num_scalar_prefetch=0,
        grid=(Bp // TB,),
        in_specs=in_specs,
        out_specs=pl.BlockSpec((TB, _OUT_PAD), lambda b: (b, 0)),
        scratch_shapes=[pltpu.VMEM((T, TB, H), jnp.float32)],
    )
    out = pl.pallas_call(
        social_lstm_kernel,
        out_shape=jax.ShapeDtypeStruct((Bp, _OUT_PAD), jnp.float32),
        grid_spec=grid_spec,
        compiler_params=pltpu.CompilerParams(
            dimension_semantics=("parallel",)),      # batch tiles independent
    )(tgt_tbf, oth_ntbf, mask, vec, *mats)
    return out[:B, :2]


def reference_forward(target, others, counts, p):
    """Pure-JAX f32 mirror of the PyTorch module (Python loops over b, t)."""
    B, T, F = target.shape
    H = p["wg"].shape[0]

    def ln(x):
        mu = x.mean(-1, keepdims=True)
        var = ((x - mu) ** 2).mean(-1, keepdims=True)
        return (x - mu) / jnp.sqrt(var + _EPS) * p["ln_g"] + p["ln_b"]

    b_lstm = p["b_ih"] + p["b_hh"]
    outs = []
    for bb in range(B):
        xn = ln(target[bb])
        h = jnp.zeros((H,), jnp.float32)
        c = jnp.zeros((H,), jnp.float32)
        hs = []
        for t in range(T):
            g = p["w_ih"] @ xn[t] + p["w_hh"] @ h + b_lstm
            i_g = jax.nn.sigmoid(g[:H]); f_g = jax.nn.sigmoid(g[H:2 * H])
            g_g = jnp.tanh(g[2 * H:3 * H]); o_g = jax.nn.sigmoid(g[3 * H:])
            c = f_g * c + i_g * g_g
            h = o_g * jnp.tanh(c)
            hs.append(h)
        hs = jnp.stack(hs)
        comb = []
        for t in range(T):
            n = int(counts[bb, t])
            if n == 0:
                comb.append(hs[t]); continue
            oth = others[bb, t, :n]
            ho = jax.nn.relu(ln(oth) @ p["wn"].T + p["bn"])
            nodes = jnp.concatenate([hs[t][None], ho], axis=0)
            xp = nodes @ p["wg"].T
            a_s = xp @ p["att_src"]; a_d = xp @ p["att_dst"]
            e = a_s + a_d[0]                       # edges {0->0 self-loop, j->0}
            e = jnp.where(e > 0, e, 0.2 * e)
            al = jax.nn.softmax(e)
            comb.append((al[:, None] * xp).sum(0) + p["bg"])
        comb = jnp.stack(comb)
        wq, wk, wv = p["w_in"][:H], p["w_in"][H:2 * H], p["w_in"][2 * H:]
        bq, bk, bv = p["b_in"][:H], p["b_in"][H:2 * H], p["b_in"][2 * H:]
        q = comb[-1] @ wq.T + bq
        k = comb @ wk.T + bk
        v = comb @ wv.T + bv
        al = jax.nn.softmax((k @ q) / jnp.sqrt(jnp.float32(H)))
        att = (al @ v) @ p["wo"].T + p["bo"]
        h1 = jax.nn.relu(att @ p["w1"].T + p["b1"])
        outs.append(h1 @ p["w2"].T + p["b2"])
    return jnp.stack(outs)


if __name__ == "__main__":
    B, T, F, H, Nmax = 2, 8, 4, 32, 4            # observed = T = 8

    key = jax.random.PRNGKey(0)
    ks = jax.random.split(key, 24)

    def nrm(k, shape, s=0.2):
        return jax.random.normal(k, shape, jnp.float32) * s

    params = {
        "ln_g": 1.0 + nrm(ks[18], (F,), 0.1),
        "ln_b": nrm(ks[19], (F,), 0.1),
        "w_ih": nrm(ks[0], (4 * H, F)),
        "w_hh": nrm(ks[1], (4 * H, H)),
        "b_ih": nrm(ks[2], (4 * H,), 0.1),
        "b_hh": nrm(ks[3], (4 * H,), 0.1),
        "wn": nrm(ks[4], (H, F)),
        "bn": nrm(ks[5], (H,), 0.1),
        "wg": nrm(ks[6], (H, H)),
        "att_src": nrm(ks[7], (H,)),
        "att_dst": nrm(ks[8], (H,)),
        "bg": nrm(ks[9], (H,), 0.1),
        "w_in": nrm(ks[10], (3 * H, H)),
        "b_in": nrm(ks[11], (3 * H,), 0.1),
        "wo": nrm(ks[12], (H, H)),
        "bo": nrm(ks[13], (H,), 0.1),
        "w1": nrm(ks[14], (H, H)),
        "b1": nrm(ks[15], (H,), 0.1),
        "w2": nrm(ks[16], (2, H)),
        "b2": nrm(ks[17], (2,), 0.1),
    }

    target = nrm(ks[20], (B, T, F), 1.0)
    others = nrm(ks[21], (B, T, Nmax, F), 1.0)
    counts = jax.random.randint(ks[22], (B, T), 0, Nmax + 1).astype(jnp.int32)
    counts = counts.at[0, 0].set(0).at[1, 1].set(Nmax)   # exercise both branches

    logits = social_lstm_classifier(target, others, counts, params)
    logits = jax.block_until_ready(logits)
    assert logits.shape == (B, 2), logits.shape

    ref = reference_forward(target, others, counts, params)
    err = float(jnp.max(jnp.abs(logits - ref)))
    # tolerance covers bf16 MXU operands (accumulation stays f32)
    assert err < 5e-2, f"max abs error vs reference: {err}"

    print("KERNEL_OK")
</pallas_src>

<mosaic_0001>
module attributes {stable_mosaic.version = 11 : i64} {
  func.func @social_lstm_kernel(%arg0: i32, %arg1: memref<8x8x4xf32, #tpu.memory_space<vmem>>, %arg2: memref<4x8x8x4xf32, #tpu.memory_space<vmem>>, %arg3: memref<4x8x8x1xf32, #tpu.memory_space<vmem>>, %arg4: memref<16x128xf32, #tpu.memory_space<vmem>>, %arg5: memref<4x128xbf16, #tpu.memory_space<vmem>>, %arg6: memref<32x128xbf16, #tpu.memory_space<vmem>>, %arg7: memref<4x32xbf16, #tpu.memory_space<vmem>>, %arg8: memref<32x32xbf16, #tpu.memory_space<vmem>>, %arg9: memref<32x96xbf16, #tpu.memory_space<vmem>>, %arg10: memref<32x32xbf16, #tpu.memory_space<vmem>>, %arg11: memref<32x32xbf16, #tpu.memory_space<vmem>>, %arg12: memref<32x128xbf16, #tpu.memory_space<vmem>>, %arg13: memref<8x128xf32, #tpu.memory_space<vmem>>, %arg14: memref<8x8x32xf32, #tpu.memory_space<vmem>>) attributes {dimension_semantics = [#tpu.dimension_semantics<parallel>], iteration_bounds = array<i64: 1>, scalar_prefetch = 0 : i64, scratch_operands = 1 : i64, tpu.core_type = #tpu.core_type<tc>, window_params = [{transform_indices = @transform_0, window_bounds = array<i64: 8, 8, 4>}, {transform_indices = @transform_1, window_bounds = array<i64: 4, 8, 8, 4>}, {transform_indices = @transform_2, window_bounds = array<i64: 4, 8, 8, 1>}, {pipeline_mode = #tpu.pipeline_mode<synchronous>, transform_indices = @transform_3, window_bounds = array<i64: 16, 128>}, {pipeline_mode = #tpu.pipeline_mode<synchronous>, transform_indices = @transform_4, window_bounds = array<i64: 4, 128>}, {pipeline_mode = #tpu.pipeline_mode<synchronous>, transform_indices = @transform_5, window_bounds = array<i64: 32, 128>}, {pipeline_mode = #tpu.pipeline_mode<synchronous>, transform_indices = @transform_6, window_bounds = array<i64: 4, 32>}, {pipeline_mode = #tpu.pipeline_mode<synchronous>, transform_indices = @transform_7, window_bounds = array<i64: 32, 32>}, {pipeline_mode = #tpu.pipeline_mode<synchronous>, transform_indices = @transform_8, window_bounds = array<i64: 32, 96>}, {pipeline_mode = #tpu.pipeline_mode<synchronous>, transform_indices = @transform_9, window_bounds = array<i64: 32, 32>}, {pipeline_mode = #tpu.pipeline_mode<synchronous>, transform_indices = @transform_10, window_bounds = array<i64: 32, 32>}, {pipeline_mode = #tpu.pipeline_mode<synchronous>, transform_indices = @transform_11, window_bounds = array<i64: 32, 128>}, {transform_indices = @transform_12, window_bounds = array<i64: 8, 128>}]} {
    %c0 = arith.constant 0 : index
    %c0_0 = arith.constant 0 : index
    %0 = vector.load %arg4[%c0, %c0_0] : memref<16x128xf32, #tpu.memory_space<vmem>>, vector<16x128xf32>
    %1 = vector.extract_strided_slice %0 {offsets = [0, 0], sizes = [1, 4], strides = [1, 1]} : vector<16x128xf32> to vector<1x4xf32>
    %2 = vector.extract_strided_slice %0 {offsets = [1, 0], sizes = [1, 4], strides = [1, 1]} : vector<16x128xf32> to vector<1x4xf32>
    %3 = vector.extract_strided_slice %0 {offsets = [2, 0], sizes = [1, 32], strides = [1, 1]} : vector<16x128xf32> to vector<1x32xf32>
    %4 = vector.extract_strided_slice %0 {offsets = [3, 0], sizes = [1, 32], strides = [1, 1]} : vector<16x128xf32> to vector<1x32xf32>
    %5 = vector.extract_strided_slice %0 {offsets = [4, 0], sizes = [1, 32], strides = [1, 1]} : vector<16x128xf32> to vector<1x32xf32>
    %6 = vector.extract_strided_slice %0 {offsets = [5, 0], sizes = [1, 32], strides = [1, 1]} : vector<16x128xf32> to vector<1x32xf32>
    %7 = vector.extract_strided_slice %0 {offsets = [6, 0], sizes = [1, 96], strides = [1, 1]} : vector<16x128xf32> to vector<1x96xf32>
    %8 = vector.extract_strided_slice %0 {offsets = [7, 0], sizes = [1, 32], strides = [1, 1]} : vector<16x128xf32> to vector<1x32xf32>
    %9 = vector.extract_strided_slice %0 {offsets = [8, 0], sizes = [1, 32], strides = [1, 1]} : vector<16x128xf32> to vector<1x32xf32>
    %10 = vector.extract_strided_slice %0 {offsets = [9, 0], sizes = [1, 128], strides = [1, 1]} : vector<16x128xf32> to vector<1x128xf32>
    %11 = vector.extract_strided_slice %0 {offsets = [10, 0], sizes = [1, 128], strides = [1, 1]} : vector<16x128xf32> to vector<1x128xf32>
    %c0_1 = arith.constant 0 : index
    %c0_2 = arith.constant 0 : index
    %12 = vector.load %arg5[%c0_1, %c0_2] : memref<4x128xbf16, #tpu.memory_space<vmem>>, vector<4x128xbf16>
    %c0_3 = arith.constant 0 : index
    %c0_4 = arith.constant 0 : index
    %13 = vector.load %arg6[%c0_3, %c0_4] : memref<32x128xbf16, #tpu.memory_space<vmem>>, vector<32x128xbf16>
    %c0_5 = arith.constant 0 : index
    %c0_6 = arith.constant 0 : index
    %14 = vector.load %arg7[%c0_5, %c0_6] : memref<4x32xbf16, #tpu.memory_space<vmem>>, vector<4x32xbf16>
    %c0_7 = arith.constant 0 : index
    %c0_8 = arith.constant 0 : index
    %15 = vector.load %arg8[%c0_7, %c0_8] : memref<32x32xbf16, #tpu.memory_space<vmem>>, vector<32x32xbf16>
    %c0_9 = arith.constant 0 : index
    %c0_10 = arith.constant 0 : index
    %16 = vector.load %arg9[%c0_9, %c0_10] : memref<32x96xbf16, #tpu.memory_space<vmem>>, vector<32x96xbf16>
    %c0_11 = arith.constant 0 : index
    %c0_12 = arith.constant 0 : index
    %17 = vector.load %arg10[%c0_11, %c0_12] : memref<32x32xbf16, #tpu.memory_space<vmem>>, vector<32x32xbf16>
    %c0_13 = arith.constant 0 : index
    %c0_14 = arith.constant 0 : index
    %18 = vector.load %arg11[%c0_13, %c0_14] : memref<32x32xbf16, #tpu.memory_space<vmem>>, vector<32x32xbf16>
    %c0_15 = arith.constant 0 : index
    %c0_16 = arith.constant 0 : index
    %19 = vector.load %arg12[%c0_15, %c0_16] : memref<32x128xbf16, #tpu.memory_space<vmem>>, vector<32x128xbf16>
    %c0_17 = arith.constant 0 : index
    %c0_18 = arith.constant 0 : index
    %c0_19 = arith.constant 0 : index
    %20 = vector.load %arg1[%c0_17, %c0_18, %c0_19] : memref<8x8x4xf32, #tpu.memory_space<vmem>>, vector<8x8x4xf32>
    %21 = vector.shape_cast %20 : vector<8x8x4xf32> to vector<64x4xf32>
    %cst = arith.constant dense<0.000000e+00> : vector<64xf32>
    %22 = vector.multi_reduction <add>, %21, %cst [1] : vector<64x4xf32> to vector<64xf32>
    %23 = vector.shape_cast %22 : vector<64xf32> to vector<64x1xf32>
    %cst_20 = arith.constant 4.000000e+00 : f32
    %24 = vector.broadcast %cst_20 : f32 to vector<64x1xf32>
    %25 = arith.divf %23, %24 : vector<64x1xf32>
    %26 = vector.broadcast %25 : vector<64x1xf32> to vector<64x4xf32>
    %27 = arith.subf %21, %26 : vector<64x4xf32>
    %28 = arith.mulf %27, %27 : vector<64x4xf32>
    %cst_21 = arith.constant dense<0.000000e+00> : vector<64xf32>
    %29 = vector.multi_reduction <add>, %28, %cst_21 [1] : vector<64x4xf32> to vector<64xf32>
    %30 = vector.shape_cast %29 : vector<64xf32> to vector<64x1xf32>
    %cst_22 = arith.constant 4.000000e+00 : f32
    %31 = vector.broadcast %cst_22 : f32 to vector<64x1xf32>
    %32 = arith.divf %30, %31 : vector<64x1xf32>
    %33 = vector.broadcast %25 : vector<64x1xf32> to vector<64x4xf32>
    %34 = arith.subf %21, %33 : vector<64x4xf32>
    %cst_23 = arith.constant 9.99999974E-6 : f32
    %35 = vector.broadcast %cst_23 : f32 to vector<64x1xf32>
    %36 = arith.addf %32, %35 : vector<64x1xf32>
    %37 = math.rsqrt %36 : vector<64x1xf32>
    %38 = vector.broadcast %37 : vector<64x1xf32> to vector<64x4xf32>
    %39 = arith.mulf %34, %38 : vector<64x4xf32>
    %40 = vector.broadcast %1 : vector<1x4xf32> to vector<64x4xf32>
    %41 = arith.mulf %39, %40 : vector<64x4xf32>
    %42 = vector.broadcast %2 : vector<1x4xf32> to vector<64x4xf32>
    %43 = arith.addf %41, %42 : vector<64x4xf32>
    %44 = arith.truncf %43 : vector<64x4xf32> to vector<64x4xbf16>
    %cst_24 = arith.constant dense<0.000000e+00> : vector<64x128xf32>
    %45 = tpu.matmul %44, %12, %cst_24 {dimension_numbers = #tpu.dot_dimension_numbers<[1], [0], [0], [1], [0, 0, 1, 1], [], []>} : vector<64x4xbf16>, vector<4x128xbf16>, vector<64x128xf32> -> vector<64x128xf32>
    %46 = vector.broadcast %11 : vector<1x128xf32> to vector<64x128xf32>
    %47 = arith.addf %45, %46 : vector<64x128xf32>
    %48 = vector.shape_cast %47 : vector<64x128xf32> to vector<8x8x128xf32>
    %cst_25 = arith.constant 0.000000e+00 : f32
    %49 = vector.broadcast %cst_25 : f32 to vector<8x32xf32>
    %cst_26 = arith.constant 0.000000e+00 : f32
    %50 = vector.broadcast %cst_26 : f32 to vector<8x32xf32>
    %51 = vector.extract_strided_slice %48 {offsets = [0, 0, 0], sizes = [1, 8, 128], strides = [1, 1, 1]} : vector<8x8x128xf32> to vector<1x8x128xf32>
    %52 = vector.shape_cast %51 : vector<1x8x128xf32> to vector<8x128xf32>
    %53 = arith.truncf %49 : vector<8x32xf32> to vector<8x32xbf16>
    %cst_27 = arith.constant dense<0.000000e+00> : vector<8x128xf32>
    %54 = tpu.matmul %53, %13, %cst_27 {dimension_numbers = #tpu.dot_dimension_numbers<[1], [0], [0], [1], [0, 0, 1, 1], [], []>} : vector<8x32xbf16>, vector<32x128xbf16>, vector<8x128xf32> -> vector<8x128xf32>
    %55 = arith.addf %52, %54 : vector<8x128xf32>
    %56 = vector.extract_strided_slice %55 {offsets = [0, 0], sizes = [8, 96], strides = [1, 1]} : vector<8x128xf32> to vector<8x96xf32>
    %57 = arith.negf %56 : vector<8x96xf32>
    %58 = math.exp %57 : vector<8x96xf32>
    %cst_28 = arith.constant 1.000000e+00 : f32
    %59 = vector.broadcast %cst_28 : f32 to vector<8x96xf32>
    %60 = arith.addf %59, %58 : vector<8x96xf32>
    %61 = arith.divf %59, %60 : vector<8x96xf32>
    %62 = vector.extract_strided_slice %61 {offsets = [0, 0], sizes = [8, 32], strides = [1, 1]} : vector<8x96xf32> to vector<8x32xf32>
    %63 = vector.extract_strided_slice %61 {offsets = [0, 32], sizes = [8, 32], strides = [1, 1]} : vector<8x96xf32> to vector<8x32xf32>
    %64 = vector.extract_strided_slice %61 {offsets = [0, 64], sizes = [8, 32], strides = [1, 1]} : vector<8x96xf32> to vector<8x32xf32>
    %65 = vector.extract_strided_slice %55 {offsets = [0, 96], sizes = [8, 32], strides = [1, 1]} : vector<8x128xf32> to vector<8x32xf32>
    %66 = math.tanh %65 : vector<8x32xf32>
    %67 = arith.mulf %63, %50 : vector<8x32xf32>
    %68 = arith.mulf %62, %66 : vector<8x32xf32>
    %69 = arith.addf %67, %68 : vector<8x32xf32>
    %70 = math.tanh %69 : vector<8x32xf32>
    %71 = arith.mulf %64, %70 : vector<8x32xf32>
    %c0_29 = arith.constant 0 : index
    %c0_30 = arith.constant 0 : index
    %c0_31 = arith.constant 0 : index
    %72 = vector.load %arg14[%c0_29, %c0_30, %c0_31] : memref<8x8x32xf32, #tpu.memory_space<vmem>>, vector<1x8x32xf32>
    %73 = vector.shape_cast %72 : vector<1x8x32xf32> to vector<8x32xf32>
    %74 = vector.shape_cast %71 : vector<8x32xf32> to vector<1x8x32xf32>
    tpu.vector_store %arg14[%c0_29, %c0_30, %c0_31], %74 {strides = array<i32>} : memref<8x8x32xf32, #tpu.memory_space<vmem>>, vector<1x8x32xf32>,
    %75 = vector.extract_strided_slice %48 {offsets = [1, 0, 0], sizes = [1, 8, 128], strides = [1, 1, 1]} : vector<8x8x128xf32> to vector<1x8x128xf32>
    %76 = vector.shape_cast %75 : vector<1x8x128xf32> to vector<8x128xf32>
    %77 = arith.truncf %71 : vector<8x32xf32> to vector<8x32xbf16>
    %cst_32 = arith.constant dense<0.000000e+00> : vector<8x128xf32>
    %78 = tpu.matmul %77, %13, %cst_32 {dimension_numbers = #tpu.dot_dimension_numbers<[1], [0], [0], [1], [0, 0, 1, 1], [], []>} : vector<8x32xbf16>, vector<32x128xbf16>, vector<8x128xf32> -> vector<8x128xf32>
    %79 = arith.addf %76, %78 : vector<8x128xf32>
    %80 = vector.extract_strided_slice %79 {offsets = [0, 0], sizes = [8, 96], strides = [1, 1]} : vector<8x128xf32> to vector<8x96xf32>
    %81 = arith.negf %80 : vector<8x96xf32>
    %82 = math.exp %81 : vector<8x96xf32>
    %cst_33 = arith.constant 1.000000e+00 : f32
    %83 = vector.broadcast %cst_33 : f32 to vector<8x96xf32>
    %84 = arith.addf %83, %82 : vector<8x96xf32>
    %85 = arith.divf %83, %84 : vector<8x96xf32>
    %86 = vector.extract_strided_slice %85 {offsets = [0, 0], sizes = [8, 32], strides = [1, 1]} : vector<8x96xf32> to vector<8x32xf32>
    %87 = vector.extract_strided_slice %85 {offsets = [0, 32], sizes = [8, 32], strides = [1, 1]} : vector<8x96xf32> to vector<8x32xf32>
    %88 = vector.extract_strided_slice %85 {offsets = [0, 64], sizes = [8, 32], strides = [1, 1]} : vector<8x96xf32> to vector<8x32xf32>
    %89 = vector.extract_strided_slice %79 {offsets = [0, 96], sizes = [8, 32], strides = [1, 1]} : vector<8x128xf32> to vector<8x32xf32>
    %90 = math.tanh %89 : vector<8x32xf32>
    %91 = arith.mulf %87, %69 : vector<8x32xf32>
    %92 = arith.mulf %86, %90 : vector<8x32xf32>
    %93 = arith.addf %91, %92 : vector<8x32xf32>
    %94 = math.tanh %93 : vector<8x32xf32>
    %95 = arith.mulf %88, %94 : vector<8x32xf32>
    %c1 = arith.constant 1 : index
    %c0_34 = arith.constant 0 : index
    %c0_35 = arith.constant 0 : index
    %96 = vector.load %arg14[%c1, %c0_34, %c0_35] : memref<8x8x32xf32, #tpu.memory_space<vmem>>, vector<1x8x32xf32>
    %97 = vector.shape_cast %96 : vector<1x8x32xf32> to vector<8x32xf32>
    %98 = vector.shape_cast %95 : vector<8x32xf32> to vector<1x8x32xf32>
    tpu.vector_store %arg14[%c1, %c0_34, %c0_35], %98 {strides = array<i32>} : memref<8x8x32xf32, #tpu.memory_space<vmem>>, vector<1x8x32xf32>,
    %99 = vector.extract_strided_slice %48 {offsets = [2, 0, 0], sizes = [1, 8, 128], strides = [1, 1, 1]} : vector<8x8x128xf32> to vector<1x8x128xf32>
    %100 = vector.shape_cast %99 : vector<1x8x128xf32> to vector<8x128xf32>
    %101 = arith.truncf %95 : vector<8x32xf32> to vector<8x32xbf16>
    %cst_36 = arith.constant dense<0.000000e+00> : vector<8x128xf32>
    %102 = tpu.matmul %101, %13, %cst_36 {dimension_numbers = #tpu.dot_dimension_numbers<[1], [0], [0], [1], [0, 0, 1, 1], [], []>} : vector<8x32xbf16>, vector<32x128xbf16>, vector<8x128xf32> -> vector<8x128xf32>
    %103 = arith.addf %100, %102 : vector<8x128xf32>
    %104 = vector.extract_strided_slice %103 {offsets = [0, 0], sizes = [8, 96], strides = [1, 1]} : vector<8x128xf32> to vector<8x96xf32>
    %105 = arith.negf %104 : vector<8x96xf32>
    %106 = math.exp %105 : vector<8x96xf32>
    %cst_37 = arith.constant 1.000000e+00 : f32
    %107 = vector.broadcast %cst_37 : f32 to vector<8x96xf32>
    %108 = arith.addf %107, %106 : vector<8x96xf32>
    %109 = arith.divf %107, %108 : vector<8x96xf32>
    %110 = vector.extract_strided_slice %109 {offsets = [0, 0], sizes = [8, 32], strides = [1, 1]} : vector<8x96xf32> to vector<8x32xf32>
    %111 = vector.extract_strided_slice %109 {offsets = [0, 32], sizes = [8, 32], strides = [1, 1]} : vector<8x96xf32> to vector<8x32xf32>
    %112 = vector.extract_strided_slice %109 {offsets = [0, 64], sizes = [8, 32], strides = [1, 1]} : vector<8x96xf32> to vector<8x32xf32>
    %113 = vector.extract_strided_slice %103 {offsets = [0, 96], sizes = [8, 32], strides = [1, 1]} : vector<8x128xf32> to vector<8x32xf32>
    %114 = math.tanh %113 : vector<8x32xf32>
    %115 = arith.mulf %111, %93 : vector<8x32xf32>
    %116 = arith.mulf %110, %114 : vector<8x32xf32>
    %117 = arith.addf %115, %116 : vector<8x32xf32>
    %118 = math.tanh %117 : vector<8x32xf32>
    %119 = arith.mulf %112, %118 : vector<8x32xf32>
    %c2 = arith.constant 2 : index
    %c0_38 = arith.constant 0 : index
    %c0_39 = arith.constant 0 : index
    %120 = vector.load %arg14[%c2, %c0_38, %c0_39] : memref<8x8x32xf32, #tpu.memory_space<vmem>>, vector<1x8x32xf32>
    %121 = vector.shape_cast %120 : vector<1x8x32xf32> to vector<8x32xf32>
    %122 = vector.shape_cast %119 : vector<8x32xf32> to vector<1x8x32xf32>
    tpu.vector_store %arg14[%c2, %c0_38, %c0_39], %122 {strides = array<i32>} : memref<8x8x32xf32, #tpu.memory_space<vmem>>, vector<1x8x32xf32>,
    %123 = vector.extract_strided_slice %48 {offsets = [3, 0, 0], sizes = [1, 8, 128], strides = [1, 1, 1]} : vector<8x8x128xf32> to vector<1x8x128xf32>
    %124 = vector.shape_cast %123 : vector<1x8x128xf32> to vector<8x128xf32>
    %125 = arith.truncf %119 : vector<8x32xf32> to vector<8x32xbf16>
    %cst_40 = arith.constant dense<0.000000e+00> : vector<8x128xf32>
    %126 = tpu.matmul %125, %13, %cst_40 {dimension_numbers = #tpu.dot_dimension_numbers<[1], [0], [0], [1], [0, 0, 1, 1], [], []>} : vector<8x32xbf16>, vector<32x128xbf16>, vector<8x128xf32> -> vector<8x128xf32>
    %127 = arith.addf %124, %126 : vector<8x128xf32>
    %128 = vector.extract_strided_slice %127 {offsets = [0, 0], sizes = [8, 96], strides = [1, 1]} : vector<8x128xf32> to vector<8x96xf32>
    %129 = arith.negf %128 : vector<8x96xf32>
    %130 = math.exp %129 : vector<8x96xf32>
    %cst_41 = arith.constant 1.000000e+00 : f32
    %131 = vector.broadcast %cst_41 : f32 to vector<8x96xf32>
    %132 = arith.addf %131, %130 : vector<8x96xf32>
    %133 = arith.divf %131, %132 : vector<8x96xf32>
    %134 = vector.extract_strided_slice %133 {offsets = [0, 0], sizes = [8, 32], strides = [1, 1]} : vector<8x96xf32> to vector<8x32xf32>
    %135 = vector.extract_strided_slice %133 {offsets = [0, 32], sizes = [8, 32], strides = [1, 1]} : vector<8x96xf32> to vector<8x32xf32>
    %136 = vector.extract_strided_slice %133 {offsets = [0, 64], sizes = [8, 32], strides = [1, 1]} : vector<8x96xf32> to vector<8x32xf32>
    %137 = vector.extract_strided_slice %127 {offsets = [0, 96], sizes = [8, 32], strides = [1, 1]} : vector<8x128xf32> to vector<8x32xf32>
    %138 = math.tanh %137 : vector<8x32xf32>
    %139 = arith.mulf %135, %117 : vector<8x32xf32>
    %140 = arith.mulf %134, %138 : vector<8x32xf32>
    %141 = arith.addf %139, %140 : vector<8x32xf32>
    %142 = math.tanh %141 : vector<8x32xf32>
    %143 = arith.mulf %136, %142 : vector<8x32xf32>
    %c3 = arith.constant 3 : index
    %c0_42 = arith.constant 0 : index
    %c0_43 = arith.constant 0 : index
    %144 = vector.load %arg14[%c3, %c0_42, %c0_43] : memref<8x8x32xf32, #tpu.memory_space<vmem>>, vector<1x8x32xf32>
    %145 = vector.shape_cast %144 : vector<1x8x32xf32> to vector<8x32xf32>
    %146 = vector.shape_cast %143 : vector<8x32xf32> to vector<1x8x32xf32>
    tpu.vector_store %arg14[%c3, %c0_42, %c0_43], %146 {strides = array<i32>} : memref<8x8x32xf32, #tpu.memory_space<vmem>>, vector<1x8x32xf32>,
    %147 = vector.extract_strided_slice %48 {offsets = [4, 0, 0], sizes = [1, 8, 128], strides = [1, 1, 1]} : vector<8x8x128xf32> to vector<1x8x128xf32>
    %148 = vector.shape_cast %147 : vector<1x8x128xf32> to vector<8x128xf32>
    %149 = arith.truncf %143 : vector<8x32xf32> to vector<8x32xbf16>
    %cst_44 = arith.constant dense<0.000000e+00> : vector<8x128xf32>
    %150 = tpu.matmul %149, %13, %cst_44 {dimension_numbers = #tpu.dot_dimension_numbers<[1], [0], [0], [1], [0, 0, 1, 1], [], []>} : vector<8x32xbf16>, vector<32x128xbf16>, vector<8x128xf32> -> vector<8x128xf32>
    %151 = arith.addf %148, %150 : vector<8x128xf32>
    %152 = vector.extract_strided_slice %151 {offsets = [0, 0], sizes = [8, 96], strides = [1, 1]} : vector<8x128xf32> to vector<8x96xf32>
    %153 = arith.negf %152 : vector<8x96xf32>
    %154 = math.exp %153 : vector<8x96xf32>
    %cst_45 = arith.constant 1.000000e+00 : f32
    %155 = vector.broadcast %cst_45 : f32 to vector<8x96xf32>
    %156 = arith.addf %155, %154 : vector<8x96xf32>
    %157 = arith.divf %155, %156 : vector<8x96xf32>
    %158 = vector.extract_strided_slice %157 {offsets = [0, 0], sizes = [8, 32], strides = [1, 1]} : vector<8x96xf32> to vector<8x32xf32>
    %159 = vector.extract_strided_slice %157 {offsets = [0, 32], sizes = [8, 32], strides = [1, 1]} : vector<8x96xf32> to vector<8x32xf32>
    %160 = vector.extract_strided_slice %157 {offsets = [0, 64], sizes = [8, 32], strides = [1, 1]} : vector<8x96xf32> to vector<8x32xf32>
    %161 = vector.extract_strided_slice %151 {offsets = [0, 96], sizes = [8, 32], strides = [1, 1]} : vector<8x128xf32> to vector<8x32xf32>
    %162 = math.tanh %161 : vector<8x32xf32>
    %163 = arith.mulf %159, %141 : vector<8x32xf32>
    %164 = arith.mulf %158, %162 : vector<8x32xf32>
    %165 = arith.addf %163, %164 : vector<8x32xf32>
    %166 = math.tanh %165 : vector<8x32xf32>
    %167 = arith.mulf %160, %166 : vector<8x32xf32>
    %c4 = arith.constant 4 : index
    %c0_46 = arith.constant 0 : index
    %c0_47 = arith.constant 0 : index
    %168 = vector.load %arg14[%c4, %c0_46, %c0_47] : memref<8x8x32xf32, #tpu.memory_space<vmem>>, vector<1x8x32xf32>
    %169 = vector.shape_cast %168 : vector<1x8x32xf32> to vector<8x32xf32>
    %170 = vector.shape_cast %167 : vector<8x32xf32> to vector<1x8x32xf32>
    tpu.vector_store %arg14[%c4, %c0_46, %c0_47], %170 {strides = array<i32>} : memref<8x8x32xf32, #tpu.memory_space<vmem>>, vector<1x8x32xf32>,
    %171 = vector.extract_strided_slice %48 {offsets = [5, 0, 0], sizes = [1, 8, 128], strides = [1, 1, 1]} : vector<8x8x128xf32> to vector<1x8x128xf32>
    %172 = vector.shape_cast %171 : vector<1x8x128xf32> to vector<8x128xf32>
    %173 = arith.truncf %167 : vector<8x32xf32> to vector<8x32xbf16>
    %cst_48 = arith.constant dense<0.000000e+00> : vector<8x128xf32>
    %174 = tpu.matmul %173, %13, %cst_48 {dimension_numbers = #tpu.dot_dimension_numbers<[1], [0], [0], [1], [0, 0, 1, 1], [], []>} : vector<8x32xbf16>, vector<32x128xbf16>, vector<8x128xf32> -> vector<8x128xf32>
    %175 = arith.addf %172, %174 : vector<8x128xf32>
    %176 = vector.extract_strided_slice %175 {offsets = [0, 0], sizes = [8, 96], strides = [1, 1]} : vector<8x128xf32> to vector<8x96xf32>
    %177 = arith.negf %176 : vector<8x96xf32>
    %178 = math.exp %177 : vector<8x96xf32>
    %cst_49 = arith.constant 1.000000e+00 : f32
    %179 = vector.broadcast %cst_49 : f32 to vector<8x96xf32>
    %180 = arith.addf %179, %178 : vector<8x96xf32>
    %181 = arith.divf %179, %180 : vector<8x96xf32>
    %182 = vector.extract_strided_slice %181 {offsets = [0, 0], sizes = [8, 32], strides = [1, 1]} : vector<8x96xf32> to vector<8x32xf32>
    %183 = vector.extract_strided_slice %181 {offsets = [0, 32], sizes = [8, 32], strides = [1, 1]} : vector<8x96xf32> to vector<8x32xf32>
    %184 = vector.extract_strided_slice %181 {offsets = [0, 64], sizes = [8, 32], strides = [1, 1]} : vector<8x96xf32> to vector<8x32xf32>
    %185 = vector.extract_strided_slice %175 {offsets = [0, 96], sizes = [8, 32], strides = [1, 1]} : vector<8x128xf32> to vector<8x32xf32>
    %186 = math.tanh %185 : vector<8x32xf32>
    %187 = arith.mulf %183, %165 : vector<8x32xf32>
    %188 = arith.mulf %182, %186 : vector<8x32xf32>
    %189 = arith.addf %187, %188 : vector<8x32xf32>
    %190 = math.tanh %189 : vector<8x32xf32>
    %191 = arith.mulf %184, %190 : vector<8x32xf32>
    %c5 = arith.constant 5 : index
    %c0_50 = arith.constant 0 : index
    %c0_51 = arith.constant 0 : index
    %192 = vector.load %arg14[%c5, %c0_50, %c0_51] : memref<8x8x32xf32, #tpu.memory_space<vmem>>, vector<1x8x32xf32>
    %193 = vector.shape_cast %192 : vector<1x8x32xf32> to vector<8x32xf32>
    %194 = vector.shape_cast %191 : vector<8x32xf32> to vector<1x8x32xf32>
    tpu.vector_store %arg14[%c5, %c0_50, %c0_51], %194 {strides = array<i32>} : memref<8x8x32xf32, #tpu.memory_space<vmem>>, vector<1x8x32xf32>,
    %195 = vector.extract_strided_slice %48 {offsets = [6, 0, 0], sizes = [1, 8, 128], strides = [1, 1, 1]} : vector<8x8x128xf32> to vector<1x8x128xf32>
    %196 = vector.shape_cast %195 : vector<1x8x128xf32> to vector<8x128xf32>
    %197 = arith.truncf %191 : vector<8x32xf32> to vector<8x32xbf16>
    %cst_52 = arith.constant dense<0.000000e+00> : vector<8x128xf32>
    %198 = tpu.matmul %197, %13, %cst_52 {dimension_numbers = #tpu.dot_dimension_numbers<[1], [0], [0], [1], [0, 0, 1, 1], [], []>} : vector<8x32xbf16>, vector<32x128xbf16>, vector<8x128xf32> -> vector<8x128xf32>
    %199 = arith.addf %196, %198 : vector<8x128xf32>
    %200 = vector.extract_strided_slice %199 {offsets = [0, 0], sizes = [8, 96], strides = [1, 1]} : vector<8x128xf32> to vector<8x96xf32>
    %201 = arith.negf %200 : vector<8x96xf32>
    %202 = math.exp %201 : vector<8x96xf32>
    %cst_53 = arith.constant 1.000000e+00 : f32
    %203 = vector.broadcast %cst_53 : f32 to vector<8x96xf32>
    %204 = arith.addf %203, %202 : vector<8x96xf32>
    %205 = arith.divf %203, %204 : vector<8x96xf32>
    %206 = vector.extract_strided_slice %205 {offsets = [0, 0], sizes = [8, 32], strides = [1, 1]} : vector<8x96xf32> to vector<8x32xf32>
    %207 = vector.extract_strided_slice %205 {offsets = [0, 32], sizes = [8, 32], strides = [1, 1]} : vector<8x96xf32> to vector<8x32xf32>
    %208 = vector.extract_strided_slice %205 {offsets = [0, 64], sizes = [8, 32], strides = [1, 1]} : vector<8x96xf32> to vector<8x32xf32>
    %209 = vector.extract_strided_slice %199 {offsets = [0, 96], sizes = [8, 32], strides = [1, 1]} : vector<8x128xf32> to vector<8x32xf32>
    %210 = math.tanh %209 : vector<8x32xf32>
    %211 = arith.mulf %207, %189 : vector<8x32xf32>
    %212 = arith.mulf %206, %210 : vector<8x32xf32>
    %213 = arith.addf %211, %212 : vector<8x32xf32>
    %214 = math.tanh %213 : vector<8x32xf32>
    %215 = arith.mulf %208, %214 : vector<8x32xf32>
    %c6 = arith.constant 6 : index
    %c0_54 = arith.constant 0 : index
    %c0_55 = arith.constant 0 : index
    %216 = vector.load %arg14[%c6, %c0_54, %c0_55] : memref<8x8x32xf32, #tpu.memory_space<vmem>>, vector<1x8x32xf32>
    %217 = vector.shape_cast %216 : vector<1x8x32xf32> to vector<8x32xf32>
    %218 = vector.shape_cast %215 : vector<8x32xf32> to vector<1x8x32xf32>
    tpu.vector_store %arg14[%c6, %c0_54, %c0_55], %218 {strides = array<i32>} : memref<8x8x32xf32, #tpu.memory_space<vmem>>, vector<1x8x32xf32>,
    %219 = vector.extract_strided_slice %48 {offsets = [7, 0, 0], sizes = [1, 8, 128], strides = [1, 1, 1]} : vector<8x8x128xf32> to vector<1x8x128xf32>
    %220 = vector.shape_cast %219 : vector<1x8x128xf32> to vector<8x128xf32>
    %221 = arith.truncf %215 : vector<8x32xf32> to vector<8x32xbf16>
    %cst_56 = arith.constant dense<0.000000e+00> : vector<8x128xf32>
    %222 = tpu.matmul %221, %13, %cst_56 {dimension_numbers = #tpu.dot_dimension_numbers<[1], [0], [0], [1], [0, 0, 1, 1], [], []>} : vector<8x32xbf16>, vector<32x128xbf16>, vector<8x128xf32> -> vector<8x128xf32>
    %223 = arith.addf %220, %222 : vector<8x128xf32>
    %224 = vector.extract_strided_slice %223 {offsets = [0, 0], sizes = [8, 96], strides = [1, 1]} : vector<8x128xf32> to vector<8x96xf32>
    %225 = arith.negf %224 : vector<8x96xf32>
    %226 = math.exp %225 : vector<8x96xf32>
    %cst_57 = arith.constant 1.000000e+00 : f32
    %227 = vector.broadcast %cst_57 : f32 to vector<8x96xf32>
    %228 = arith.addf %227, %226 : vector<8x96xf32>
    %229 = arith.divf %227, %228 : vector<8x96xf32>
    %230 = vector.extract_strided_slice %229 {offsets = [0, 0], sizes = [8, 32], strides = [1, 1]} : vector<8x96xf32> to vector<8x32xf32>
    %231 = vector.extract_strided_slice %229 {offsets = [0, 32], sizes = [8, 32], strides = [1, 1]} : vector<8x96xf32> to vector<8x32xf32>
    %232 = vector.extract_strided_slice %229 {offsets = [0, 64], sizes = [8, 32], strides = [1, 1]} : vector<8x96xf32> to vector<8x32xf32>
    %233 = vector.extract_strided_slice %223 {offsets = [0, 96], sizes = [8, 32], strides = [1, 1]} : vector<8x128xf32> to vector<8x32xf32>
    %234 = math.tanh %233 : vector<8x32xf32>
    %235 = arith.mulf %231, %213 : vector<8x32xf32>
    %236 = arith.mulf %230, %234 : vector<8x32xf32>
    %237 = arith.addf %235, %236 : vector<8x32xf32>
    %238 = math.tanh %237 : vector<8x32xf32>
    %239 = arith.mulf %232, %238 : vector<8x32xf32>
    %c7 = arith.constant 7 : index
    %c0_58 = arith.constant 0 : index
    %c0_59 = arith.constant 0 : index
    %240 = vector.load %arg14[%c7, %c0_58, %c0_59] : memref<8x8x32xf32, #tpu.memory_space<vmem>>, vector<1x8x32xf32>
    %241 = vector.shape_cast %240 : vector<1x8x32xf32> to vector<8x32xf32>
    %242 = vector.shape_cast %239 : vector<8x32xf32> to vector<1x8x32xf32>
    tpu.vector_store %arg14[%c7, %c0_58, %c0_59], %242 {strides = array<i32>} : memref<8x8x32xf32, #tpu.memory_space<vmem>>, vector<1x8x32xf32>,
    %c0_60 = arith.constant 0 : index
    %c0_61 = arith.constant 0 : index
    %c0_62 = arith.constant 0 : index
    %243 = vector.load %arg14[%c0_60, %c0_61, %c0_62] : memref<8x8x32xf32, #tpu.memory_space<vmem>>, vector<8x8x32xf32>
    %244 = vector.shape_cast %243 : vector<8x8x32xf32> to vector<64x32xf32>
    %c0_63 = arith.constant 0 : index
    %c0_64 = arith.constant 0 : index
    %c0_65 = arith.constant 0 : index
    %c0_66 = arith.constant 0 : index
    %245 = vector.load %arg3[%c0_63, %c0_64, %c0_65, %c0_66] : memref<4x8x8x1xf32, #tpu.memory_space<vmem>>, vector<4x8x8x1xf32>
    %246 = vector.shape_cast %245 : vector<4x8x8x1xf32> to vector<4x64x1xf32>
    %247 = vector.extract_strided_slice %246 {offsets = [0, 0, 0], sizes = [1, 64, 1], strides = [1, 1, 1]} : vector<4x64x1xf32> to vector<1x64x1xf32>
    %248 = vector.shape_cast %247 : vector<1x64x1xf32> to vector<64x1xf32>
    %249 = vector.broadcast %4 : vector<1x32xf32> to vector<64x32xf32>
    %250 = arith.mulf %244, %249 : vector<64x32xf32>
    %cst_67 = arith.constant dense<0.000000e+00> : vector<64xf32>
    %251 = vector.multi_reduction <add>, %250, %cst_67 [1] : vector<64x32xf32> to vector<64xf32>
    %252 = vector.shape_cast %251 : vector<64xf32> to vector<64x1xf32>
    %253 = vector.broadcast %5 : vector<1x32xf32> to vector<64x32xf32>
    %254 = arith.mulf %244, %253 : vector<64x32xf32>
    %cst_68 = arith.constant dense<0.000000e+00> : vector<64xf32>
    %255 = vector.multi_reduction <add>, %254, %cst_68 [1] : vector<64x32xf32> to vector<64xf32>
    %256 = vector.shape_cast %255 : vector<64xf32> to vector<64x1xf32>
    %257 = arith.addf %252, %256 : vector<64x1xf32>
    %cst_69 = arith.constant 0.000000e+00 : f32
    %258 = vector.broadcast %cst_69 : f32 to vector<64x1xf32>
    %259 = arith.cmpf ogt, %257, %258 : vector<64x1xf32>
    %cst_70 = arith.constant 2.000000e-01 : f32
    %260 = vector.broadcast %cst_70 : f32 to vector<64x1xf32>
    %261 = arith.mulf %260, %257 : vector<64x1xf32>
    %262 = arith.select %259, %257, %261 : vector<64x1xi1>, vector<64x1xf32>
    %c0_71 = arith.constant 0 : index
    %c0_72 = arith.constant 0 : index
    %c0_73 = arith.constant 0 : index
    %c0_74 = arith.constant 0 : index
    %263 = vector.load %arg2[%c0_71, %c0_72, %c0_73, %c0_74] : memref<4x8x8x4xf32, #tpu.memory_space<vmem>>, vector<4x8x8x4xf32>
    %264 = vector.shape_cast %263 : vector<4x8x8x4xf32> to vector<256x4xf32>
    %cst_75 = arith.constant dense<0.000000e+00> : vector<256xf32>
    %265 = vector.multi_reduction <add>, %264, %cst_75 [1] : vector<256x4xf32> to vector<256xf32>
    %266 = vector.shape_cast %265 : vector<256xf32> to vector<256x1xf32>
    %cst_76 = arith.constant 4.000000e+00 : f32
    %267 = vector.broadcast %cst_76 : f32 to vector<256x1xf32>
    %268 = arith.divf %266, %267 : vector<256x1xf32>
    %269 = vector.broadcast %268 : vector<256x1xf32> to vector<256x4xf32>
    %270 = arith.subf %264, %269 : vector<256x4xf32>
    %271 = arith.mulf %270, %270 : vector<256x4xf32>
    %cst_77 = arith.constant dense<0.000000e+00> : vector<256xf32>
    %272 = vector.multi_reduction <add>, %271, %cst_77 [1] : vector<256x4xf32> to vector<256xf32>
    %273 = vector.shape_cast %272 : vector<256xf32> to vector<256x1xf32>
    %cst_78 = arith.constant 4.000000e+00 : f32
    %274 = vector.broadcast %cst_78 : f32 to vector<256x1xf32>
    %275 = arith.divf %273, %274 : vector<256x1xf32>
    %276 = vector.broadcast %268 : vector<256x1xf32> to vector<256x4xf32>
    %277 = arith.subf %264, %276 : vector<256x4xf32>
    %cst_79 = arith.constant 9.99999974E-6 : f32
    %278 = vector.broadcast %cst_79 : f32 to vector<256x1xf32>
    %279 = arith.addf %275, %278 : vector<256x1xf32>
    %280 = math.rsqrt %279 : vector<256x1xf32>
    %281 = vector.broadcast %280 : vector<256x1xf32> to vector<256x4xf32>
    %282 = arith.mulf %277, %281 : vector<256x4xf32>
    %283 = vector.broadcast %1 : vector<1x4xf32> to vector<256x4xf32>
    %284 = arith.mulf %282, %283 : vector<256x4xf32>
    %285 = vector.broadcast %2 : vector<1x4xf32> to vector<256x4xf32>
    %286 = arith.addf %284, %285 : vector<256x4xf32>
    %287 = arith.truncf %286 : vector<256x4xf32> to vector<256x4xbf16>
    %cst_80 = arith.constant dense<0.000000e+00> : vector<256x32xf32>
    %288 = tpu.matmul %287, %14, %cst_80 {dimension_numbers = #tpu.dot_dimension_numbers<[1], [0], [0], [1], [0, 0, 1, 1], [], []>} : vector<256x4xbf16>, vector<4x32xbf16>, vector<256x32xf32> -> vector<256x32xf32>
    %289 = vector.broadcast %3 : vector<1x32xf32> to vector<256x32xf32>
    %290 = arith.addf %288, %289 : vector<256x32xf32>
    %cst_81 = arith.constant 0.000000e+00 : f32
    %291 = vector.broadcast %cst_81 : f32 to vector<256x32xf32>
    %292 = arith.maximumf %290, %291 : vector<256x32xf32>
    %293 = vector.shape_cast %292 : vector<256x32xf32> to vector<4x64x32xf32>
    %294 = vector.shape_cast %4 : vector<1x32xf32> to vector<1x1x32xf32>
    %295 = vector.broadcast %294 : vector<1x1x32xf32> to vector<4x64x32xf32>
    %296 = arith.mulf %293, %295 : vector<4x64x32xf32>
    %cst_82 = arith.constant dense<0.000000e+00> : vector<4x64xf32>
    %297 = vector.multi_reduction <add>, %296, %cst_82 [2] : vector<4x64x32xf32> to vector<4x64xf32>
    %298 = vector.shape_cast %297 : vector<4x64xf32> to vector<4x64x1xf32>
    %299 = vector.shape_cast %256 : vector<64x1xf32> to vector<1x64x1xf32>
    %300 = vector.broadcast %299 : vector<1x64x1xf32> to vector<4x64x1xf32>
    %301 = arith.addf %298, %300 : vector<4x64x1xf32>
    %cst_83 = arith.constant 0.000000e+00 : f32
    %302 = vector.broadcast %cst_83 : f32 to vector<4x64x1xf32>
    %303 = arith.cmpf ogt, %301, %302 : vector<4x64x1xf32>
    %cst_84 = arith.constant 2.000000e-01 : f32
    %304 = vector.broadcast %cst_84 : f32 to vector<4x64x1xf32>
    %305 = arith.mulf %304, %301 : vector<4x64x1xf32>
    %306 = arith.select %303, %301, %305 : vector<4x64x1xi1>, vector<4x64x1xf32>
    %cst_85 = arith.constant 5.000000e-01 : f32
    %307 = vector.broadcast %cst_85 : f32 to vector<4x64x1xf32>
    %308 = arith.cmpf ogt, %246, %307 : vector<4x64x1xf32>
    %cst_86 = arith.constant -1.000000e+30 : f32
    %309 = vector.broadcast %cst_86 : f32 to vector<4x64x1xf32>
    %310 = arith.select %308, %306, %309 : vector<4x64x1xi1>, vector<4x64x1xf32>
    %cst_87 = arith.constant dense<0xFF800000> : vector<64x1xf32>
    %311 = vector.multi_reduction <maximumf>, %310, %cst_87 [0] : vector<4x64x1xf32> to vector<64x1xf32>
    %312 = arith.maximumf %262, %311 : vector<64x1xf32>
    %313 = arith.subf %262, %312 : vector<64x1xf32>
    %314 = math.exp %313 : vector<64x1xf32>
    %315 = vector.shape_cast %312 : vector<64x1xf32> to vector<1x64x1xf32>
    %316 = vector.broadcast %315 : vector<1x64x1xf32> to vector<4x64x1xf32>
    %317 = arith.subf %310, %316 : vector<4x64x1xf32>
    %318 = math.exp %317 : vector<4x64x1xf32>
    %cst_88 = arith.constant dense<0.000000e+00> : vector<64x1xf32>
    %319 = vector.multi_reduction <add>, %318, %cst_88 [0] : vector<4x64x1xf32> to vector<64x1xf32>
    %320 = arith.addf %314, %319 : vector<64x1xf32>
    %321 = vector.broadcast %314 : vector<64x1xf32> to vector<64x32xf32>
    %322 = arith.mulf %321, %244 : vector<64x32xf32>
    %323 = vector.broadcast %318 : vector<4x64x1xf32> to vector<4x64x32xf32>
    %324 = arith.mulf %323, %293 : vector<4x64x32xf32>
    %cst_89 = arith.constant dense<0.000000e+00> : vector<64x32xf32>
    %325 = vector.multi_reduction <add>, %324, %cst_89 [0] : vector<4x64x32xf32> to vector<64x32xf32>
    %326 = arith.addf %322, %325 : vector<64x32xf32>
    %327 = arith.truncf %326 : vector<64x32xf32> to vector<64x32xbf16>
    %cst_90 = arith.constant dense<0.000000e+00> : vector<64x32xf32>
    %328 = tpu.matmul %327, %15, %cst_90 {dimension_numbers = #tpu.dot_dimension_numbers<[1], [0], [0], [1], [0, 0, 1, 1], [], []>} : vector<64x32xbf16>, vector<32x32xbf16>, vector<64x32xf32> -> vector<64x32xf32>
    %329 = tpu.reciprocal %320 {approx = true} : vector<64x1xf32> -> vector<64x1xf32>
    %330 = vector.broadcast %329 : vector<64x1xf32> to vector<64x32xf32>
    %331 = arith.mulf %328, %330 : vector<64x32xf32>
    %332 = vector.broadcast %6 : vector<1x32xf32> to vector<64x32xf32>
    %333 = arith.addf %331, %332 : vector<64x32xf32>
    %cst_91 = arith.constant 5.000000e-01 : f32
    %334 = vector.broadcast %cst_91 : f32 to vector<64x1xf32>
    %335 = arith.cmpf ogt, %248, %334 : vector<64x1xf32>
    %336 = vector.shape_cast %335 : vector<64x1xi1> to vector<64x1xi1>
    %337 = vector.broadcast %336 : vector<64x1xi1> to vector<64x32xi1>
    %338 = arith.select %337, %333, %244 : vector<64x32xi1>, vector<64x32xf32>
    %339 = arith.truncf %338 : vector<64x32xf32> to vector<64x32xbf16>
    %cst_92 = arith.constant dense<0.000000e+00> : vector<64x96xf32>
    %340 = tpu.matmul %339, %16, %cst_92 {dimension_numbers = #tpu.dot_dimension_numbers<[1], [0], [0], [1], [0, 0, 1, 1], [], []>} : vector<64x32xbf16>, vector<32x96xbf16>, vector<64x96xf32> -> vector<64x96xf32>
    %341 = vector.broadcast %7 : vector<1x96xf32> to vector<64x96xf32>
    %342 = arith.addf %340, %341 : vector<64x96xf32>
    %343 = vector.shape_cast %342 : vector<64x96xf32> to vector<8x8x96xf32>
    %344 = vector.extract_strided_slice %343 {offsets = [7, 0, 0], sizes = [1, 8, 32], strides = [1, 1, 1]} : vector<8x8x96xf32> to vector<1x8x32xf32>
    %345 = vector.shape_cast %344 : vector<1x8x32xf32> to vector<8x32xf32>
    %346 = vector.extract_strided_slice %343 {offsets = [0, 0, 32], sizes = [8, 8, 32], strides = [1, 1, 1]} : vector<8x8x96xf32> to vector<8x8x32xf32>
    %347 = vector.extract_strided_slice %343 {offsets = [0, 0, 64], sizes = [8, 8, 32], strides = [1, 1, 1]} : vector<8x8x96xf32> to vector<8x8x32xf32>
    %348 = vector.shape_cast %345 : vector<8x32xf32> to vector<1x8x32xf32>
    %349 = vector.broadcast %348 : vector<1x8x32xf32> to vector<8x8x32xf32>
    %350 = arith.mulf %349, %346 : vector<8x8x32xf32>
    %cst_93 = arith.constant dense<0.000000e+00> : vector<8x8xf32>
    %351 = vector.multi_reduction <add>, %350, %cst_93 [2] : vector<8x8x32xf32> to vector<8x8xf32>
    %352 = vector.shape_cast %351 : vector<8x8xf32> to vector<8x8x1xf32>
    %cst_94 = arith.constant 0.176776692 : f32
    %353 = vector.broadcast %cst_94 : f32 to vector<8x8x1xf32>
    %354 = arith.mulf %352, %353 : vector<8x8x1xf32>
    %cst_95 = arith.constant dense<0xFF800000> : vector<8x1xf32>
    %355 = vector.multi_reduction <maximumf>, %354, %cst_95 [0] : vector<8x8x1xf32> to vector<8x1xf32>
    %356 = vector.shape_cast %355 : vector<8x1xf32> to vector<1x8x1xf32>
    %357 = vector.broadcast %356 : vector<1x8x1xf32> to vector<8x8x1xf32>
    %358 = arith.subf %354, %357 : vector<8x8x1xf32>
    %359 = math.exp %358 : vector<8x8x1xf32>
    %cst_96 = arith.constant dense<0.000000e+00> : vector<8x1xf32>
    %360 = vector.multi_reduction <add>, %359, %cst_96 [0] : vector<8x8x1xf32> to vector<8x1xf32>
    %361 = vector.shape_cast %360 : vector<8x1xf32> to vector<1x8x1xf32>
    %362 = tpu.reciprocal %361 {approx = true} : vector<1x8x1xf32> -> vector<1x8x1xf32>
    %363 = vector.broadcast %362 : vector<1x8x1xf32> to vector<8x8x1xf32>
    %364 = arith.mulf %359, %363 : vector<8x8x1xf32>
    %365 = vector.broadcast %364 : vector<8x8x1xf32> to vector<8x8x32xf32>
    %366 = arith.mulf %365, %347 : vector<8x8x32xf32>
    %cst_97 = arith.constant dense<0.000000e+00> : vector<8x32xf32>
    %367 = vector.multi_reduction <add>, %366, %cst_97 [0] : vector<8x8x32xf32> to vector<8x32xf32>
    %368 = arith.truncf %367 : vector<8x32xf32> to vector<8x32xbf16>
    %cst_98 = arith.constant dense<0.000000e+00> : vector<8x32xf32>
    %369 = tpu.matmul %368, %17, %cst_98 {dimension_numbers = #tpu.dot_dimension_numbers<[1], [0], [0], [1], [0, 0, 1, 1], [], []>} : vector<8x32xbf16>, vector<32x32xbf16>, vector<8x32xf32> -> vector<8x32xf32>
    %370 = vector.broadcast %8 : vector<1x32xf32> to vector<8x32xf32>
    %371 = arith.addf %369, %370 : vector<8x32xf32>
    %372 = arith.truncf %371 : vector<8x32xf32> to vector<8x32xbf16>
    %cst_99 = arith.constant dense<0.000000e+00> : vector<8x32xf32>
    %373 = tpu.matmul %372, %18, %cst_99 {dimension_numbers = #tpu.dot_dimension_numbers<[1], [0], [0], [1], [0, 0, 1, 1], [], []>} : vector<8x32xbf16>, vector<32x32xbf16>, vector<8x32xf32> -> vector<8x32xf32>
    %374 = vector.broadcast %9 : vector<1x32xf32> to vector<8x32xf32>
    %375 = arith.addf %373, %374 : vector<8x32xf32>
    %cst_100 = arith.constant 0.000000e+00 : f32
    %376 = vector.broadcast %cst_100 : f32 to vector<8x32xf32>
    %377 = arith.maximumf %375, %376 : vector<8x32xf32>
    %378 = arith.truncf %377 : vector<8x32xf32> to vector<8x32xbf16>
    %cst_101 = arith.constant dense<0.000000e+00> : vector<8x128xf32>
    %379 = tpu.matmul %378, %19, %cst_101 {dimension_numbers = #tpu.dot_dimension_numbers<[1], [0], [0], [1], [0, 0, 1, 1], [], []>} : vector<8x32xbf16>, vector<32x128xbf16>, vector<8x128xf32> -> vector<8x128xf32>
    %380 = vector.broadcast %10 : vector<1x128xf32> to vector<8x128xf32>
    %381 = arith.addf %379, %380 : vector<8x128xf32>
    %c0_102 = arith.constant 0 : index
    %c0_103 = arith.constant 0 : index
    %382 = vector.load %arg13[%c0_102, %c0_103] : memref<8x128xf32, #tpu.memory_space<vmem>>, vector<8x128xf32>
    tpu.vector_store %arg13[%c0_102, %c0_103], %381 {strides = array<i32>} : memref<8x128xf32, #tpu.memory_space<vmem>>, vector<8x128xf32>,
    return
  }
  func.func @transform_0(%arg0: i32) -> (i32, i32, i32) {
    %c0_i32 = arith.constant 0 : i32
    %c0_i32_0 = arith.constant 0 : i32
    %c0_i32_1 = arith.constant 0 : i32
    return %c0_i32, %arg0, %c0_i32_0 : i32, i32, i32
  }
  func.func @transform_1(%arg0: i32) -> (i32, i32, i32, i32) {
    %c0_i32 = arith.constant 0 : i32
    %c0_i32_0 = arith.constant 0 : i32
    %c0_i32_1 = arith.constant 0 : i32
    %c0_i32_2 = arith.constant 0 : i32
    return %c0_i32, %c0_i32_0, %arg0, %c0_i32_1 : i32, i32, i32, i32
  }
  func.func @transform_2(%arg0: i32) -> (i32, i32, i32, i32) {
    %c0_i32 = arith.constant 0 : i32
    %c0_i32_0 = arith.constant 0 : i32
    %c0_i32_1 = arith.constant 0 : i32
    %c0_i32_2 = arith.constant 0 : i32
    return %c0_i32, %c0_i32_0, %arg0, %c0_i32_1 : i32, i32, i32, i32
  }
  func.func @transform_3(%arg0: i32) -> (i32, i32) {
    %c0_i32 = arith.constant 0 : i32
    %c0_i32_0 = arith.constant 0 : i32
    %c0_i32_1 = arith.constant 0 : i32
    return %c0_i32, %c0_i32_0 : i32, i32
  }
  func.func @transform_4(%arg0: i32) -> (i32, i32) {
    %c0_i32 = arith.constant 0 : i32
    %c0_i32_0 = arith.constant 0 : i32
    %c0_i32_1 = arith.constant 0 : i32
    return %c0_i32, %c0_i32_0 : i32, i32
  }
  func.func @transform_5(%arg0: i32) -> (i32, i32) {
    %c0_i32 = arith.constant 0 : i32
    %c0_i32_0 = arith.constant 0 : i32
    %c0_i32_1 = arith.constant 0 : i32
    return %c0_i32, %c0_i32_0 : i32, i32
  }
  func.func @transform_6(%arg0: i32) -> (i32, i32) {
    %c0_i32 = arith.constant 0 : i32
    %c0_i32_0 = arith.constant 0 : i32
    %c0_i32_1 = arith.constant 0 : i32
    return %c0_i32, %c0_i32_0 : i32, i32
  }
  func.func @transform_7(%arg0: i32) -> (i32, i32) {
    %c0_i32 = arith.constant 0 : i32
    %c0_i32_0 = arith.constant 0 : i32
    %c0_i32_1 = arith.constant 0 : i32
    return %c0_i32, %c0_i32_0 : i32, i32
  }
  func.func @transform_8(%arg0: i32) -> (i32, i32) {
    %c0_i32 = arith.constant 0 : i32
    %c0_i32_0 = arith.constant 0 : i32
    %c0_i32_1 = arith.constant 0 : i32
    return %c0_i32, %c0_i32_0 : i32, i32
  }
  func.func @transform_9(%arg0: i32) -> (i32, i32) {
    %c0_i32 = arith.constant 0 : i32
    %c0_i32_0 = arith.constant 0 : i32
    %c0_i32_1 = arith.constant 0 : i32
    return %c0_i32, %c0_i32_0 : i32, i32
  }
  func.func @transform_10(%arg0: i32) -> (i32, i32) {
    %c0_i32 = arith.constant 0 : i32
    %c0_i32_0 = arith.constant 0 : i32
    %c0_i32_1 = arith.constant 0 : i32
    return %c0_i32, %c0_i32_0 : i32, i32
  }
  func.func @transform_11(%arg0: i32) -> (i32, i32) {
    %c0_i32 = arith.constant 0 : i32
    %c0_i32_0 = arith.constant 0 : i32
    %c0_i32_1 = arith.constant 0 : i32
    return %c0_i32, %c0_i32_0 : i32, i32
  }
  func.func @transform_12(%arg0: i32) -> (i32, i32) {
    %c0_i32 = arith.constant 0 : i32
    %c0_i32_0 = arith.constant 0 : i32
    return %arg0, %c0_i32 : i32, i32
  }
}

</mosaic_0001>

<llo_original>
// kernel: tpu_custom_call.1
$region0: #{tpu_custom_call.1}
  #allocation0 [shape = 'u32[]', space=smem, size = 0x4, offset = 0x4, fixed_abs, tag = 'smem constant byte address 0x4 - core index']
  #allocation1 [shape = 'u32[144,128]{1,0:T(1,128)}', space=vmem, size = 0x12000, scoped, tag = 'internal scratch']
  #allocation2 [shape = 'f32[8,8,32]{2,1,0:T(8,128)}', space=vmem, size = 0x8000, scoped, tag = 'scratch operand']
  %s0 = inlined_call_operand.vmem [shape: f32[8,8,4], index: 0, kind: input, shape index: {}]
  %s1 = inlined_call_operand.vmem [shape: f32[4,8,8,4], index: 1, kind: input, shape index: {}]
  %s2 = inlined_call_operand.vmem [shape: f32[4,8,8,1], index: 2, kind: input, shape index: {}]
  %s3 = inlined_call_operand.vmem [shape: f32[16,128], index: 3, kind: input, shape index: {}]
  %s4 = inlined_call_operand.vmem [shape: bf16[4,128], index: 4, kind: input, shape index: {}]
  %s5 = inlined_call_operand.vmem [shape: bf16[32,128], index: 5, kind: input, shape index: {}]
  %s6 = inlined_call_operand.vmem [shape: bf16[4,32], index: 6, kind: input, shape index: {}]
  %s7 = inlined_call_operand.vmem [shape: bf16[32,32], index: 7, kind: input, shape index: {}]
  %s8 = inlined_call_operand.vmem [shape: bf16[32,96], index: 8, kind: input, shape index: {}]
  %s9 = inlined_call_operand.vmem [shape: bf16[32,32], index: 9, kind: input, shape index: {}]
  %s10 = inlined_call_operand.vmem [shape: bf16[32,32], index: 10, kind: input, shape index: {}]
  %s11 = inlined_call_operand.vmem [shape: bf16[32,128], index: 11, kind: input, shape index: {}]
  %s12 = inlined_call_operand.hbm [shape: f32[8,128], index: 12, kind: output, shape index: {}]
  %s13 = sld [smem:[#allocation0]]
  $region58: #{tpu_custom_call.1} parent=0
    _
  %s15 = ssub.s32 1, %s13
  %s16 = scalar_select 0, %s15, %s13
  $region1: #{tpu_custom_call.1} parent=0
    #allocation3 [shape = 'u8[4096]{0}', space=vmem, size = 0x1000, scoped, tag = 'output window, operand 0, single buffered']
    #allocation4 [shape = 's32[1]{0}', space=sflag, size = 0x4, scoped, tag = 'scoped memory for tpu_custom_call.1']
    %17 = vsyncpa [#allocation4], 0
    // Predicated region
    $region2: #{tpu_custom_call.1} parent=1 // pred_check
      _
    $region3: #{tpu_custom_call.1} parent=1 // pred_check_branch
      %19 = sbr.rel (0) target = $region5
    $region4: #{tpu_custom_call.1} parent=1 // pred_region
      _
    $region5: #{tpu_custom_call.1} parent=1 // pred_fallthru
      _
    // Predicated region
    $region6: #{tpu_custom_call.1} parent=1 // pred_check
      _
    $region7: #{tpu_custom_call.1} parent=1 // pred_check_branch
      %21 = sbr.rel (0) target = $region9
    $region8: #{tpu_custom_call.1} parent=1 // pred_region
      _
    $region9: #{tpu_custom_call.1} parent=1 // pred_fallthru
      _
    // Predicated region
    $region10: #{tpu_custom_call.1} parent=1 // pred_check
      _
    $region11: #{tpu_custom_call.1} parent=1 // pred_check_branch
      %23 = sbr.rel (0) target = $region13
    $region12: #{tpu_custom_call.1} parent=1 // pred_region
      _
    $region13: #{tpu_custom_call.1} parent=1 // pred_fallthru
      _
    // Predicated region
    $region14: #{tpu_custom_call.1} parent=1 // pred_check
      _
    $region15: #{tpu_custom_call.1} parent=1 // pred_check_branch
      %25 = sbr.rel (0) target = $region17
    $region16: #{tpu_custom_call.1} parent=1 // pred_region
      _
    $region17: #{tpu_custom_call.1} parent=1 // pred_fallthru
      _
    // Predicated region
    $region18: #{tpu_custom_call.1} parent=1 // pred_check
      _
    $region19: #{tpu_custom_call.1} parent=1 // pred_check_branch
      %27 = sbr.rel (0) target = $region21
    $region20: #{tpu_custom_call.1} parent=1 // pred_region
      _
    $region21: #{tpu_custom_call.1} parent=1 // pred_fallthru
      _
    // Predicated region
    $region22: #{tpu_custom_call.1} parent=1 // pred_check
      _
    $region23: #{tpu_custom_call.1} parent=1 // pred_check_branch
      %29 = sbr.rel (0) target = $region25
    $region24: #{tpu_custom_call.1} parent=1 // pred_region
      _
    $region25: #{tpu_custom_call.1} parent=1 // pred_fallthru
      _
    // Predicated region
    $region26: #{tpu_custom_call.1} parent=1 // pred_check
      _
    $region27: #{tpu_custom_call.1} parent=1 // pred_check_branch
      %31 = sbr.rel (0) target = $region29
    $region28: #{tpu_custom_call.1} parent=1 // pred_region
      _
    $region29: #{tpu_custom_call.1} parent=1 // pred_fallthru
      _
    // Predicated region
    $region30: #{tpu_custom_call.1} parent=1 // pred_check
      _
    $region31: #{tpu_custom_call.1} parent=1 // pred_check_branch
      %33 = sbr.rel (0) target = $region33
    $region32: #{tpu_custom_call.1} parent=1 // pred_region
      _
    $region33: #{tpu_custom_call.1} parent=1 // pred_fallthru
      _
    // Predicated region
    $region34: #{tpu_custom_call.1} parent=1 // pred_check
      _
    $region35: #{tpu_custom_call.1} parent=1 // pred_check_branch
      %35 = sbr.rel (0) target = $region37
    $region36: #{tpu_custom_call.1} parent=1 // pred_region
      _
    $region37: #{tpu_custom_call.1} parent=1 // pred_fallthru
      _
    // Predicated region
    $region38: #{tpu_custom_call.1} parent=1 // pred_check
      _
    $region39: #{tpu_custom_call.1} parent=1 // pred_check_branch
      %37 = sbr.rel (0) target = $region41
    $region40: #{tpu_custom_call.1} parent=1 // pred_region
      _
    $region41: #{tpu_custom_call.1} parent=1 // pred_fallthru
      _
    // Predicated region
    $region42: #{tpu_custom_call.1} parent=1 // pred_check
      _
    $region43: #{tpu_custom_call.1} parent=1 // pred_check_branch
      %39 = sbr.rel (0) target = $region45
    $region44: #{tpu_custom_call.1} parent=1 // pred_region
      _
    $region45: #{tpu_custom_call.1} parent=1 // pred_fallthru
      _
    // Predicated region
    $region46: #{tpu_custom_call.1} parent=1 // pred_check
      _
    $region47: #{tpu_custom_call.1} parent=1 // pred_check_branch
      %41 = sbr.rel (0) target = $region49
    $region48: #{tpu_custom_call.1} parent=1 // pred_region
      _
    $region49: #{tpu_custom_call.1} parent=1 // pred_fallthru
      _
    %v43 = vld [vmem:[%s3] sm:$0xff]
    %v44 = vld [vmem:[%s3 + $0x8] sm:$0xff]
    %v45 = vld [vmem:[%s4] sm:$0x3]
    %v46 = vld [vmem:[%s5] sm:$0xf]
    %v47 = vld [vmem:[%s5 + $0x4] sm:$0xf]
    %v48 = vld [vmem:[%s5 + $0x8] sm:$0xf]
    %v49 = vld [vmem:[%s5 + $0xc] sm:$0xf]
    %v50 = vld [vmem:[%s6] sm:$0x3]
    %v51 = vld [vmem:[%s7] sm:$0xf]
    %v52 = vld [vmem:[%s7 + $0x4] sm:$0xf]
    %v53 = vld [vmem:[%s7 + $0x8] sm:$0xf]
    %v54 = vld [vmem:[%s7 + $0xc] sm:$0xf]
    %v55 = vld [vmem:[%s8] sm:$0xf]
    %v56 = vld [vmem:[%s8 + $0x4] sm:$0xf]
    %v57 = vld [vmem:[%s8 + $0x8] sm:$0xf]
    %v58 = vld [vmem:[%s8 + $0xc] sm:$0xf]
    %v59 = vld [vmem:[%s9] sm:$0xf]
    %v60 = vld [vmem:[%s9 + $0x4] sm:$0xf]
    %v61 = vld [vmem:[%s9 + $0x8] sm:$0xf]
    %v62 = vld [vmem:[%s9 + $0xc] sm:$0xf]
    %v63 = vld [vmem:[%s10] sm:$0xf]
    %v64 = vld [vmem:[%s10 + $0x4] sm:$0xf]
    %v65 = vld [vmem:[%s10 + $0x8] sm:$0xf]
    %v66 = vld [vmem:[%s10 + $0xc] sm:$0xf]
    %v67 = vld [vmem:[%s11] sm:$0xf]
    %v68 = vld [vmem:[%s11 + $0x4] sm:$0xf]
    %v69 = vld [vmem:[%s11 + $0x8] sm:$0xf]
    %v70 = vld [vmem:[%s11 + $0xc] sm:$0xf]
    %v71 = vld [vmem:[%s0] sm:$0xff]
    %v72 = vld [vmem:[%s0 + $0x8] sm:$0xff]
    %v73 = vld [vmem:[%s0 + $0x10] sm:$0xff]
    %v74 = vld [vmem:[%s0 + $0x18] sm:$0xff]
    %v75 = vld [vmem:[%s0 + $0x20] sm:$0xff]
    %v76 = vld [vmem:[%s0 + $0x28] sm:$0xff]
    %v77 = vld [vmem:[%s0 + $0x30] sm:$0xff]
    %v78 = vld [vmem:[%s0 + $0x38] sm:$0xff]
    %vm79 = vcmask 31744
    %v80 = vsel %vm79, %v71, 0.0
    %81 = vadd.xlane.f32.xlu0 %v80
    %v82 = vpop.xlane.xlu0 %81
    %v83 = vsel %vm79, %v72, 0.0
    %84 = vadd.xlane.f32.xlu0 %v83
    %v85 = vpop.xlane.xlu0 %84
    %v86 = vsel %vm79, %v73, 0.0
    %87 = vadd.xlane.f32.xlu0 %v86
    %v88 = vpop.xlane.xlu0 %87
    %v89 = vsel %vm79, %v74, 0.0
    %90 = vadd.xlane.f32.xlu0 %v89
    %v91 = vpop.xlane.xlu0 %90
    %v92 = vsel %vm79, %v75, 0.0
    %93 = vadd.xlane.f32.xlu0 %v92
    %v94 = vpop.xlane.xlu0 %93
    %v95 = vsel %vm79, %v76, 0.0
    %96 = vadd.xlane.f32.xlu0 %v95
    %v97 = vpop.xlane.xlu0 %96
    %v98 = vsel %vm79, %v77, 0.0
    %99 = vadd.xlane.f32.xlu0 %v98
    %v100 = vpop.xlane.xlu0 %99
    %v101 = vsel %vm79, %v78, 0.0
    %102 = vadd.xlane.f32.xlu0 %v101
    %v103 = vpop.xlane.xlu0 %102
    %v104 = vrcp.pop 4.0
    %v105 = vmul.f32 %v82, %v104
    %v106 = vmul.f32 %v85, %v104
    %v107 = vmul.f32 %v88, %v104
    %v108 = vmul.f32 %v91, %v104
    %v109 = vmul.f32 %v94, %v104
    %v110 = vmul.f32 %v97, %v104
    %v111 = vmul.f32 %v100, %v104
    %v112 = vmul.f32 %v103, %v104
    %v113 = vsub.f32 %v71, %v105
    %v114 = vsub.f32 %v72, %v106
    %v115 = vsub.f32 %v73, %v107
    %v116 = vsub.f32 %v74, %v108
    %v117 = vsub.f32 %v75, %v109
    %v118 = vsub.f32 %v76, %v110
    %v119 = vsub.f32 %v77, %v111
    %v120 = vsub.f32 %v78, %v112
    %v121 = vmul.f32 %v113, %v113
    %v122 = vmul.f32 %v114, %v114
    %v123 = vmul.f32 %v115, %v115
    %v124 = vmul.f32 %v116, %v116
    %v125 = vmul.f32 %v117, %v117
    %v126 = vmul.f32 %v118, %v118
    %v127 = vmul.f32 %v119, %v119
    %v128 = vmul.f32 %v120, %v120
    %v129 = vsel %vm79, %v121, 0.0
    %130 = vadd.xlane.f32.xlu0 %v129
    %v131 = vpop.xlane.xlu0 %130
    %v132 = vsel %vm79, %v122, 0.0
    %133 = vadd.xlane.f32.xlu0 %v132
    %v134 = vpop.xlane.xlu0 %133
    %v135 = vsel %vm79, %v123, 0.0
    %136 = vadd.xlane.f32.xlu0 %v135
    %v137 = vpop.xlane.xlu0 %136
    %v138 = vsel %vm79, %v124, 0.0
    %139 = vadd.xlane.f32.xlu0 %v138
    %v140 = vpop.xlane.xlu0 %139
    %v141 = vsel %vm79, %v125, 0.0
    %142 = vadd.xlane.f32.xlu0 %v141
    %v143 = vpop.xlane.xlu0 %142
    %v144 = vsel %vm79, %v126, 0.0
    %145 = vadd.xlane.f32.xlu0 %v144
    %v146 = vpop.xlane.xlu0 %145
    %v147 = vsel %vm79, %v127, 0.0
    %148 = vadd.xlane.f32.xlu0 %v147
    %v149 = vpop.xlane.xlu0 %148
    %v150 = vsel %vm79, %v128, 0.0
    %151 = vadd.xlane.f32.xlu0 %v150
    %v152 = vpop.xlane.xlu0 %151
    %v153 = vmul.f32 %v131, %v104
    %v154 = vmul.f32 %v134, %v104
    %v155 = vmul.f32 %v137, %v104
    %v156 = vmul.f32 %v140, %v104
    %v157 = vmul.f32 %v143, %v104
    %v158 = vmul.f32 %v146, %v104
    %v159 = vmul.f32 %v149, %v104
    %v160 = vmul.f32 %v152, %v104
    %v161 = vadd.f32 %v153, 1e-05
    %v162 = vadd.f32 %v154, 1e-05
    %v163 = vadd.f32 %v155, 1e-05
    %v164 = vadd.f32 %v156, 1e-05
    %v165 = vadd.f32 %v157, 1e-05
    %v166 = vadd.f32 %v158, 1e-05
    %v167 = vadd.f32 %v159, 1e-05
    %v168 = vadd.f32 %v160, 1e-05
    %v169 = vrsqrt.pop %v161
    %v170 = vrsqrt.pop %v162
    %v171 = vrsqrt.pop %v163
    %v172 = vrsqrt.pop %v164
    %v173 = vrsqrt.pop %v165
    %v174 = vrsqrt.pop %v166
    %v175 = vrsqrt.pop %v167
    %v176 = vrsqrt.pop %v168
    %v177 = vmul.f32 %v113, %v169
    %v178 = vmul.f32 %v114, %v170
    %v179 = vmul.f32 %v115, %v171
    %v180 = vmul.f32 %v116, %v172
    %v181 = vmul.f32 %v117, %v173
    %v182 = vmul.f32 %v118, %v174
    %v183 = vmul.f32 %v119, %v175
    %v184 = vmul.f32 %v120, %v176
    %v185 = vlaneseq
    %v186 = vshrl.u32 %v185, 7
    %v187 = vsub.s32 0, %v186
    %v188 = vrot.slane %v43, %v187
    %v189 = vmul.f32 %v177, %v188
    %v190 = vmul.f32 %v178, %v188
    %v191 = vmul.f32 %v179, %v188
    %v192 = vmul.f32 %v180, %v188
    %v193 = vmul.f32 %v181, %v188
    %v194 = vmul.f32 %v182, %v188
    %v195 = vmul.f32 %v183, %v188
    %v196 = vmul.f32 %v184, %v188
    %v197 = vlaneseq
    %v198 = vshrl.u32 %v197, 7
    %v199 = vsub.s32 1, %v198
    %v200 = vrot.slane %v43, %v199
    %v201 = vadd.f32 %v189, %v200
    %v202 = vadd.f32 %v190, %v200
    %v203 = vadd.f32 %v191, %v200
    %v204 = vadd.f32 %v192, %v200
    %v205 = vadd.f32 %v193, %v200
    %v206 = vadd.f32 %v194, %v200
    %v207 = vadd.f32 %v195, %v200
    %v208 = vadd.f32 %v196, %v200
    %v209 = vpack.c.bf16 %v202, %v201
    %v210 = vpack.c.bf16 %v204, %v203
    %v211 = vpack.c.bf16 %v206, %v205
    %v212 = vpack.c.bf16 %v208, %v207
    %v213 = vlaneseq
    %v214 = vshrl.u32 %v213, 7
    %v215 = vsub.s32 2, %v214
    %v216 = vrot.slane %v44, %v215
    %v218 = vsel %vm79, %v209, 0
    %v221 = vsel %vm79, %v210, 0
    %v224 = vsel %vm79, %v211, 0
    %v227 = vsel %vm79, %v212, 0
    %vm229 = vcmask 1041408
    %v231 = vsel %vm229, %v45, 0
    %233 = vmatprep.subr.bf16.mxu0 0
    %234 = vmatpush1.bf16.msra.mxu0 0
    %235 = vmatprep.subr.bf16.mxu0 0
    %236 = vmatpush1.bf16.msra.mxu0 0
    %237 = vmatprep.subr.bf16.mxu0 0
    %238 = vmatpush1.bf16.msra.mxu0 0
    %239 = vmatprep.subr.bf16.mxu0 0
    %240 = vmatpush1.bf16.msra.mxu0 0
    %241 = vmatprep.subr.bf16.mxu0 0
    %242 = vmatpush1.bf16.msra.mxu0 0
    %243 = vmatprep.subr.bf16.mxu0 0
    %244 = vmatpush1.bf16.msra.mxu0 0
    %245 = vmatprep.subr.bf16.mxu0 0
    %246 = vmatpush1.bf16.msra.mxu0 0
    %247 = vmatprep.subr.bf16.mxu0 0
    %248 = vmatpush1.bf16.msra.mxu0 %v231
    %249 = vmatprep.subr.bf16.mxu0 0
    %250 = vmatpush2.bf16.msra.mxu0 0
    %251 = vmatprep.subr.bf16.mxu0 0
    %252 = vmatpush2.bf16.msra.mxu0 0
    %253 = vmatprep.subr.bf16.mxu0 0
    %254 = vmatpush2.bf16.msra.mxu0 0
    %255 = vmatprep.subr.bf16.mxu0 0
    %256 = vmatpush2.bf16.msra.mxu0 0
    %257 = vmatprep.subr.bf16.mxu0 0
    %258 = vmatpush2.bf16.msra.mxu0 0
    %259 = vmatprep.subr.bf16.mxu0 0
    %260 = vmatpush2.bf16.msra.mxu0 0
    %261 = vmatprep.subr.bf16.mxu0 0
    %262 = vmatpush2.bf16.msra.mxu0 0
    %263 = vmatprep.subr.bf16.mxu0 0
    %264 = vmatpush2.bf16.msra.mxu0 0
    %265 = vmatprep.mubr.bf16.mxu0 0
    %266 = vmatmul.mubr.bf16.gmra.mxu0 %v218
    %v267 = vpop.f32.mrf.mxu0
    %v268 = vadd.f32 %v216, %v267
    %v269 = vpop.f32.mrf.mxu0
    %v270 = vpop.f32.mrf.mxu0
    %v271 = vadd.f32 %v216, %v270
    %v272 = vpop.f32.mrf.mxu0
    %273 = vmatprep.mubr.bf16.mxu0 0
    %274 = vmatmul.mubr.bf16.gmra.mxu0 %v221
    %v275 = vpop.f32.mrf.mxu0
    %v276 = vadd.f32 %v216, %v275
    %v277 = vpop.f32.mrf.mxu0
    %v278 = vpop.f32.mrf.mxu0
    %v279 = vadd.f32 %v216, %v278
    %v280 = vpop.f32.mrf.mxu0
    %281 = vmatprep.mubr.bf16.mxu0 0
    %282 = vmatmul.mubr.bf16.gmra.mxu0 %v224
    %v283 = vpop.f32.mrf.mxu0
    %v284 = vadd.f32 %v216, %v283
    %v285 = vpop.f32.mrf.mxu0
    %v286 = vpop.f32.mrf.mxu0
    %v287 = vadd.f32 %v216, %v286
    %v288 = vpop.f32.mrf.mxu0
    %289 = vmatprep.mubr.bf16.mxu0 0
    %290 = vmatmul.mubr.bf16.gmra.mxu0 %v227
    %v291 = vpop.f32.mrf.mxu0
    %v292 = vadd.f32 %v216, %v291
    %v293 = vpop.f32.mrf.mxu0
    %v294 = vpop.f32.mrf.mxu0
    %v295 = vadd.f32 %v216, %v294
    %v296 = vpop.f32.mrf.mxu0
    %297 = vdwg.mxu0
    %v302 = vunpack.c.l.b16 %v46
    %v303 = vunpack.c.l.b16 %v47
    %v304 = vunpack.c.l.b16 %v48
    %v305 = vunpack.c.l.b16 %v49
    %v306 = vpack.c.b16 %v303, %v302
    %v307 = vpack.c.b16 %v305, %v304
    %vm310 = vcmask 261120
    %v312 = vsel %vm310, 0, 0
    %314 = vmatprep.subr.bf16.mxu0 0
    %315 = vmatpush1.bf16.msra.mxu0 0
    %316 = vmatprep.subr.bf16.mxu0 0
    %317 = vmatpush1.bf16.msra.mxu0 0
    %318 = vmatprep.subr.bf16.mxu0 0
    %319 = vmatpush1.bf16.msra.mxu0 0
    %320 = vmatprep.subr.bf16.mxu0 0
    %321 = vmatpush1.bf16.msra.mxu0 0
    %322 = vmatprep.subr.bf16.mxu0 0
    %323 = vmatpush1.bf16.msra.mxu0 0
    %324 = vmatprep.subr.bf16.mxu0 0
    %325 = vmatpush1.bf16.msra.mxu0 0
    %326 = vmatprep.subr.bf16.mxu0 0
    %327 = vmatpush1.bf16.msra.mxu0 %v307
    %328 = vmatprep.subr.bf16.mxu0 0
    %329 = vmatpush1.bf16.msra.mxu0 %v306
    %330 = vmatprep.subr.bf16.mxu0 0
    %331 = vmatpush2.bf16.msra.mxu0 0
    %332 = vmatprep.subr.bf16.mxu0 0
    %333 = vmatpush2.bf16.msra.mxu0 0
    %334 = vmatprep.subr.bf16.mxu0 0
    %335 = vmatpush2.bf16.msra.mxu0 0
    %336 = vmatprep.subr.bf16.mxu0 0
    %337 = vmatpush2.bf16.msra.mxu0 0
    %338 = vmatprep.subr.bf16.mxu0 0
    %339 = vmatpush2.bf16.msra.mxu0 0
    %340 = vmatprep.subr.bf16.mxu0 0
    %341 = vmatpush2.bf16.msra.mxu0 0
    %342 = vmatprep.subr.bf16.mxu0 0
    %343 = vmatpush2.bf16.msra.mxu0 0
    %344 = vmatprep.subr.bf16.mxu0 0
    %345 = vmatpush2.bf16.msra.mxu0 0
    %346 = vmatprep.mubr.bf16.mxu0 0
    %347 = vmatmul.mubr.bf16.gmra.mxu0 %v312
    %v348 = vpop.f32.mrf.mxu0
    %v349 = vadd.f32 0.0, %v348
    %v350 = vpop.f32.mrf.mxu0
    %v351 = vpop.f32.mrf.mxu0
    %v352 = vpop.f32.mrf.mxu0
    %353 = vdwg.mxu0
    %v354 = vadd.f32 %v268, %v349
    %v355 = vxor.u32 %v354, 2147483648
    %v356 = vmul.f32 %v355, 1.442695
    %v357 = vpow.pop %v356
    %v358 = vadd.f32 %v357, 1.0
    %v359 = vrcp.pop %v358
    %v360 = vmul.f32 1.0, %v359
    %v361 = vtanh.pop %v354
    %v362 = vmul.f32 %v360, 0.0
    %364 = vrot.lane.b32.xlu0 %v361, 32
    %v365 = vpop.permute.xlu0 %364
    %v367 = vmul.f32 %v360, %v365
    %369 = vrot.lane.b32.xlu0 %v367, 32
    %v370 = vpop.permute.xlu0 %369
    %v372 = vadd.f32 %v362, %v370
    %v373 = vtanh.pop %v372
    %375 = vrot.lane.b32.xlu0 %v373, 32
    %v376 = vpop.permute.xlu0 %375
    %v378 = vmul.f32 %v360, %v376
    %380 = vrot.lane.b32.xlu0 %v378, 64
    %v381 = vpop.permute.xlu0 %380
    %383 = vst.msk [vmem:[#allocation2] sm:$0xff] %vm310, %v381
    %v384 = vpack.c.bf16 %v378, %v378
    %386 = vrot.lane.b32.xlu0 %v384, 64
    %v387 = vpop.permute.xlu0 %386
    %v389 = vsel %vm310, %v387, 0
    %391 = vmatprep.subr.bf16.mxu0 0
    %392 = vmatpush1.bf16.msra.mxu0 0
    %393 = vmatprep.subr.bf16.mxu0 0
    %394 = vmatpush1.bf16.msra.mxu0 0
    %395 = vmatprep.subr.bf16.mxu0 0
    %396 = vmatpush1.bf16.msra.mxu0 0
    %397 = vmatprep.subr.bf16.mxu0 0
    %398 = vmatpush1.bf16.msra.mxu0 0
    %399 = vmatprep.subr.bf16.mxu0 0
    %400 = vmatpush1.bf16.msra.mxu0 0
    %401 = vmatprep.subr.bf16.mxu0 0
    %402 = vmatpush1.bf16.msra.mxu0 0
    %403 = vmatprep.subr.bf16.mxu0 0
    %404 = vmatpush1.bf16.msra.mxu0 %v307
    %405 = vmatprep.subr.bf16.mxu0 0
    %406 = vmatpush1.bf16.msra.mxu0 %v306
    %407 = vmatprep.subr.bf16.mxu0 0
    %408 = vmatpush2.bf16.msra.mxu0 0
    %409 = vmatprep.subr.bf16.mxu0 0
    %410 = vmatpush2.bf16.msra.mxu0 0
    %411 = vmatprep.subr.bf16.mxu0 0
    %412 = vmatpush2.bf16.msra.mxu0 0
    %413 = vmatprep.subr.bf16.mxu0 0
    %414 = vmatpush2.bf16.msra.mxu0 0
    %415 = vmatprep.subr.bf16.mxu0 0
    %416 = vmatpush2.bf16.msra.mxu0 0
    %417 = vmatprep.subr.bf16.mxu0 0
    %418 = vmatpush2.bf16.msra.mxu0 0
    %419 = vmatprep.subr.bf16.mxu0 0
    %420 = vmatpush2.bf16.msra.mxu0 0
    %421 = vmatprep.subr.bf16.mxu0 0
    %422 = vmatpush2.bf16.msra.mxu0 0
    %423 = vmatprep.mubr.bf16.mxu0 0
    %424 = vmatmul.mubr.bf16.gmra.mxu0 %v389
    %v425 = vpop.f32.mrf.mxu0
    %v426 = vadd.f32 0.0, %v425
    %v427 = vpop.f32.mrf.mxu0
    %v428 = vpop.f32.mrf.mxu0
    %v429 = vpop.f32.mrf.mxu0
    %430 = vdwg.mxu0
    %v431 = vadd.f32 %v271, %v426
    %v432 = vxor.u32 %v431, 2147483648
    %v433 = vmul.f32 %v432, 1.442695
    %v434 = vpow.pop %v433
    %v435 = vadd.f32 %v434, 1.0
    %v436 = vrcp.pop %v435
    %v437 = vmul.f32 1.0, %v436
    %v438 = vtanh.pop %v431
    %v439 = vmul.f32 %v437, %v372
    %441 = vrot.lane.b32.xlu0 %v438, 32
    %v442 = vpop.permute.xlu0 %441
    %v444 = vmul.f32 %v437, %v442
    %446 = vrot.lane.b32.xlu0 %v444, 32
    %v447 = vpop.permute.xlu0 %446
    %v449 = vadd.f32 %v439, %v447
    %v450 = vtanh.pop %v449
    %452 = vrot.lane.b32.xlu0 %v450, 32
    %v453 = vpop.permute.xlu0 %452
    %v455 = vmul.f32 %v437, %v453
    %457 = vrot.lane.b32.xlu0 %v455, 64
    %v458 = vpop.permute.xlu0 %457
    %s460 = scalar_lea.vmem [#allocation2], 8
    %461 = vst.msk [vmem:[%s460] sm:$0xff] %vm310, %v458
    %v462 = vpack.c.bf16 %v455, %v455
    %464 = vrot.lane.b32.xlu0 %v462, 64
    %v465 = vpop.permute.xlu0 %464
    %v467 = vsel %vm310, %v465, 0
    %469 = vmatprep.subr.bf16.mxu0 0
    %470 = vmatpush1.bf16.msra.mxu0 0
    %471 = vmatprep.subr.bf16.mxu0 0
    %472 = vmatpush1.bf16.msra.mxu0 0
    %473 = vmatprep.subr.bf16.mxu0 0
    %474 = vmatpush1.bf16.msra.mxu0 0
    %475 = vmatprep.subr.bf16.mxu0 0
    %476 = vmatpush1.bf16.msra.mxu0 0
    %477 = vmatprep.subr.bf16.mxu0 0
    %478 = vmatpush1.bf16.msra.mxu0 0
    %479 = vmatprep.subr.bf16.mxu0 0
    %480 = vmatpush1.bf16.msra.mxu0 0
    %481 = vmatprep.subr.bf16.mxu0 0
    %482 = vmatpush1.bf16.msra.mxu0 %v307
    %483 = vmatprep.subr.bf16.mxu0 0
    %484 = vmatpush1.bf16.msra.mxu0 %v306
    %485 = vmatprep.subr.bf16.mxu0 0
    %486 = vmatpush2.bf16.msra.mxu0 0
    %487 = vmatprep.subr.bf16.mxu0 0
    %488 = vmatpush2.bf16.msra.mxu0 0
    %489 = vmatprep.subr.bf16.mxu0 0
    %490 = vmatpush2.bf16.msra.mxu0 0
    %491 = vmatprep.subr.bf16.mxu0 0
    %492 = vmatpush2.bf16.msra.mxu0 0
    %493 = vmatprep.subr.bf16.mxu0 0
    %494 = vmatpush2.bf16.msra.mxu0 0
    %495 = vmatprep.subr.bf16.mxu0 0
    %496 = vmatpush2.bf16.msra.mxu0 0
    %497 = vmatprep.subr.bf16.mxu0 0
    %498 = vmatpush2.bf16.msra.mxu0 0
    %499 = vmatprep.subr.bf16.mxu0 0
    %500 = vmatpush2.bf16.msra.mxu0 0
    %501 = vmatprep.mubr.bf16.mxu0 0
    %502 = vmatmul.mubr.bf16.gmra.mxu0 %v467
    %v503 = vpop.f32.mrf.mxu0
    %v504 = vadd.f32 0.0, %v503
    %v505 = vpop.f32.mrf.mxu0
    %v506 = vpop.f32.mrf.mxu0
    %v507 = vpop.f32.mrf.mxu0
    %508 = vdwg.mxu0
    %v509 = vadd.f32 %v276, %v504
    %v510 = vxor.u32 %v509, 2147483648
    %v511 = vmul.f32 %v510, 1.442695
    %v512 = vpow.pop %v511
    %v513 = vadd.f32 %v512, 1.0
    %v514 = vrcp.pop %v513
    %v515 = vmul.f32 1.0, %v514
    %v516 = vtanh.pop %v509
    %v517 = vmul.f32 %v515, %v449
    %519 = vrot.lane.b32.xlu0 %v516, 32
    %v520 = vpop.permute.xlu0 %519
    %v522 = vmul.f32 %v515, %v520
    %524 = vrot.lane.b32.xlu0 %v522, 32
    %v525 = vpop.permute.xlu0 %524
    %v527 = vadd.f32 %v517, %v525
    %v528 = vtanh.pop %v527
    %530 = vrot.lane.b32.xlu0 %v528, 32
    %v531 = vpop.permute.xlu0 %530
    %v533 = vmul.f32 %v515, %v531
    %535 = vrot.lane.b32.xlu0 %v533, 64
    %v536 = vpop.permute.xlu0 %535
    %s538 = scalar_lea.vmem [#allocation2], 16
    %539 = vst.msk [vmem:[%s538] sm:$0xff] %vm310, %v536
    %v540 = vpack.c.bf16 %v533, %v533
    %542 = vrot.lane.b32.xlu0 %v540, 64
    %v543 = vpop.permute.xlu0 %542
    %v545 = vsel %vm310, %v543, 0
    %547 = vmatprep.subr.bf16.mxu0 0
    %548 = vmatpush1.bf16.msra.mxu0 0
    %549 = vmatprep.subr.bf16.mxu0 0
    %550 = vmatpush1.bf16.msra.mxu0 0
    %551 = vmatprep.subr.bf16.mxu0 0
    %552 = vmatpush1.bf16.msra.mxu0 0
    %553 = vmatprep.subr.bf16.mxu0 0
    %554 = vmatpush1.bf16.msra.mxu0 0
    %555 = vmatprep.subr.bf16.mxu0 0
    %556 = vmatpush1.bf16.msra.mxu0 0
    %557 = vmatprep.subr.bf16.mxu0 0
    %558 = vmatpush1.bf16.msra.mxu0 0
    %559 = vmatprep.subr.bf16.mxu0 0
    %560 = vmatpush1.bf16.msra.mxu0 %v307
    %561 = vmatprep.subr.bf16.mxu0 0
    %562 = vmatpush1.bf16.msra.mxu0 %v306
    %563 = vmatprep.subr.bf16.mxu0 0
    %564 = vmatpush2.bf16.msra.mxu0 0
    %565 = vmatprep.subr.bf16.mxu0 0
    %566 = vmatpush2.bf16.msra.mxu0 0
    %567 = vmatprep.subr.bf16.mxu0 0
    %568 = vmatpush2.bf16.msra.mxu0 0
    %569 = vmatprep.subr.bf16.mxu0 0
    %570 = vmatpush2.bf16.msra.mxu0 0
    %571 = vmatprep.subr.bf16.mxu0 0
    %572 = vmatpush2.bf16.msra.mxu0 0
    %573 = vmatprep.subr.bf16.mxu0 0
    %574 = vmatpush2.bf16.msra.mxu0 0
    %575 = vmatprep.subr.bf16.mxu0 0
    %576 = vmatpush2.bf16.msra.mxu0 0
    %577 = vmatprep.subr.bf16.mxu0 0
    %578 = vmatpush2.bf16.msra.mxu0 0
    %579 = vmatprep.mubr.bf16.mxu0 0
    %580 = vmatmul.mubr.bf16.gmra.mxu0 %v545
    %v581 = vpop.f32.mrf.mxu0
    %v582 = vadd.f32 0.0, %v581
    %v583 = vpop.f32.mrf.mxu0
    %v584 = vpop.f32.mrf.mxu0
    %v585 = vpop.f32.mrf.mxu0
    %586 = vdwg.mxu0
    %v587 = vadd.f32 %v279, %v582
    %v588 = vxor.u32 %v587, 2147483648
    %v589 = vmul.f32 %v588, 1.442695
    %v590 = vpow.pop %v589
    %v591 = vadd.f32 %v590, 1.0
    %v592 = vrcp.pop %v591
    %v593 = vmul.f32 1.0, %v592
    %v594 = vtanh.pop %v587
    %v595 = vmul.f32 %v593, %v527
    %597 = vrot.lane.b32.xlu0 %v594, 32
    %v598 = vpop.permute.xlu0 %597
    %v600 = vmul.f32 %v593, %v598
    %602 = vrot.lane.b32.xlu0 %v600, 32
    %v603 = vpop.permute.xlu0 %602
    %v605 = vadd.f32 %v595, %v603
    %v606 = vtanh.pop %v605
    %608 = vrot.lane.b32.xlu0 %v606, 32
    %v609 = vpop.permute.xlu0 %608
    %v611 = vmul.f32 %v593, %v609
    %613 = vrot.lane.b32.xlu0 %v611, 64
    %v614 = vpop.permute.xlu0 %613
    %s616 = scalar_lea.vmem [#allocation2], 24
    %617 = vst.msk [vmem:[%s616] sm:$0xff] %vm310, %v614
    %v618 = vpack.c.bf16 %v611, %v611
    %620 = vrot.lane.b32.xlu0 %v618, 64
    %v621 = vpop.permute.xlu0 %620
    %v623 = vsel %vm310, %v621, 0
    %625 = vmatprep.subr.bf16.mxu0 0
    %626 = vmatpush1.bf16.msra.mxu0 0
    %627 = vmatprep.subr.bf16.mxu0 0
    %628 = vmatpush1.bf16.msra.mxu0 0
    %629 = vmatprep.subr.bf16.mxu0 0
    %630 = vmatpush1.bf16.msra.mxu0 0
    %631 = vmatprep.subr.bf16.mxu0 0
    %632 = vmatpush1.bf16.msra.mxu0 0
    %633 = vmatprep.subr.bf16.mxu0 0
    %634 = vmatpush1.bf16.msra.mxu0 0
    %635 = vmatprep.subr.bf16.mxu0 0
    %636 = vmatpush1.bf16.msra.mxu0 0
    %637 = vmatprep.subr.bf16.mxu0 0
    %638 = vmatpush1.bf16.msra.mxu0 %v307
    %639 = vmatprep.subr.bf16.mxu0 0
    %640 = vmatpush1.bf16.msra.mxu0 %v306
    %641 = vmatprep.subr.bf16.mxu0 0
    %642 = vmatpush2.bf16.msra.mxu0 0
    %643 = vmatprep.subr.bf16.mxu0 0
    %644 = vmatpush2.bf16.msra.mxu0 0
    %645 = vmatprep.subr.bf16.mxu0 0
    %646 = vmatpush2.bf16.msra.mxu0 0
    %647 = vmatprep.subr.bf16.mxu0 0
    %648 = vmatpush2.bf16.msra.mxu0 0
    %649 = vmatprep.subr.bf16.mxu0 0
    %650 = vmatpush2.bf16.msra.mxu0 0
    %651 = vmatprep.subr.bf16.mxu0 0
    %652 = vmatpush2.bf16.msra.mxu0 0
    %653 = vmatprep.subr.bf16.mxu0 0
    %654 = vmatpush2.bf16.msra.mxu0 0
    %655 = vmatprep.subr.bf16.mxu0 0
    %656 = vmatpush2.bf16.msra.mxu0 0
    %657 = vmatprep.mubr.bf16.mxu0 0
    %658 = vmatmul.mubr.bf16.gmra.mxu0 %v623
    %v659 = vpop.f32.mrf.mxu0
    %v660 = vadd.f32 0.0, %v659
    %v661 = vpop.f32.mrf.mxu0
    %v662 = vpop.f32.mrf.mxu0
    %v663 = vpop.f32.mrf.mxu0
    %664 = vdwg.mxu0
    %v665 = vadd.f32 %v284, %v660
    %v666 = vxor.u32 %v665, 2147483648
    %v667 = vmul.f32 %v666, 1.442695
    %v668 = vpow.pop %v667
    %v669 = vadd.f32 %v668, 1.0
    %v670 = vrcp.pop %v669
    %v671 = vmul.f32 1.0, %v670
    %v672 = vtanh.pop %v665
    %v673 = vmul.f32 %v671, %v605
    %675 = vrot.lane.b32.xlu0 %v672, 32
    %v676 = vpop.permute.xlu0 %675
    %v678 = vmul.f32 %v671, %v676
    %680 = vrot.lane.b32.xlu0 %v678, 32
    %v681 = vpop.permute.xlu0 %680
    %v683 = vadd.f32 %v673, %v681
    %v684 = vtanh.pop %v683
    %686 = vrot.lane.b32.xlu0 %v684, 32
    %v687 = vpop.permute.xlu0 %686
    %v689 = vmul.f32 %v671, %v687
    %691 = vrot.lane.b32.xlu0 %v689, 64
    %v692 = vpop.permute.xlu0 %691
    %s694 = scalar_lea.vmem [#allocation2], 32
    %695 = vst.msk [vmem:[%s694] sm:$0xff] %vm310, %v692
    %v696 = vpack.c.bf16 %v689, %v689
    %698 = vrot.lane.b32.xlu0 %v696, 64
    %v699 = vpop.permute.xlu0 %698
    %v701 = vsel %vm310, %v699, 0
    %703 = vmatprep.subr.bf16.mxu0 0
    %704 = vmatpush1.bf16.msra.mxu0 0
    %705 = vmatprep.subr.bf16.mxu0 0
    %706 = vmatpush1.bf16.msra.mxu0 0
    %707 = vmatprep.subr.bf16.mxu0 0
    %708 = vmatpush1.bf16.msra.mxu0 0
    %709 = vmatprep.subr.bf16.mxu0 0
    %710 = vmatpush1.bf16.msra.mxu0 0
    %711 = vmatprep.subr.bf16.mxu0 0
    %712 = vmatpush1.bf16.msra.mxu0 0
    %713 = vmatprep.subr.bf16.mxu0 0
    %714 = vmatpush1.bf16.msra.mxu0 0
    %715 = vmatprep.subr.bf16.mxu0 0
    %716 = vmatpush1.bf16.msra.mxu0 %v307
    %717 = vmatprep.subr.bf16.mxu0 0
    %718 = vmatpush1.bf16.msra.mxu0 %v306
    %719 = vmatprep.subr.bf16.mxu0 0
    %720 = vmatpush2.bf16.msra.mxu0 0
    %721 = vmatprep.subr.bf16.mxu0 0
    %722 = vmatpush2.bf16.msra.mxu0 0
    %723 = vmatprep.subr.bf16.mxu0 0
    %724 = vmatpush2.bf16.msra.mxu0 0
    %725 = vmatprep.subr.bf16.mxu0 0
    %726 = vmatpush2.bf16.msra.mxu0 0
    %727 = vmatprep.subr.bf16.mxu0 0
    %728 = vmatpush2.bf16.msra.mxu0 0
    %729 = vmatprep.subr.bf16.mxu0 0
    %730 = vmatpush2.bf16.msra.mxu0 0
    %731 = vmatprep.subr.bf16.mxu0 0
    %732 = vmatpush2.bf16.msra.mxu0 0
    %733 = vmatprep.subr.bf16.mxu0 0
    %734 = vmatpush2.bf16.msra.mxu0 0
    %735 = vmatprep.mubr.bf16.mxu0 0
    %736 = vmatmul.mubr.bf16.gmra.mxu0 %v701
    %v737 = vpop.f32.mrf.mxu0
    %v738 = vadd.f32 0.0, %v737
    %v739 = vpop.f32.mrf.mxu0
    %v740 = vpop.f32.mrf.mxu0
    %v741 = vpop.f32.mrf.mxu0
    %742 = vdwg.mxu0
    %v743 = vadd.f32 %v287, %v738
    %v744 = vxor.u32 %v743, 2147483648
    %v745 = vmul.f32 %v744, 1.442695
    %v746 = vpow.pop %v745
    %v747 = vadd.f32 %v746, 1.0
    %v748 = vrcp.pop %v747
    %v749 = vmul.f32 1.0, %v748
    %v750 = vtanh.pop %v743
    %v751 = vmul.f32 %v749, %v683
    %753 = vrot.lane.b32.xlu0 %v750, 32
    %v754 = vpop.permute.xlu0 %753
    %v756 = vmul.f32 %v749, %v754
    %758 = vrot.lane.b32.xlu0 %v756, 32
    %v759 = vpop.permute.xlu0 %758
    %v761 = vadd.f32 %v751, %v759
    %v762 = vtanh.pop %v761
    %764 = vrot.lane.b32.xlu0 %v762, 32
    %v765 = vpop.permute.xlu0 %764
    %v767 = vmul.f32 %v749, %v765
    %769 = vrot.lane.b32.xlu0 %v767, 64
    %v770 = vpop.permute.xlu0 %769
    %s772 = scalar_lea.vmem [#allocation2], 40
    %773 = vst.msk [vmem:[%s772] sm:$0xff] %vm310, %v770
    %v774 = vpack.c.bf16 %v767, %v767
    %776 = vrot.lane.b32.xlu0 %v774, 64
    %v777 = vpop.permute.xlu0 %776
    %v779 = vsel %vm310, %v777, 0
    %781 = vmatprep.subr.bf16.mxu0 0
    %782 = vmatpush1.bf16.msra.mxu0 0
    %783 = vmatprep.subr.bf16.mxu0 0
    %784 = vmatpush1.bf16.msra.mxu0 0
    %785 = vmatprep.subr.bf16.mxu0 0
    %786 = vmatpush1.bf16.msra.mxu0 0
    %787 = vmatprep.subr.bf16.mxu0 0
    %788 = vmatpush1.bf16.msra.mxu0 0
    %789 = vmatprep.subr.bf16.mxu0 0
    %790 = vmatpush1.bf16.msra.mxu0 0
    %791 = vmatprep.subr.bf16.mxu0 0
    %792 = vmatpush1.bf16.msra.mxu0 0
    %793 = vmatprep.subr.bf16.mxu0 0
    %794 = vmatpush1.bf16.msra.mxu0 %v307
    %795 = vmatprep.subr.bf16.mxu0 0
    %796 = vmatpush1.bf16.msra.mxu0 %v306
    %797 = vmatprep.subr.bf16.mxu0 0
    %798 = vmatpush2.bf16.msra.mxu0 0
    %799 = vmatprep.subr.bf16.mxu0 0
    %800 = vmatpush2.bf16.msra.mxu0 0
    %801 = vmatprep.subr.bf16.mxu0 0
    %802 = vmatpush2.bf16.msra.mxu0 0
    %803 = vmatprep.subr.bf16.mxu0 0
    %804 = vmatpush2.bf16.msra.mxu0 0
    %805 = vmatprep.subr.bf16.mxu0 0
    %806 = vmatpush2.bf16.msra.mxu0 0
    %807 = vmatprep.subr.bf16.mxu0 0
    %808 = vmatpush2.bf16.msra.mxu0 0
    %809 = vmatprep.subr.bf16.mxu0 0
    %810 = vmatpush2.bf16.msra.mxu0 0
    %811 = vmatprep.subr.bf16.mxu0 0
    %812 = vmatpush2.bf16.msra.mxu0 0
    %813 = vmatprep.mubr.bf16.mxu0 0
    %814 = vmatmul.mubr.bf16.gmra.mxu0 %v779
    %v815 = vpop.f32.mrf.mxu0
    %v816 = vadd.f32 0.0, %v815
    %v817 = vpop.f32.mrf.mxu0
    %v818 = vpop.f32.mrf.mxu0
    %v819 = vpop.f32.mrf.mxu0
    %820 = vdwg.mxu0
    %v821 = vadd.f32 %v292, %v816
    %v822 = vxor.u32 %v821, 2147483648
    %v823 = vmul.f32 %v822, 1.442695
    %v824 = vpow.pop %v823
    %v825 = vadd.f32 %v824, 1.0
    %v826 = vrcp.pop %v825
    %v827 = vmul.f32 1.0, %v826
    %v828 = vtanh.pop %v821
    %v829 = vmul.f32 %v827, %v761
    %831 = vrot.lane.b32.xlu0 %v828, 32
    %v832 = vpop.permute.xlu0 %831
    %v834 = vmul.f32 %v827, %v832
    %836 = vrot.lane.b32.xlu0 %v834, 32
    %v837 = vpop.permute.xlu0 %836
    %v839 = vadd.f32 %v829, %v837
    %v840 = vtanh.pop %v839
    %842 = vrot.lane.b32.xlu0 %v840, 32
    %v843 = vpop.permute.xlu0 %842
    %v845 = vmul.f32 %v827, %v843
    %847 = vrot.lane.b32.xlu0 %v845, 64
    %v848 = vpop.permute.xlu0 %847
    %s850 = scalar_lea.vmem [#allocation2], 48
    %851 = vst.msk [vmem:[%s850] sm:$0xff] %vm310, %v848
    %v852 = vpack.c.bf16 %v845, %v845
    %854 = vrot.lane.b32.xlu0 %v852, 64
    %v855 = vpop.permute.xlu0 %854
    %v857 = vsel %vm310, %v855, 0
    %859 = vmatprep.subr.bf16.mxu0 0
    %860 = vmatpush1.bf16.msra.mxu0 0
    %861 = vmatprep.subr.bf16.mxu0 0
    %862 = vmatpush1.bf16.msra.mxu0 0
    %863 = vmatprep.subr.bf16.mxu0 0
    %864 = vmatpush1.bf16.msra.mxu0 0
    %865 = vmatprep.subr.bf16.mxu0 0
    %866 = vmatpush1.bf16.msra.mxu0 0
    %867 = vmatprep.subr.bf16.mxu0 0
    %868 = vmatpush1.bf16.msra.mxu0 0
    %869 = vmatprep.subr.bf16.mxu0 0
    %870 = vmatpush1.bf16.msra.mxu0 0
    %871 = vmatprep.subr.bf16.mxu0 0
    %872 = vmatpush1.bf16.msra.mxu0 %v307
    %873 = vmatprep.subr.bf16.mxu0 0
    %874 = vmatpush1.bf16.msra.mxu0 %v306
    %875 = vmatprep.subr.bf16.mxu0 0
    %876 = vmatpush2.bf16.msra.mxu0 0
    %877 = vmatprep.subr.bf16.mxu0 0
    %878 = vmatpush2.bf16.msra.mxu0 0
    %879 = vmatprep.subr.bf16.mxu0 0
    %880 = vmatpush2.bf16.msra.mxu0 0
    %881 = vmatprep.subr.bf16.mxu0 0
    %882 = vmatpush2.bf16.msra.mxu0 0
    %883 = vmatprep.subr.bf16.mxu0 0
    %884 = vmatpush2.bf16.msra.mxu0 0
    %885 = vmatprep.subr.bf16.mxu0 0
    %886 = vmatpush2.bf16.msra.mxu0 0
    %887 = vmatprep.subr.bf16.mxu0 0
    %888 = vmatpush2.bf16.msra.mxu0 0
    %889 = vmatprep.subr.bf16.mxu0 0
    %890 = vmatpush2.bf16.msra.mxu0 0
    %891 = vmatprep.mubr.bf16.mxu0 0
    %892 = vmatmul.mubr.bf16.gmra.mxu0 %v857
    %v893 = vpop.f32.mrf.mxu0
    %v894 = vadd.f32 0.0, %v893
    %v895 = vpop.f32.mrf.mxu0
    %v896 = vpop.f32.mrf.mxu0
    %v897 = vpop.f32.mrf.mxu0
    %898 = vdwg.mxu0
    %v899 = vadd.f32 %v295, %v894
    %v900 = vxor.u32 %v899, 2147483648
    %v901 = vmul.f32 %v900, 1.442695
    %v902 = vpow.pop %v901
    %v903 = vadd.f32 %v902, 1.0
    %v904 = vrcp.pop %v903
    %v905 = vmul.f32 1.0, %v904
    %v906 = vtanh.pop %v899
    %v907 = vmul.f32 %v905, %v839
    %909 = vrot.lane.b32.xlu0 %v906, 32
    %v910 = vpop.permute.xlu0 %909
    %v912 = vmul.f32 %v905, %v910
    %914 = vrot.lane.b32.xlu0 %v912, 32
    %v915 = vpop.permute.xlu0 %914
    %v917 = vadd.f32 %v907, %v915
    %v918 = vtanh.pop %v917
    %920 = vrot.lane.b32.xlu0 %v918, 32
    %v921 = vpop.permute.xlu0 %920
    %v923 = vmul.f32 %v905, %v921
    %925 = vrot.lane.b32.xlu0 %v923, 64
    %v926 = vpop.permute.xlu0 %925
    %s928 = scalar_lea.vmem [#allocation2], 56
    %929 = vst.msk [vmem:[%s928] sm:$0xff] %vm310, %v926
    %v930 = vld [vmem:[#allocation2] sm:$0xff]
    %v931 = vld [vmem:[#allocation2 + $0x8] sm:$0xff]
    %v932 = vld [vmem:[#allocation2 + $0x10] sm:$0xff]
    %v933 = vld [vmem:[#allocation2 + $0x18] sm:$0xff]
    %v934 = vld [vmem:[#allocation2 + $0x20] sm:$0xff]
    %v935 = vld [vmem:[#allocation2 + $0x28] sm:$0xff]
    %v936 = vld [vmem:[#allocation2 + $0x30] sm:$0xff]
    %v937 = vld [vmem:[#allocation2 + $0x38] sm:$0xff]
    %v938 = vld [vmem:[%s2] sm:$0xff]
    %v939 = vld [vmem:[%s2 + $0x8] sm:$0xff]
    %v940 = vld [vmem:[%s2 + $0x10] sm:$0xff]
    %v941 = vld [vmem:[%s2 + $0x18] sm:$0xff]
    %v942 = vld [vmem:[%s2 + $0x20] sm:$0xff]
    %v943 = vld [vmem:[%s2 + $0x28] sm:$0xff]
    %v944 = vld [vmem:[%s2 + $0x30] sm:$0xff]
    %v945 = vld [vmem:[%s2 + $0x38] sm:$0xff]
    %v946 = vld [vmem:[%s2 + $0x40] sm:$0xff]
    %v947 = vld [vmem:[%s2 + $0x48] sm:$0xff]
    %v948 = vld [vmem:[%s2 + $0x50] sm:$0xff]
    %v949 = vld [vmem:[%s2 + $0x58] sm:$0xff]
    %v950 = vld [vmem:[%s2 + $0x60] sm:$0xff]
    %v951 = vld [vmem:[%s2 + $0x68] sm:$0xff]
    %v952 = vld [vmem:[%s2 + $0x70] sm:$0xff]
    %v953 = vld [vmem:[%s2 + $0x78] sm:$0xff]
    %v954 = vld [vmem:[%s2 + $0x80] sm:$0xff]
    %v955 = vld [vmem:[%s2 + $0x88] sm:$0xff]
    %v956 = vld [vmem:[%s2 + $0x90] sm:$0xff]
    %v957 = vld [vmem:[%s2 + $0x98] sm:$0xff]
    %v958 = vld [vmem:[%s2 + $0xa0] sm:$0xff]
    %v959 = vld [vmem:[%s2 + $0xa8] sm:$0xff]
    %v960 = vld [vmem:[%s2 + $0xb0] sm:$0xff]
    %v961 = vld [vmem:[%s2 + $0xb8] sm:$0xff]
    %v962 = vld [vmem:[%s2 + $0xc0] sm:$0xff]
    %v963 = vld [vmem:[%s2 + $0xc8] sm:$0xff]
    %v964 = vld [vmem:[%s2 + $0xd0] sm:$0xff]
    %v965 = vld [vmem:[%s2 + $0xd8] sm:$0xff]
    %v966 = vld [vmem:[%s2 + $0xe0] sm:$0xff]
    %v967 = vld [vmem:[%s2 + $0xe8] sm:$0xff]
    %v968 = vld [vmem:[%s2 + $0xf0] sm:$0xff]
    %v969 = vld [vmem:[%s2 + $0xf8] sm:$0xff]
    %v970 = vlaneseq
    %v971 = vshrl.u32 %v970, 7
    %v972 = vsub.s32 3, %v971
    %v973 = vrot.slane %v43, %v972
    %v974 = vmul.f32 %v930, %v973
    %v975 = vmul.f32 %v931, %v973
    %v976 = vmul.f32 %v932, %v973
    %v977 = vmul.f32 %v933, %v973
    %v978 = vmul.f32 %v934, %v973
    %v979 = vmul.f32 %v935, %v973
    %v980 = vmul.f32 %v936, %v973
    %v981 = vmul.f32 %v937, %v973
    %v982 = vsel %vm310, %v974, 0.0
    %983 = vadd.xlane.f32.xlu0 %v982
    %v984 = vpop.xlane.xlu0 %983
    %v985 = vsel %vm310, %v975, 0.0
    %986 = vadd.xlane.f32.xlu0 %v985
    %v987 = vpop.xlane.xlu0 %986
    %v988 = vsel %vm310, %v976, 0.0
    %989 = vadd.xlane.f32.xlu0 %v988
    %v990 = vpop.xlane.xlu0 %989
    %v991 = vsel %vm310, %v977, 0.0
    %992 = vadd.xlane.f32.xlu0 %v991
    %v993 = vpop.xlane.xlu0 %992
    %v994 = vsel %vm310, %v978, 0.0
    %995 = vadd.xlane.f32.xlu0 %v994
    %v996 = vpop.xlane.xlu0 %995
    %v997 = vsel %vm310, %v979, 0.0
    %998 = vadd.xlane.f32.xlu0 %v997
    %v999 = vpop.xlane.xlu0 %998
    %v1000 = vsel %vm310, %v980, 0.0
    %1001 = vadd.xlane.f32.xlu0 %v1000
    %v1002 = vpop.xlane.xlu0 %1001
    %v1003 = vsel %vm310, %v981, 0.0
    %1004 = vadd.xlane.f32.xlu0 %v1003
    %v1005 = vpop.xlane.xlu0 %1004
    %v1006 = vlaneseq
    %v1007 = vshrl.u32 %v1006, 7
    %v1008 = vsub.s32 4, %v1007
    %v1009 = vrot.slane %v43, %v1008
    %v1010 = vmul.f32 %v930, %v1009
    %v1011 = vmul.f32 %v931, %v1009
    %v1012 = vmul.f32 %v932, %v1009
    %v1013 = vmul.f32 %v933, %v1009
    %v1014 = vmul.f32 %v934, %v1009
    %v1015 = vmul.f32 %v935, %v1009
    %v1016 = vmul.f32 %v936, %v1009
    %v1017 = vmul.f32 %v937, %v1009
    %v1018 = vsel %vm310, %v1010, 0.0
    %1019 = vadd.xlane.f32.xlu0 %v1018
    %v1020 = vpop.xlane.xlu0 %1019
    %v1021 = vsel %vm310, %v1011, 0.0
    %1022 = vadd.xlane.f32.xlu0 %v1021
    %v1023 = vpop.xlane.xlu0 %1022
    %v1024 = vsel %vm310, %v1012, 0.0
    %1025 = vadd.xlane.f32.xlu0 %v1024
    %v1026 = vpop.xlane.xlu0 %1025
    %v1027 = vsel %vm310, %v1013, 0.0
    %1028 = vadd.xlane.f32.xlu0 %v1027
    %v1029 = vpop.xlane.xlu0 %1028
    %v1030 = vsel %vm310, %v1014, 0.0
    %1031 = vadd.xlane.f32.xlu0 %v1030
    %v1032 = vpop.xlane.xlu0 %1031
    %v1033 = vsel %vm310, %v1015, 0.0
    %1034 = vadd.xlane.f32.xlu0 %v1033
    %v1035 = vpop.xlane.xlu0 %1034
    %v1036 = vsel %vm310, %v1016, 0.0
    %1037 = vadd.xlane.f32.xlu0 %v1036
    %v1038 = vpop.xlane.xlu0 %1037
    %v1039 = vsel %vm310, %v1017, 0.0
    %1040 = vadd.xlane.f32.xlu0 %v1039
    %v1041 = vpop.xlane.xlu0 %1040
    %v1042 = vadd.f32 %v984, %v1020
    %v1043 = vadd.f32 %v987, %v1023
    %v1044 = vadd.f32 %v990, %v1026
    %v1045 = vadd.f32 %v993, %v1029
    %v1046 = vadd.f32 %v996, %v1032
    %v1047 = vadd.f32 %v999, %v1035
    %v1048 = vadd.f32 %v1002, %v1038
    %v1049 = vadd.f32 %v1005, %v1041
    %vm1050 = vcmp.gt.f32.partialorder %v1042, 0.0
    %vm1051 = vcmp.gt.f32.partialorder %v1043, 0.0
    %vm1052 = vcmp.gt.f32.partialorder %v1044, 0.0
    %vm1053 = vcmp.gt.f32.partialorder %v1045, 0.0
    %vm1054 = vcmp.gt.f32.partialorder %v1046, 0.0
    %vm1055 = vcmp.gt.f32.partialorder %v1047, 0.0
    %vm1056 = vcmp.gt.f32.partialorder %v1048, 0.0
    %vm1057 = vcmp.gt.f32.partialorder %v1049, 0.0
    %v1058 = vmul.f32 %v1042, 0.2
    %v1059 = vmul.f32 %v1043, 0.2
    %v1060 = vmul.f32 %v1044, 0.2
    %v1061 = vmul.f32 %v1045, 0.2
    %v1062 = vmul.f32 %v1046, 0.2
    %v1063 = vmul.f32 %v1047, 0.2
    %v1064 = vmul.f32 %v1048, 0.2
    %v1065 = vmul.f32 %v1049, 0.2
    %v1066 = vsel %vm1050, %v1042, %v1058
    %v1067 = vsel %vm1051, %v1043, %v1059
    %v1068 = vsel %vm1052, %v1044, %v1060
    %v1069 = vsel %vm1053, %v1045, %v1061
    %v1070 = vsel %vm1054, %v1046, %v1062
    %v1071 = vsel %vm1055, %v1047, %v1063
    %v1072 = vsel %vm1056, %v1048, %v1064
    %v1073 = vsel %vm1057, %v1049, %v1065
    %v1074 = vld [vmem:[%s1] sm:$0xff]
    %v1075 = vld [vmem:[%s1 + $0x8] sm:$0xff]
    %v1076 = vld [vmem:[%s1 + $0x10] sm:$0xff]
    %v1077 = vld [vmem:[%s1 + $0x18] sm:$0xff]
    %v1078 = vld [vmem:[%s1 + $0x20] sm:$0xff]
    %v1079 = vld [vmem:[%s1 + $0x28] sm:$0xff]
    %v1080 = vld [vmem:[%s1 + $0x30] sm:$0xff]
    %v1081 = vld [vmem:[%s1 + $0x38] sm:$0xff]
    %v1082 = vld [vmem:[%s1 + $0x40] sm:$0xff]
    %v1083 = vld [vmem:[%s1 + $0x48] sm:$0xff]
    %v1084 = vld [vmem:[%s1 + $0x50] sm:$0xff]
    %v1085 = vld [vmem:[%s1 + $0x58] sm:$0xff]
    %v1086 = vld [vmem:[%s1 + $0x60] sm:$0xff]
    %v1087 = vld [vmem:[%s1 + $0x68] sm:$0xff]
    %v1088 = vld [vmem:[%s1 + $0x70] sm:$0xff]
    %v1089 = vld [vmem:[%s1 + $0x78] sm:$0xff]
    %v1090 = vld [vmem:[%s1 + $0x80] sm:$0xff]
    %v1091 = vld [vmem:[%s1 + $0x88] sm:$0xff]
    %v1092 = vld [vmem:[%s1 + $0x90] sm:$0xff]
    %v1093 = vld [vmem:[%s1 + $0x98] sm:$0xff]
    %v1094 = vld [vmem:[%s1 + $0xa0] sm:$0xff]
    %v1095 = vld [vmem:[%s1 + $0xa8] sm:$0xff]
    %v1096 = vld [vmem:[%s1 + $0xb0] sm:$0xff]
    %v1097 = vld [vmem:[%s1 + $0xb8] sm:$0xff]
    %v1098 = vld [vmem:[%s1 + $0xc0] sm:$0xff]
    %v1099 = vld [vmem:[%s1 + $0xc8] sm:$0xff]
    %v1100 = vld [vmem:[%s1 + $0xd0] sm:$0xff]
    %v1101 = vld [vmem:[%s1 + $0xd8] sm:$0xff]
    %v1102 = vld [vmem:[%s1 + $0xe0] sm:$0xff]
    %v1103 = vld [vmem:[%s1 + $0xe8] sm:$0xff]
    %v1104 = vld [vmem:[%s1 + $0xf0] sm:$0xff]
    %v1105 = vld [vmem:[%s1 + $0xf8] sm:$0xff]
    %v1106 = vsel %vm79, %v1074, 0.0
    %1107 = vadd.xlane.f32.xlu0 %v1106
    %v1108 = vpop.xlane.xlu0 %1107
    %v1109 = vsel %vm79, %v1075, 0.0
    %1110 = vadd.xlane.f32.xlu0 %v1109
    %v1111 = vpop.xlane.xlu0 %1110
    %v1112 = vsel %vm79, %v1076, 0.0
    %1113 = vadd.xlane.f32.xlu0 %v1112
    %v1114 = vpop.xlane.xlu0 %1113
    %v1115 = vsel %vm79, %v1077, 0.0
    %1116 = vadd.xlane.f32.xlu0 %v1115
    %v1117 = vpop.xlane.xlu0 %1116
    %v1118 = vsel %vm79, %v1078, 0.0
    %1119 = vadd.xlane.f32.xlu0 %v1118
    %v1120 = vpop.xlane.xlu0 %1119
    %v1121 = vsel %vm79, %v1079, 0.0
    %1122 = vadd.xlane.f32.xlu0 %v1121
    %v1123 = vpop.xlane.xlu0 %1122
    %v1124 = vsel %vm79, %v1080, 0.0
    %1125 = vadd.xlane.f32.xlu0 %v1124
    %v1126 = vpop.xlane.xlu0 %1125
    %v1127 = vsel %vm79, %v1081, 0.0
    %1128 = vadd.xlane.f32.xlu0 %v1127
    %v1129 = vpop.xlane.xlu0 %1128
    %v1130 = vsel %vm79, %v1082, 0.0
    %1131 = vadd.xlane.f32.xlu0 %v1130
    %v1132 = vpop.xlane.xlu0 %1131
    %v1133 = vsel %vm79, %v1083, 0.0
    %1134 = vadd.xlane.f32.xlu0 %v1133
    %v1135 = vpop.xlane.xlu0 %1134
    %v1136 = vsel %vm79, %v1084, 0.0
    %1137 = vadd.xlane.f32.xlu0 %v1136
    %v1138 = vpop.xlane.xlu0 %1137
    %v1139 = vsel %vm79, %v1085, 0.0
    %1140 = vadd.xlane.f32.xlu0 %v1139
    %v1141 = vpop.xlane.xlu0 %1140
    %v1142 = vsel %vm79, %v1086, 0.0
    %1143 = vadd.xlane.f32.xlu0 %v1142
    %v1144 = vpop.xlane.xlu0 %1143
    %v1145 = vsel %vm79, %v1087, 0.0
    %1146 = vadd.xlane.f32.xlu0 %v1145
    %v1147 = vpop.xlane.xlu0 %1146
    %v1148 = vsel %vm79, %v1088, 0.0
    %1149 = vadd.xlane.f32.xlu0 %v1148
    %v1150 = vpop.xlane.xlu0 %1149
    %v1151 = vsel %vm79, %v1089, 0.0
    %1152 = vadd.xlane.f32.xlu0 %v1151
    %v1153 = vpop.xlane.xlu0 %1152
    %v1154 = vsel %vm79, %v1090, 0.0
    %1155 = vadd.xlane.f32.xlu0 %v1154
    %v1156 = vpop.xlane.xlu0 %1155
    %v1157 = vsel %vm79, %v1091, 0.0
    %1158 = vadd.xlane.f32.xlu0 %v1157
    %v1159 = vpop.xlane.xlu0 %1158
    %v1160 = vsel %vm79, %v1092, 0.0
    %1161 = vadd.xlane.f32.xlu0 %v1160
    %v1162 = vpop.xlane.xlu0 %1161
    %v1163 = vsel %vm79, %v1093, 0.0
    %1164 = vadd.xlane.f32.xlu0 %v1163
    %v1165 = vpop.xlane.xlu0 %1164
    %v1166 = vsel %vm79, %v1094, 0.0
    %1167 = vadd.xlane.f32.xlu0 %v1166
    %v1168 = vpop.xlane.xlu0 %1167
    %v1169 = vsel %vm79, %v1095, 0.0
    %1170 = vadd.xlane.f32.xlu0 %v1169
    %v1171 = vpop.xlane.xlu0 %1170
    %v1172 = vsel %vm79, %v1096, 0.0
    %1173 = vadd.xlane.f32.xlu0 %v1172
    %v1174 = vpop.xlane.xlu0 %1173
    %v1175 = vsel %vm79, %v1097, 0.0
    %1176 = vadd.xlane.f32.xlu0 %v1175
    %v1177 = vpop.xlane.xlu0 %1176
    %v1178 = vsel %vm79, %v1098, 0.0
    %1179 = vadd.xlane.f32.xlu0 %v1178
    %v1180 = vpop.xlane.xlu0 %1179
    %v1181 = vsel %vm79, %v1099, 0.0
    %1182 = vadd.xlane.f32.xlu0 %v1181
    %v1183 = vpop.xlane.xlu0 %1182
    %v1184 = vsel %vm79, %v1100, 0.0
    %1185 = vadd.xlane.f32.xlu0 %v1184
    %v1186 = vpop.xlane.xlu0 %1185
    %v1187 = vsel %vm79, %v1101, 0.0
    %1188 = vadd.xlane.f32.xlu0 %v1187
    %v1189 = vpop.xlane.xlu0 %1188
    %v1190 = vsel %vm79, %v1102, 0.0
    %1191 = vadd.xlane.f32.xlu0 %v1190
    %v1192 = vpop.xlane.xlu0 %1191
    %v1193 = vsel %vm79, %v1103, 0.0
    %1194 = vadd.xlane.f32.xlu0 %v1193
    %v1195 = vpop.xlane.xlu0 %1194
    %v1196 = vsel %vm79, %v1104, 0.0
    %1197 = vadd.xlane.f32.xlu0 %v1196
    %v1198 = vpop.xlane.xlu0 %1197
    %v1199 = vsel %vm79, %v1105, 0.0
    %1200 = vadd.xlane.f32.xlu0 %v1199
    %v1201 = vpop.xlane.xlu0 %1200
    %v1202 = vmul.f32 %v1108, %v104
    %v1203 = vmul.f32 %v1111, %v104
    %v1204 = vmul.f32 %v1114, %v104
    %v1205 = vmul.f32 %v1117, %v104
    %v1206 = vmul.f32 %v1120, %v104
    %v1207 = vmul.f32 %v1123, %v104
    %v1208 = vmul.f32 %v1126, %v104
    %v1209 = vmul.f32 %v1129, %v104
    %v1210 = vmul.f32 %v1132, %v104
    %v1211 = vmul.f32 %v1135, %v104
    %v1212 = vmul.f32 %v1138, %v104
    %v1213 = vmul.f32 %v1141, %v104
    %v1214 = vmul.f32 %v1144, %v104
    %v1215 = vmul.f32 %v1147, %v104
    %v1216 = vmul.f32 %v1150, %v104
    %v1217 = vmul.f32 %v1153, %v104
    %v1218 = vmul.f32 %v1156, %v104
    %v1219 = vmul.f32 %v1159, %v104
    %v1220 = vmul.f32 %v1162, %v104
    %v1221 = vmul.f32 %v1165, %v104
    %v1222 = vmul.f32 %v1168, %v104
    %v1223 = vmul.f32 %v1171, %v104
    %v1224 = vmul.f32 %v1174, %v104
    %v1225 = vmul.f32 %v1177, %v104
    %v1226 = vmul.f32 %v1180, %v104
    %v1227 = vmul.f32 %v1183, %v104
    %v1228 = vmul.f32 %v1186, %v104
    %v1229 = vmul.f32 %v1189, %v104
    %v1230 = vmul.f32 %v1192, %v104
    %v1231 = vmul.f32 %v1195, %v104
    %v1232 = vmul.f32 %v1198, %v104
    %v1233 = vmul.f32 %v1201, %v104
    %v1234 = vsub.f32 %v1074, %v1202
    %v1235 = vsub.f32 %v1075, %v1203
    %v1236 = vsub.f32 %v1076, %v1204
    %v1237 = vsub.f32 %v1077, %v1205
    %v1238 = vsub.f32 %v1078, %v1206
    %v1239 = vsub.f32 %v1079, %v1207
    %v1240 = vsub.f32 %v1080, %v1208
    %v1241 = vsub.f32 %v1081, %v1209
    %v1242 = vsub.f32 %v1082, %v1210
    %v1243 = vsub.f32 %v1083, %v1211
    %v1244 = vsub.f32 %v1084, %v1212
    %v1245 = vsub.f32 %v1085, %v1213
    %v1246 = vsub.f32 %v1086, %v1214
    %v1247 = vsub.f32 %v1087, %v1215
    %v1248 = vsub.f32 %v1088, %v1216
    %v1249 = vsub.f32 %v1089, %v1217
    %v1250 = vsub.f32 %v1090, %v1218
    %v1251 = vsub.f32 %v1091, %v1219
    %v1252 = vsub.f32 %v1092, %v1220
    %v1253 = vsub.f32 %v1093, %v1221
    %v1254 = vsub.f32 %v1094, %v1222
    %v1255 = vsub.f32 %v1095, %v1223
    %v1256 = vsub.f32 %v1096, %v1224
    %v1257 = vsub.f32 %v1097, %v1225
    %v1258 = vsub.f32 %v1098, %v1226
    %v1259 = vsub.f32 %v1099, %v1227
    %v1260 = vsub.f32 %v1100, %v1228
    %v1261 = vsub.f32 %v1101, %v1229
    %v1262 = vsub.f32 %v1102, %v1230
    %v1263 = vsub.f32 %v1103, %v1231
    %v1264 = vsub.f32 %v1104, %v1232
    %v1265 = vsub.f32 %v1105, %v1233
    %v1266 = vmul.f32 %v1234, %v1234
    %v1267 = vmul.f32 %v1235, %v1235
    %v1268 = vmul.f32 %v1236, %v1236
    %v1269 = vmul.f32 %v1237, %v1237
    %v1270 = vmul.f32 %v1238, %v1238
    %v1271 = vmul.f32 %v1239, %v1239
    %v1272 = vmul.f32 %v1240, %v1240
    %v1273 = vmul.f32 %v1241, %v1241
    %v1274 = vmul.f32 %v1242, %v1242
    %v1275 = vmul.f32 %v1243, %v1243
    %v1276 = vmul.f32 %v1244, %v1244
    %v1277 = vmul.f32 %v1245, %v1245
    %v1278 = vmul.f32 %v1246, %v1246
    %v1279 = vmul.f32 %v1247, %v1247
    %v1280 = vmul.f32 %v1248, %v1248
    %v1281 = vmul.f32 %v1249, %v1249
    %v1282 = vmul.f32 %v1250, %v1250
    %v1283 = vmul.f32 %v1251, %v1251
    %v1284 = vmul.f32 %v1252, %v1252
    %v1285 = vmul.f32 %v1253, %v1253
    %v1286 = vmul.f32 %v1254, %v1254
    %v1287 = vmul.f32 %v1255, %v1255
    %v1288 = vmul.f32 %v1256, %v1256
    %v1289 = vmul.f32 %v1257, %v1257
    %v1290 = vmul.f32 %v1258, %v1258
    %v1291 = vmul.f32 %v1259, %v1259
    %v1292 = vmul.f32 %v1260, %v1260
    %v1293 = vmul.f32 %v1261, %v1261
    %v1294 = vmul.f32 %v1262, %v1262
    %v1295 = vmul.f32 %v1263, %v1263
    %v1296 = vmul.f32 %v1264, %v1264
    %v1297 = vmul.f32 %v1265, %v1265
    %v1298 = vsel %vm79, %v1266, 0.0
    %1299 = vadd.xlane.f32.xlu0 %v1298
    %v1300 = vpop.xlane.xlu0 %1299
    %v1301 = vsel %vm79, %v1267, 0.0
    %1302 = vadd.xlane.f32.xlu0 %v1301
    %v1303 = vpop.xlane.xlu0 %1302
    %v1304 = vsel %vm79, %v1268, 0.0
    %1305 = vadd.xlane.f32.xlu0 %v1304
    %v1306 = vpop.xlane.xlu0 %1305
    %v1307 = vsel %vm79, %v1269, 0.0
    %1308 = vadd.xlane.f32.xlu0 %v1307
    %v1309 = vpop.xlane.xlu0 %1308
    %v1310 = vsel %vm79, %v1270, 0.0
    %1311 = vadd.xlane.f32.xlu0 %v1310
    %v1312 = vpop.xlane.xlu0 %1311
    %v1313 = vsel %vm79, %v1271, 0.0
    %1314 = vadd.xlane.f32.xlu0 %v1313
    %v1315 = vpop.xlane.xlu0 %1314
    %v1316 = vsel %vm79, %v1272, 0.0
    %1317 = vadd.xlane.f32.xlu0 %v1316
    %v1318 = vpop.xlane.xlu0 %1317
    %v1319 = vsel %vm79, %v1273, 0.0
    %1320 = vadd.xlane.f32.xlu0 %v1319
    %v1321 = vpop.xlane.xlu0 %1320
    %v1322 = vsel %vm79, %v1274, 0.0
    %1323 = vadd.xlane.f32.xlu0 %v1322
    %v1324 = vpop.xlane.xlu0 %1323
    %v1325 = vsel %vm79, %v1275, 0.0
    %1326 = vadd.xlane.f32.xlu0 %v1325
    %v1327 = vpop.xlane.xlu0 %1326
    %v1328 = vsel %vm79, %v1276, 0.0
    %1329 = vadd.xlane.f32.xlu0 %v1328
    %v1330 = vpop.xlane.xlu0 %1329
    %v1331 = vsel %vm79, %v1277, 0.0
    %1332 = vadd.xlane.f32.xlu0 %v1331
    %v1333 = vpop.xlane.xlu0 %1332
    %v1334 = vsel %vm79, %v1278, 0.0
    %1335 = vadd.xlane.f32.xlu0 %v1334
    %v1336 = vpop.xlane.xlu0 %1335
    %v1337 = vsel %vm79, %v1279, 0.0
    %1338 = vadd.xlane.f32.xlu0 %v1337
    %v1339 = vpop.xlane.xlu0 %1338
    %v1340 = vsel %vm79, %v1280, 0.0
    %1341 = vadd.xlane.f32.xlu0 %v1340
    %v1342 = vpop.xlane.xlu0 %1341
    %v1343 = vsel %vm79, %v1281, 0.0
    %1344 = vadd.xlane.f32.xlu0 %v1343
    %v1345 = vpop.xlane.xlu0 %1344
    %v1346 = vsel %vm79, %v1282, 0.0
    %1347 = vadd.xlane.f32.xlu0 %v1346
    %v1348 = vpop.xlane.xlu0 %1347
    %v1349 = vsel %vm79, %v1283, 0.0
    %1350 = vadd.xlane.f32.xlu0 %v1349
    %v1351 = vpop.xlane.xlu0 %1350
    %v1352 = vsel %vm79, %v1284, 0.0
    %1353 = vadd.xlane.f32.xlu0 %v1352
    %v1354 = vpop.xlane.xlu0 %1353
    %v1355 = vsel %vm79, %v1285, 0.0
    %1356 = vadd.xlane.f32.xlu0 %v1355
    %v1357 = vpop.xlane.xlu0 %1356
    %v1358 = vsel %vm79, %v1286, 0.0
    %1359 = vadd.xlane.f32.xlu0 %v1358
    %v1360 = vpop.xlane.xlu0 %1359
    %v1361 = vsel %vm79, %v1287, 0.0
    %1362 = vadd.xlane.f32.xlu0 %v1361
    %v1363 = vpop.xlane.xlu0 %1362
    %v1364 = vsel %vm79, %v1288, 0.0
    %1365 = vadd.xlane.f32.xlu0 %v1364
    %v1366 = vpop.xlane.xlu0 %1365
    %v1367 = vsel %vm79, %v1289, 0.0
    %1368 = vadd.xlane.f32.xlu0 %v1367
    %v1369 = vpop.xlane.xlu0 %1368
    %v1370 = vsel %vm79, %v1290, 0.0
    %1371 = vadd.xlane.f32.xlu0 %v1370
    %v1372 = vpop.xlane.xlu0 %1371
    %v1373 = vsel %vm79, %v1291, 0.0
    %1374 = vadd.xlane.f32.xlu0 %v1373
    %v1375 = vpop.xlane.xlu0 %1374
    %v1376 = vsel %vm79, %v1292, 0.0
    %1377 = vadd.xlane.f32.xlu0 %v1376
    %v1378 = vpop.xlane.xlu0 %1377
    %v1379 = vsel %vm79, %v1293, 0.0
    %1380 = vadd.xlane.f32.xlu0 %v1379
    %v1381 = vpop.xlane.xlu0 %1380
    %v1382 = vsel %vm79, %v1294, 0.0
    %1383 = vadd.xlane.f32.xlu0 %v1382
    %v1384 = vpop.xlane.xlu0 %1383
    %v1385 = vsel %vm79, %v1295, 0.0
    %1386 = vadd.xlane.f32.xlu0 %v1385
    %v1387 = vpop.xlane.xlu0 %1386
    %v1388 = vsel %vm79, %v1296, 0.0
    %1389 = vadd.xlane.f32.xlu0 %v1388
    %v1390 = vpop.xlane.xlu0 %1389
    %v1391 = vsel %vm79, %v1297, 0.0
    %1392 = vadd.xlane.f32.xlu0 %v1391
    %v1393 = vpop.xlane.xlu0 %1392
    %v1394 = vmul.f32 %v1300, %v104
    %v1395 = vmul.f32 %v1303, %v104
    %v1396 = vmul.f32 %v1306, %v104
    %v1397 = vmul.f32 %v1309, %v104
    %v1398 = vmul.f32 %v1312, %v104
    %v1399 = vmul.f32 %v1315, %v104
    %v1400 = vmul.f32 %v1318, %v104
    %v1401 = vmul.f32 %v1321, %v104
    %v1402 = vmul.f32 %v1324, %v104
    %v1403 = vmul.f32 %v1327, %v104
    %v1404 = vmul.f32 %v1330, %v104
    %v1405 = vmul.f32 %v1333, %v104
    %v1406 = vmul.f32 %v1336, %v104
    %v1407 = vmul.f32 %v1339, %v104
    %v1408 = vmul.f32 %v1342, %v104
    %v1409 = vmul.f32 %v1345, %v104
    %v1410 = vmul.f32 %v1348, %v104
    %v1411 = vmul.f32 %v1351, %v104
    %v1412 = vmul.f32 %v1354, %v104
    %v1413 = vmul.f32 %v1357, %v104
    %v1414 = vmul.f32 %v1360, %v104
    %v1415 = vmul.f32 %v1363, %v104
    %v1416 = vmul.f32 %v1366, %v104
    %v1417 = vmul.f32 %v1369, %v104
    %v1418 = vmul.f32 %v1372, %v104
    %v1419 = vmul.f32 %v1375, %v104
    %v1420 = vmul.f32 %v1378, %v104
    %v1421 = vmul.f32 %v1381, %v104
    %v1422 = vmul.f32 %v1384, %v104
    %v1423 = vmul.f32 %v1387, %v104
    %v1424 = vmul.f32 %v1390, %v104
    %v1425 = vmul.f32 %v1393, %v104
    %v1426 = vadd.f32 %v1394, 1e-05
    %v1427 = vadd.f32 %v1395, 1e-05
    %v1428 = vadd.f32 %v1396, 1e-05
    %v1429 = vadd.f32 %v1397, 1e-05
    %v1430 = vadd.f32 %v1398, 1e-05
    %v1431 = vadd.f32 %v1399, 1e-05
    %v1432 = vadd.f32 %v1400, 1e-05
    %v1433 = vadd.f32 %v1401, 1e-05
    %v1434 = vadd.f32 %v1402, 1e-05
    %v1435 = vadd.f32 %v1403, 1e-05
    %v1436 = vadd.f32 %v1404, 1e-05
    %v1437 = vadd.f32 %v1405, 1e-05
    %v1438 = vadd.f32 %v1406, 1e-05
    %v1439 = vadd.f32 %v1407, 1e-05
    %v1440 = vadd.f32 %v1408, 1e-05
    %v1441 = vadd.f32 %v1409, 1e-05
    %v1442 = vadd.f32 %v1410, 1e-05
    %v1443 = vadd.f32 %v1411, 1e-05
    %v1444 = vadd.f32 %v1412, 1e-05
    %v1445 = vadd.f32 %v1413, 1e-05
    %v1446 = vadd.f32 %v1414, 1e-05
    %v1447 = vadd.f32 %v1415, 1e-05
    %v1448 = vadd.f32 %v1416, 1e-05
    %v1449 = vadd.f32 %v1417, 1e-05
    %v1450 = vadd.f32 %v1418, 1e-05
    %v1451 = vadd.f32 %v1419, 1e-05
    %v1452 = vadd.f32 %v1420, 1e-05
    %v1453 = vadd.f32 %v1421, 1e-05
    %v1454 = vadd.f32 %v1422, 1e-05
    %v1455 = vadd.f32 %v1423, 1e-05
    %v1456 = vadd.f32 %v1424, 1e-05
    %v1457 = vadd.f32 %v1425, 1e-05
    %v1458 = vrsqrt.pop %v1426
    %v1459 = vrsqrt.pop %v1427
    %v1460 = vrsqrt.pop %v1428
    %v1461 = vrsqrt.pop %v1429
    %v1462 = vrsqrt.pop %v1430
    %v1463 = vrsqrt.pop %v1431
    %v1464 = vrsqrt.pop %v1432
    %v1465 = vrsqrt.pop %v1433
    %v1466 = vrsqrt.pop %v1434
    %v1467 = vrsqrt.pop %v1435
    %v1468 = vrsqrt.pop %v1436
    %v1469 = vrsqrt.pop %v1437
    %v1470 = vrsqrt.pop %v1438
    %v1471 = vrsqrt.pop %v1439
    %v1472 = vrsqrt.pop %v1440
    %v1473 = vrsqrt.pop %v1441
    %v1474 = vrsqrt.pop %v1442
    %v1475 = vrsqrt.pop %v1443
    %v1476 = vrsqrt.pop %v1444
    %v1477 = vrsqrt.pop %v1445
    %v1478 = vrsqrt.pop %v1446
    %v1479 = vrsqrt.pop %v1447
    %v1480 = vrsqrt.pop %v1448
    %v1481 = vrsqrt.pop %v1449
    %v1482 = vrsqrt.pop %v1450
    %v1483 = vrsqrt.pop %v1451
    %v1484 = vrsqrt.pop %v1452
    %v1485 = vrsqrt.pop %v1453
    %v1486 = vrsqrt.pop %v1454
    %v1487 = vrsqrt.pop %v1455
    %v1488 = vrsqrt.pop %v1456
    %v1489 = vrsqrt.pop %v1457
    %v1490 = vmul.f32 %v1234, %v1458
    %v1491 = vmul.f32 %v1235, %v1459
    %v1492 = vmul.f32 %v1236, %v1460
    %v1493 = vmul.f32 %v1237, %v1461
    %v1494 = vmul.f32 %v1238, %v1462
    %v1495 = vmul.f32 %v1239, %v1463
    %v1496 = vmul.f32 %v1240, %v1464
    %v1497 = vmul.f32 %v1241, %v1465
    %v1498 = vmul.f32 %v1242, %v1466
    %v1499 = vmul.f32 %v1243, %v1467
    %v1500 = vmul.f32 %v1244, %v1468
    %v1501 = vmul.f32 %v1245, %v1469
    %v1502 = vmul.f32 %v1246, %v1470
    %v1503 = vmul.f32 %v1247, %v1471
    %v1504 = vmul.f32 %v1248, %v1472
    %v1505 = vmul.f32 %v1249, %v1473
    %v1506 = vmul.f32 %v1250, %v1474
    %v1507 = vmul.f32 %v1251, %v1475
    %v1508 = vmul.f32 %v1252, %v1476
    %v1509 = vmul.f32 %v1253, %v1477
    %v1510 = vmul.f32 %v1254, %v1478
    %v1511 = vmul.f32 %v1255, %v1479
    %v1512 = vmul.f32 %v1256, %v1480
    %v1513 = vmul.f32 %v1257, %v1481
    %v1514 = vmul.f32 %v1258, %v1482
    %v1515 = vmul.f32 %v1259, %v1483
    %v1516 = vmul.f32 %v1260, %v1484
    %v1517 = vmul.f32 %v1261, %v1485
    %v1518 = vmul.f32 %v1262, %v1486
    %v1519 = vmul.f32 %v1263, %v1487
    %v1520 = vmul.f32 %v1264, %v1488
    %v1521 = vmul.f32 %v1265, %v1489
    %v1522 = vmul.f32 %v1490, %v188
    %v1523 = vmul.f32 %v1491, %v188
    %v1524 = vmul.f32 %v1492, %v188
    %v1525 = vmul.f32 %v1493, %v188
    %v1526 = vmul.f32 %v1494, %v188
    %v1527 = vmul.f32 %v1495, %v188
    %v1528 = vmul.f32 %v1496, %v188
    %v1529 = vmul.f32 %v1497, %v188
    %v1530 = vmul.f32 %v1498, %v188
    %v1531 = vmul.f32 %v1499, %v188
    %v1532 = vmul.f32 %v1500, %v188
    %v1533 = vmul.f32 %v1501, %v188
    %v1534 = vmul.f32 %v1502, %v188
    %v1535 = vmul.f32 %v1503, %v188
    %v1536 = vmul.f32 %v1504, %v188
    %v1537 = vmul.f32 %v1505, %v188
    %v1538 = vmul.f32 %v1506, %v188
    %v1539 = vmul.f32 %v1507, %v188
    %v1540 = vmul.f32 %v1508, %v188
    %v1541 = vmul.f32 %v1509, %v188
    %v1542 = vmul.f32 %v1510, %v188
    %v1543 = vmul.f32 %v1511, %v188
    %v1544 = vmul.f32 %v1512, %v188
    %v1545 = vmul.f32 %v1513, %v188
    %v1546 = vmul.f32 %v1514, %v188
    %v1547 = vmul.f32 %v1515, %v188
    %v1548 = vmul.f32 %v1516, %v188
    %v1549 = vmul.f32 %v1517, %v188
    %v1550 = vmul.f32 %v1518, %v188
    %v1551 = vmul.f32 %v1519, %v188
    %v1552 = vmul.f32 %v1520, %v188
    %v1553 = vmul.f32 %v1521, %v188
    %v1554 = vadd.f32 %v1522, %v200
    %v1555 = vadd.f32 %v1523, %v200
    %v1556 = vadd.f32 %v1524, %v200
    %v1557 = vadd.f32 %v1525, %v200
    %v1558 = vadd.f32 %v1526, %v200
    %v1559 = vadd.f32 %v1527, %v200
    %v1560 = vadd.f32 %v1528, %v200
    %v1561 = vadd.f32 %v1529, %v200
    %v1562 = vadd.f32 %v1530, %v200
    %v1563 = vadd.f32 %v1531, %v200
    %v1564 = vadd.f32 %v1532, %v200
    %v1565 = vadd.f32 %v1533, %v200
    %v1566 = vadd.f32 %v1534, %v200
    %v1567 = vadd.f32 %v1535, %v200
    %v1568 = vadd.f32 %v1536, %v200
    %v1569 = vadd.f32 %v1537, %v200
    %v1570 = vadd.f32 %v1538, %v200
    %v1571 = vadd.f32 %v1539, %v200
    %v1572 = vadd.f32 %v1540, %v200
    %v1573 = vadd.f32 %v1541, %v200
    %v1574 = vadd.f32 %v1542, %v200
    %v1575 = vadd.f32 %v1543, %v200
    %v1576 = vadd.f32 %v1544, %v200
    %v1577 = vadd.f32 %v1545, %v200
    %v1578 = vadd.f32 %v1546, %v200
    %v1579 = vadd.f32 %v1547, %v200
    %v1580 = vadd.f32 %v1548, %v200
    %v1581 = vadd.f32 %v1549, %v200
    %v1582 = vadd.f32 %v1550, %v200
    %v1583 = vadd.f32 %v1551, %v200
    %v1584 = vadd.f32 %v1552, %v200
    %v1585 = vadd.f32 %v1553, %v200
    %v1586 = vpack.c.bf16 %v1555, %v1554
    %v1587 = vpack.c.bf16 %v1557, %v1556
    %v1588 = vpack.c.bf16 %v1559, %v1558
    %v1589 = vpack.c.bf16 %v1561, %v1560
    %v1590 = vpack.c.bf16 %v1563, %v1562
    %v1591 = vpack.c.bf16 %v1565, %v1564
    %v1592 = vpack.c.bf16 %v1567, %v1566
    %v1593 = vpack.c.bf16 %v1569, %v1568
    %v1594 = vpack.c.bf16 %v1571, %v1570
    %v1595 = vpack.c.bf16 %v1573, %v1572
    %v1596 = vpack.c.bf16 %v1575, %v1574
    %v1597 = vpack.c.bf16 %v1577, %v1576
    %v1598 = vpack.c.bf16 %v1579, %v1578
    %v1599 = vpack.c.bf16 %v1581, %v1580
    %v1600 = vpack.c.bf16 %v1583, %v1582
    %v1601 = vpack.c.bf16 %v1585, %v1584
    %v1602 = vlaneseq
    %v1603 = vshrl.u32 %v1602, 7
    %v1604 = vsub.s32 2, %v1603
    %v1605 = vrot.slane %v43, %v1604
    %v1607 = vsel %vm79, %v1586, 0
    %v1610 = vsel %vm79, %v1587, 0
    %v1613 = vsel %vm79, %v1588, 0
    %v1616 = vsel %vm79, %v1589, 0
    %v1619 = vsel %vm79, %v1590, 0
    %v1622 = vsel %vm79, %v1591, 0
    %v1625 = vsel %vm79, %v1592, 0
    %v1628 = vsel %vm79, %v1593, 0
    %v1631 = vsel %vm79, %v1594, 0
    %v1634 = vsel %vm79, %v1595, 0
    %v1637 = vsel %vm79, %v1596, 0
    %v1640 = vsel %vm79, %v1597, 0
    %v1643 = vsel %vm79, %v1598, 0
    %v1646 = vsel %vm79, %v1599, 0
    %v1649 = vsel %vm79, %v1600, 0
    %v1652 = vsel %vm79, %v1601, 0
    %v1655 = vsel %vm229, %v50, 0
    %1657 = vmatprep.subr.bf16.mxu0 0
    %1658 = vmatpush1.bf16.msra.mxu0 0
    %1659 = vmatprep.subr.bf16.mxu0 0
    %1660 = vmatpush1.bf16.msra.mxu0 0
    %1661 = vmatprep.subr.bf16.mxu0 0
    %1662 = vmatpush1.bf16.msra.mxu0 0
    %1663 = vmatprep.subr.bf16.mxu0 0
    %1664 = vmatpush1.bf16.msra.mxu0 0
    %1665 = vmatprep.subr.bf16.mxu0 0
    %1666 = vmatpush1.bf16.msra.mxu0 0
    %1667 = vmatprep.subr.bf16.mxu0 0
    %1668 = vmatpush1.bf16.msra.mxu0 0
    %1669 = vmatprep.subr.bf16.mxu0 0
    %1670 = vmatpush1.bf16.msra.mxu0 0
    %1671 = vmatprep.subr.bf16.mxu0 0
    %1672 = vmatpush1.bf16.msra.mxu0 %v1655
    %1673 = vmatprep.subr.bf16.mxu0 0
    %1674 = vmatpush2.bf16.msra.mxu0 0
    %1675 = vmatprep.subr.bf16.mxu0 0
    %1676 = vmatpush2.bf16.msra.mxu0 0
    %1677 = vmatprep.subr.bf16.mxu0 0
    %1678 = vmatpush2.bf16.msra.mxu0 0
    %1679 = vmatprep.subr.bf16.mxu0 0
    %1680 = vmatpush2.bf16.msra.mxu0 0
    %1681 = vmatprep.subr.bf16.mxu0 0
    %1682 = vmatpush2.bf16.msra.mxu0 0
    %1683 = vmatprep.subr.bf16.mxu0 0
    %1684 = vmatpush2.bf16.msra.mxu0 0
    %1685 = vmatprep.subr.bf16.mxu0 0
    %1686 = vmatpush2.bf16.msra.mxu0 0
    %1687 = vmatprep.subr.bf16.mxu0 0
    %1688 = vmatpush2.bf16.msra.mxu0 0
    %1689 = vmatprep.mubr.bf16.mxu0 0
    %1690 = vmatmul.mubr.bf16.gmra.mxu0 %v1607
    %v1691 = vpop.f32.mrf.mxu0
    %v1692 = vadd.f32 %v1605, %v1691
    %v1693 = vpop.f32.mrf.mxu0
    %v1694 = vpop.f32.mrf.mxu0
    %v1695 = vadd.f32 %v1605, %v1694
    %v1696 = vpop.f32.mrf.mxu0
    %1697 = vmatprep.mubr.bf16.mxu0 0
    %1698 = vmatmul.mubr.bf16.gmra.mxu0 %v1610
    %v1699 = vpop.f32.mrf.mxu0
    %v1700 = vadd.f32 %v1605, %v1699
    %v1701 = vpop.f32.mrf.mxu0
    %v1702 = vpop.f32.mrf.mxu0
    %v1703 = vadd.f32 %v1605, %v1702
    %v1704 = vpop.f32.mrf.mxu0
    %1705 = vmatprep.mubr.bf16.mxu0 0
    %1706 = vmatmul.mubr.bf16.gmra.mxu0 %v1613
    %v1707 = vpop.f32.mrf.mxu0
    %v1708 = vadd.f32 %v1605, %v1707
    %v1709 = vpop.f32.mrf.mxu0
    %v1710 = vpop.f32.mrf.mxu0
    %v1711 = vadd.f32 %v1605, %v1710
    %v1712 = vpop.f32.mrf.mxu0
    %1713 = vmatprep.mubr.bf16.mxu0 0
    %1714 = vmatmul.mubr.bf16.gmra.mxu0 %v1616
    %v1715 = vpop.f32.mrf.mxu0
    %v1716 = vadd.f32 %v1605, %v1715
    %v1717 = vpop.f32.mrf.mxu0
    %v1718 = vpop.f32.mrf.mxu0
    %v1719 = vadd.f32 %v1605, %v1718
    %v1720 = vpop.f32.mrf.mxu0
    %1721 = vmatprep.mubr.bf16.mxu0 0
    %1722 = vmatmul.mubr.bf16.gmra.mxu0 %v1619
    %v1723 = vpop.f32.mrf.mxu0
    %v1724 = vadd.f32 %v1605, %v1723
    %v1725 = vpop.f32.mrf.mxu0
    %v1726 = vpop.f32.mrf.mxu0
    %v1727 = vadd.f32 %v1605, %v1726
    %v1728 = vpop.f32.mrf.mxu0
    %1729 = vmatprep.mubr.bf16.mxu0 0
    %1730 = vmatmul.mubr.bf16.gmra.mxu0 %v1622
    %v1731 = vpop.f32.mrf.mxu0
    %v1732 = vadd.f32 %v1605, %v1731
    %v1733 = vpop.f32.mrf.mxu0
    %v1734 = vpop.f32.mrf.mxu0
    %v1735 = vadd.f32 %v1605, %v1734
    %v1736 = vpop.f32.mrf.mxu0
    %1737 = vmatprep.mubr.bf16.mxu0 0
    %1738 = vmatmul.mubr.bf16.gmra.mxu0 %v1625
    %v1739 = vpop.f32.mrf.mxu0
    %v1740 = vadd.f32 %v1605, %v1739
    %v1741 = vpop.f32.mrf.mxu0
    %v1742 = vpop.f32.mrf.mxu0
    %v1743 = vadd.f32 %v1605, %v1742
    %v1744 = vpop.f32.mrf.mxu0
    %1745 = vmatprep.mubr.bf16.mxu0 0
    %1746 = vmatmul.mubr.bf16.gmra.mxu0 %v1628
    %v1747 = vpop.f32.mrf.mxu0
    %v1748 = vadd.f32 %v1605, %v1747
    %v1749 = vpop.f32.mrf.mxu0
    %v1750 = vpop.f32.mrf.mxu0
    %v1751 = vadd.f32 %v1605, %v1750
    %v1752 = vpop.f32.mrf.mxu0
    %1753 = vmatprep.mubr.bf16.mxu0 0
    %1754 = vmatmul.mubr.bf16.gmra.mxu0 %v1631
    %v1755 = vpop.f32.mrf.mxu0
    %v1756 = vadd.f32 %v1605, %v1755
    %v1757 = vpop.f32.mrf.mxu0
    %v1758 = vpop.f32.mrf.mxu0
    %v1759 = vadd.f32 %v1605, %v1758
    %v1760 = vpop.f32.mrf.mxu0
    %1761 = vmatprep.mubr.bf16.mxu0 0
    %1762 = vmatmul.mubr.bf16.gmra.mxu0 %v1634
    %v1763 = vpop.f32.mrf.mxu0
    %v1764 = vadd.f32 %v1605, %v1763
    %v1765 = vpop.f32.mrf.mxu0
    %v1766 = vpop.f32.mrf.mxu0
    %v1767 = vadd.f32 %v1605, %v1766
    %v1768 = vpop.f32.mrf.mxu0
    %1769 = vmatprep.mubr.bf16.mxu0 0
    %1770 = vmatmul.mubr.bf16.gmra.mxu0 %v1637
    %v1771 = vpop.f32.mrf.mxu0
    %v1772 = vadd.f32 %v1605, %v1771
    %v1773 = vpop.f32.mrf.mxu0
    %v1774 = vpop.f32.mrf.mxu0
    %v1775 = vadd.f32 %v1605, %v1774
    %v1776 = vpop.f32.mrf.mxu0
    %1777 = vmatprep.mubr.bf16.mxu0 0
    %1778 = vmatmul.mubr.bf16.gmra.mxu0 %v1640
    %v1779 = vpop.f32.mrf.mxu0
    %v1780 = vadd.f32 %v1605, %v1779
    %v1781 = vpop.f32.mrf.mxu0
    %v1782 = vpop.f32.mrf.mxu0
    %v1783 = vadd.f32 %v1605, %v1782
    %v1784 = vpop.f32.mrf.mxu0
    %1785 = vmatprep.mubr.bf16.mxu0 0
    %1786 = vmatmul.mubr.bf16.gmra.mxu0 %v1643
    %v1787 = vpop.f32.mrf.mxu0
    %v1788 = vadd.f32 %v1605, %v1787
    %v1789 = vpop.f32.mrf.mxu0
    %v1790 = vpop.f32.mrf.mxu0
    %v1791 = vadd.f32 %v1605, %v1790
    %v1792 = vpop.f32.mrf.mxu0
    %1793 = vmatprep.mubr.bf16.mxu0 0
    %1794 = vmatmul.mubr.bf16.gmra.mxu0 %v1646
    %v1795 = vpop.f32.mrf.mxu0
    %v1796 = vadd.f32 %v1605, %v1795
    %v1797 = vpop.f32.mrf.mxu0
    %v1798 = vpop.f32.mrf.mxu0
    %v1799 = vadd.f32 %v1605, %v1798
    %v1800 = vpop.f32.mrf.mxu0
    %1801 = vmatprep.mubr.bf16.mxu0 0
    %1802 = vmatmul.mubr.bf16.gmra.mxu0 %v1649
    %v1803 = vpop.f32.mrf.mxu0
    %v1804 = vadd.f32 %v1605, %v1803
    %v1805 = vpop.f32.mrf.mxu0
    %v1806 = vpop.f32.mrf.mxu0
    %v1807 = vadd.f32 %v1605, %v1806
    %v1808 = vpop.f32.mrf.mxu0
    %1809 = vmatprep.mubr.bf16.mxu0 0
    %1810 = vmatmul.mubr.bf16.gmra.mxu0 %v1652
    %v1811 = vpop.f32.mrf.mxu0
    %v1812 = vadd.f32 %v1605, %v1811
    %v1813 = vpop.f32.mrf.mxu0
    %v1814 = vpop.f32.mrf.mxu0
    %v1815 = vadd.f32 %v1605, %v1814
    %v1816 = vpop.f32.mrf.mxu0
    %1817 = vdwg.mxu0
    %v1818 = vmax.f32 %v1692, 0.0
    %v1819 = vmax.f32 %v1695, 0.0
    %v1820 = vmax.f32 %v1700, 0.0
    %v1821 = vmax.f32 %v1703, 0.0
    %v1822 = vmax.f32 %v1708, 0.0
    %v1823 = vmax.f32 %v1711, 0.0
    %v1824 = vmax.f32 %v1716, 0.0
    %v1825 = vmax.f32 %v1719, 0.0
    %v1826 = vmax.f32 %v1724, 0.0
    %v1827 = vmax.f32 %v1727, 0.0
    %v1828 = vmax.f32 %v1732, 0.0
    %v1829 = vmax.f32 %v1735, 0.0
    %v1830 = vmax.f32 %v1740, 0.0
    %v1831 = vmax.f32 %v1743, 0.0
    %v1832 = vmax.f32 %v1748, 0.0
    %v1833 = vmax.f32 %v1751, 0.0
    %v1834 = vmax.f32 %v1756, 0.0
    %v1835 = vmax.f32 %v1759, 0.0
    %v1836 = vmax.f32 %v1764, 0.0
    %v1837 = vmax.f32 %v1767, 0.0
    %v1838 = vmax.f32 %v1772, 0.0
    %v1839 = vmax.f32 %v1775, 0.0
    %v1840 = vmax.f32 %v1780, 0.0
    %v1841 = vmax.f32 %v1783, 0.0
    %v1842 = vmax.f32 %v1788, 0.0
    %v1843 = vmax.f32 %v1791, 0.0
    %v1844 = vmax.f32 %v1796, 0.0
    %v1845 = vmax.f32 %v1799, 0.0
    %v1846 = vmax.f32 %v1804, 0.0
    %v1847 = vmax.f32 %v1807, 0.0
    %v1848 = vmax.f32 %v1812, 0.0
    %v1849 = vmax.f32 %v1815, 0.0
    %v1850 = vmul.f32 %v1818, %v973
    %v1851 = vmul.f32 %v1819, %v973
    %v1852 = vmul.f32 %v1820, %v973
    %v1853 = vmul.f32 %v1821, %v973
    %v1854 = vmul.f32 %v1822, %v973
    %v1855 = vmul.f32 %v1823, %v973
    %v1856 = vmul.f32 %v1824, %v973
    %v1857 = vmul.f32 %v1825, %v973
    %v1858 = vmul.f32 %v1826, %v973
    %v1859 = vmul.f32 %v1827, %v973
    %v1860 = vmul.f32 %v1828, %v973
    %v1861 = vmul.f32 %v1829, %v973
    %v1862 = vmul.f32 %v1830, %v973
    %v1863 = vmul.f32 %v1831, %v973
    %v1864 = vmul.f32 %v1832, %v973
    %v1865 = vmul.f32 %v1833, %v973
    %v1866 = vmul.f32 %v1834, %v973
    %v1867 = vmul.f32 %v1835, %v973
    %v1868 = vmul.f32 %v1836, %v973
    %v1869 = vmul.f32 %v1837, %v973
    %v1870 = vmul.f32 %v1838, %v973
    %v1871 = vmul.f32 %v1839, %v973
    %v1872 = vmul.f32 %v1840, %v973
    %v1873 = vmul.f32 %v1841, %v973
    %v1874 = vmul.f32 %v1842, %v973
    %v1875 = vmul.f32 %v1843, %v973
    %v1876 = vmul.f32 %v1844, %v973
    %v1877 = vmul.f32 %v1845, %v973
    %v1878 = vmul.f32 %v1846, %v973
    %v1879 = vmul.f32 %v1847, %v973
    %v1880 = vmul.f32 %v1848, %v973
    %v1881 = vmul.f32 %v1849, %v973
    %v1882 = vsel %vm310, %v1850, 0.0
    %1883 = vadd.xlane.f32.xlu0 %v1882
    %v1884 = vpop.xlane.xlu0 %1883
    %v1885 = vsel %vm310, %v1851, 0.0
    %1886 = vadd.xlane.f32.xlu0 %v1885
    %v1887 = vpop.xlane.xlu0 %1886
    %v1888 = vsel %vm310, %v1852, 0.0
    %1889 = vadd.xlane.f32.xlu0 %v1888
    %v1890 = vpop.xlane.xlu0 %1889
    %v1891 = vsel %vm310, %v1853, 0.0
    %1892 = vadd.xlane.f32.xlu0 %v1891
    %v1893 = vpop.xlane.xlu0 %1892
    %v1894 = vsel %vm310, %v1854, 0.0
    %1895 = vadd.xlane.f32.xlu0 %v1894
    %v1896 = vpop.xlane.xlu0 %1895
    %v1897 = vsel %vm310, %v1855, 0.0
    %1898 = vadd.xlane.f32.xlu0 %v1897
    %v1899 = vpop.xlane.xlu0 %1898
    %v1900 = vsel %vm310, %v1856, 0.0
    %1901 = vadd.xlane.f32.xlu0 %v1900
    %v1902 = vpop.xlane.xlu0 %1901
    %v1903 = vsel %vm310, %v1857, 0.0
    %1904 = vadd.xlane.f32.xlu0 %v1903
    %v1905 = vpop.xlane.xlu0 %1904
    %v1906 = vsel %vm310, %v1858, 0.0
    %1907 = vadd.xlane.f32.xlu0 %v1906
    %v1908 = vpop.xlane.xlu0 %1907
    %v1909 = vsel %vm310, %v1859, 0.0
    %1910 = vadd.xlane.f32.xlu0 %v1909
    %v1911 = vpop.xlane.xlu0 %1910
    %v1912 = vsel %vm310, %v1860, 0.0
    %1913 = vadd.xlane.f32.xlu0 %v1912
    %v1914 = vpop.xlane.xlu0 %1913
    %v1915 = vsel %vm310, %v1861, 0.0
    %1916 = vadd.xlane.f32.xlu0 %v1915
    %v1917 = vpop.xlane.xlu0 %1916
    %v1918 = vsel %vm310, %v1862, 0.0
    %1919 = vadd.xlane.f32.xlu0 %v1918
    %v1920 = vpop.xlane.xlu0 %1919
    %v1921 = vsel %vm310, %v1863, 0.0
    %1922 = vadd.xlane.f32.xlu0 %v1921
    %v1923 = vpop.xlane.xlu0 %1922
    %v1924 = vsel %vm310, %v1864, 0.0
    %1925 = vadd.xlane.f32.xlu0 %v1924
    %v1926 = vpop.xlane.xlu0 %1925
    %v1927 = vsel %vm310, %v1865, 0.0
    %1928 = vadd.xlane.f32.xlu0 %v1927
    %v1929 = vpop.xlane.xlu0 %1928
    %v1930 = vsel %vm310, %v1866, 0.0
    %1931 = vadd.xlane.f32.xlu0 %v1930
    %v1932 = vpop.xlane.xlu0 %1931
    %v1933 = vsel %vm310, %v1867, 0.0
    %1934 = vadd.xlane.f32.xlu0 %v1933
    %v1935 = vpop.xlane.xlu0 %1934
    %v1936 = vsel %vm310, %v1868, 0.0
    %1937 = vadd.xlane.f32.xlu0 %v1936
    %v1938 = vpop.xlane.xlu0 %1937
    %v1939 = vsel %vm310, %v1869, 0.0
    %1940 = vadd.xlane.f32.xlu0 %v1939
    %v1941 = vpop.xlane.xlu0 %1940
    %v1942 = vsel %vm310, %v1870, 0.0
    %1943 = vadd.xlane.f32.xlu0 %v1942
    %v1944 = vpop.xlane.xlu0 %1943
    %v1945 = vsel %vm310, %v1871, 0.0
    %1946 = vadd.xlane.f32.xlu0 %v1945
    %v1947 = vpop.xlane.xlu0 %1946
    %v1948 = vsel %vm310, %v1872, 0.0
    %1949 = vadd.xlane.f32.xlu0 %v1948
    %v1950 = vpop.xlane.xlu0 %1949
    %v1951 = vsel %vm310, %v1873, 0.0
    %1952 = vadd.xlane.f32.xlu0 %v1951
    %v1953 = vpop.xlane.xlu0 %1952
    %v1954 = vsel %vm310, %v1874, 0.0
    %1955 = vadd.xlane.f32.xlu0 %v1954
    %v1956 = vpop.xlane.xlu0 %1955
    %v1957 = vsel %vm310, %v1875, 0.0
    %1958 = vadd.xlane.f32.xlu0 %v1957
    %v1959 = vpop.xlane.xlu0 %1958
    %v1960 = vsel %vm310, %v1876, 0.0
    %1961 = vadd.xlane.f32.xlu0 %v1960
    %v1962 = vpop.xlane.xlu0 %1961
    %v1963 = vsel %vm310, %v1877, 0.0
    %1964 = vadd.xlane.f32.xlu0 %v1963
    %v1965 = vpop.xlane.xlu0 %1964
    %v1966 = vsel %vm310, %v1878, 0.0
    %1967 = vadd.xlane.f32.xlu0 %v1966
    %v1968 = vpop.xlane.xlu0 %1967
    %v1969 = vsel %vm310, %v1879, 0.0
    %1970 = vadd.xlane.f32.xlu0 %v1969
    %v1971 = vpop.xlane.xlu0 %1970
    %v1972 = vsel %vm310, %v1880, 0.0
    %1973 = vadd.xlane.f32.xlu0 %v1972
    %v1974 = vpop.xlane.xlu0 %1973
    %v1975 = vsel %vm310, %v1881, 0.0
    %1976 = vadd.xlane.f32.xlu0 %v1975
    %v1977 = vpop.xlane.xlu0 %1976
    %v1978 = vadd.f32 %v1884, %v1020
    %v1979 = vadd.f32 %v1887, %v1023
    %v1980 = vadd.f32 %v1890, %v1026
    %v1981 = vadd.f32 %v1893, %v1029
    %v1982 = vadd.f32 %v1896, %v1032
    %v1983 = vadd.f32 %v1899, %v1035
    %v1984 = vadd.f32 %v1902, %v1038
    %v1985 = vadd.f32 %v1905, %v1041
    %v1986 = vadd.f32 %v1908, %v1020
    %v1987 = vadd.f32 %v1911, %v1023
    %v1988 = vadd.f32 %v1914, %v1026
    %v1989 = vadd.f32 %v1917, %v1029
    %v1990 = vadd.f32 %v1920, %v1032
    %v1991 = vadd.f32 %v1923, %v1035
    %v1992 = vadd.f32 %v1926, %v1038
    %v1993 = vadd.f32 %v1929, %v1041
    %v1994 = vadd.f32 %v1932, %v1020
    %v1995 = vadd.f32 %v1935, %v1023
    %v1996 = vadd.f32 %v1938, %v1026
    %v1997 = vadd.f32 %v1941, %v1029
    %v1998 = vadd.f32 %v1944, %v1032
    %v1999 = vadd.f32 %v1947, %v1035
    %v2000 = vadd.f32 %v1950, %v1038
    %v2001 = vadd.f32 %v1953, %v1041
    %v2002 = vadd.f32 %v1956, %v1020
    %v2003 = vadd.f32 %v1959, %v1023
    %v2004 = vadd.f32 %v1962, %v1026
    %v2005 = vadd.f32 %v1965, %v1029
    %v2006 = vadd.f32 %v1968, %v1032
    %v2007 = vadd.f32 %v1971, %v1035
    %v2008 = vadd.f32 %v1974, %v1038
    %v2009 = vadd.f32 %v1977, %v1041
    %vm2010 = vcmp.gt.f32.partialorder %v1978, 0.0
    %vm2011 = vcmp.gt.f32.partialorder %v1979, 0.0
    %vm2012 = vcmp.gt.f32.partialorder %v1980, 0.0
    %vm2013 = vcmp.gt.f32.partialorder %v1981, 0.0
    %vm2014 = vcmp.gt.f32.partialorder %v1982, 0.0
    %vm2015 = vcmp.gt.f32.partialorder %v1983, 0.0
    %vm2016 = vcmp.gt.f32.partialorder %v1984, 0.0
    %vm2017 = vcmp.gt.f32.partialorder %v1985, 0.0
    %vm2018 = vcmp.gt.f32.partialorder %v1986, 0.0
    %vm2019 = vcmp.gt.f32.partialorder %v1987, 0.0
    %vm2020 = vcmp.gt.f32.partialorder %v1988, 0.0
    %vm2021 = vcmp.gt.f32.partialorder %v1989, 0.0
    %vm2022 = vcmp.gt.f32.partialorder %v1990, 0.0
    %vm2023 = vcmp.gt.f32.partialorder %v1991, 0.0
    %vm2024 = vcmp.gt.f32.partialorder %v1992, 0.0
    %vm2025 = vcmp.gt.f32.partialorder %v1993, 0.0
    %vm2026 = vcmp.gt.f32.partialorder %v1994, 0.0
    %vm2027 = vcmp.gt.f32.partialorder %v1995, 0.0
    %vm2028 = vcmp.gt.f32.partialorder %v1996, 0.0
    %vm2029 = vcmp.gt.f32.partialorder %v1997, 0.0
    %vm2030 = vcmp.gt.f32.partialorder %v1998, 0.0
    %vm2031 = vcmp.gt.f32.partialorder %v1999, 0.0
    %vm2032 = vcmp.gt.f32.partialorder %v2000, 0.0
    %vm2033 = vcmp.gt.f32.partialorder %v2001, 0.0
    %vm2034 = vcmp.gt.f32.partialorder %v2002, 0.0
    %vm2035 = vcmp.gt.f32.partialorder %v2003, 0.0
    %vm2036 = vcmp.gt.f32.partialorder %v2004, 0.0
    %vm2037 = vcmp.gt.f32.partialorder %v2005, 0.0
    %vm2038 = vcmp.gt.f32.partialorder %v2006, 0.0
    %vm2039 = vcmp.gt.f32.partialorder %v2007, 0.0
    %vm2040 = vcmp.gt.f32.partialorder %v2008, 0.0
    %vm2041 = vcmp.gt.f32.partialorder %v2009, 0.0
    %v2042 = vmul.f32 %v1978, 0.2
    %v2043 = vmul.f32 %v1979, 0.2
    %v2044 = vmul.f32 %v1980, 0.2
    %v2045 = vmul.f32 %v1981, 0.2
    %v2046 = vmul.f32 %v1982, 0.2
    %v2047 = vmul.f32 %v1983, 0.2
    %v2048 = vmul.f32 %v1984, 0.2
    %v2049 = vmul.f32 %v1985, 0.2
    %v2050 = vmul.f32 %v1986, 0.2
    %v2051 = vmul.f32 %v1987, 0.2
    %v2052 = vmul.f32 %v1988, 0.2
    %v2053 = vmul.f32 %v1989, 0.2
    %v2054 = vmul.f32 %v1990, 0.2
    %v2055 = vmul.f32 %v1991, 0.2
    %v2056 = vmul.f32 %v1992, 0.2
    %v2057 = vmul.f32 %v1993, 0.2
    %v2058 = vmul.f32 %v1994, 0.2
    %v2059 = vmul.f32 %v1995, 0.2
    %v2060 = vmul.f32 %v1996, 0.2
    %v2061 = vmul.f32 %v1997, 0.2
    %v2062 = vmul.f32 %v1998, 0.2
    %v2063 = vmul.f32 %v1999, 0.2
    %v2064 = vmul.f32 %v2000, 0.2
    %v2065 = vmul.f32 %v2001, 0.2
    %v2066 = vmul.f32 %v2002, 0.2
    %v2067 = vmul.f32 %v2003, 0.2
    %v2068 = vmul.f32 %v2004, 0.2
    %v2069 = vmul.f32 %v2005, 0.2
    %v2070 = vmul.f32 %v2006, 0.2
    %v2071 = vmul.f32 %v2007, 0.2
    %v2072 = vmul.f32 %v2008, 0.2
    %v2073 = vmul.f32 %v2009, 0.2
    %v2074 = vsel %vm2010, %v1978, %v2042
    %v2075 = vsel %vm2011, %v1979, %v2043
    %v2076 = vsel %vm2012, %v1980, %v2044
    %v2077 = vsel %vm2013, %v1981, %v2045
    %v2078 = vsel %vm2014, %v1982, %v2046
    %v2079 = vsel %vm2015, %v1983, %v2047
    %v2080 = vsel %vm2016, %v1984, %v2048
    %v2081 = vsel %vm2017, %v1985, %v2049
    %v2082 = vsel %vm2018, %v1986, %v2050
    %v2083 = vsel %vm2019, %v1987, %v2051
    %v2084 = vsel %vm2020, %v1988, %v2052
    %v2085 = vsel %vm2021, %v1989, %v2053
    %v2086 = vsel %vm2022, %v1990, %v2054
    %v2087 = vsel %vm2023, %v1991, %v2055
    %v2088 = vsel %vm2024, %v1992, %v2056
    %v2089 = vsel %vm2025, %v1993, %v2057
    %v2090 = vsel %vm2026, %v1994, %v2058
    %v2091 = vsel %vm2027, %v1995, %v2059
    %v2092 = vsel %vm2028, %v1996, %v2060
    %v2093 = vsel %vm2029, %v1997, %v2061
    %v2094 = vsel %vm2030, %v1998, %v2062
    %v2095 = vsel %vm2031, %v1999, %v2063
    %v2096 = vsel %vm2032, %v2000, %v2064
    %v2097 = vsel %vm2033, %v2001, %v2065
    %v2098 = vsel %vm2034, %v2002, %v2066
    %v2099 = vsel %vm2035, %v2003, %v2067
    %v2100 = vsel %vm2036, %v2004, %v2068
    %v2101 = vsel %vm2037, %v2005, %v2069
    %v2102 = vsel %vm2038, %v2006, %v2070
    %v2103 = vsel %vm2039, %v2007, %v2071
    %v2104 = vsel %vm2040, %v2008, %v2072
    %v2105 = vsel %vm2041, %v2009, %v2073
    %vm2106 = vcmp.gt.f32.partialorder %v938, 0.5
    %vm2107 = vcmp.gt.f32.partialorder %v939, 0.5
    %vm2108 = vcmp.gt.f32.partialorder %v940, 0.5
    %vm2109 = vcmp.gt.f32.partialorder %v941, 0.5
    %vm2110 = vcmp.gt.f32.partialorder %v942, 0.5
    %vm2111 = vcmp.gt.f32.partialorder %v943, 0.5
    %vm2112 = vcmp.gt.f32.partialorder %v944, 0.5
    %vm2113 = vcmp.gt.f32.partialorder %v945, 0.5
    %vm2114 = vcmp.gt.f32.partialorder %v946, 0.5
    %vm2115 = vcmp.gt.f32.partialorder %v947, 0.5
    %vm2116 = vcmp.gt.f32.partialorder %v948, 0.5
    %vm2117 = vcmp.gt.f32.partialorder %v949, 0.5
    %vm2118 = vcmp.gt.f32.partialorder %v950, 0.5
    %vm2119 = vcmp.gt.f32.partialorder %v951, 0.5
    %vm2120 = vcmp.gt.f32.partialorder %v952, 0.5
    %vm2121 = vcmp.gt.f32.partialorder %v953, 0.5
    %vm2122 = vcmp.gt.f32.partialorder %v954, 0.5
    %vm2123 = vcmp.gt.f32.partialorder %v955, 0.5
    %vm2124 = vcmp.gt.f32.partialorder %v956, 0.5
    %vm2125 = vcmp.gt.f32.partialorder %v957, 0.5
    %vm2126 = vcmp.gt.f32.partialorder %v958, 0.5
    %vm2127 = vcmp.gt.f32.partialorder %v959, 0.5
    %vm2128 = vcmp.gt.f32.partialorder %v960, 0.5
    %vm2129 = vcmp.gt.f32.partialorder %v961, 0.5
    %vm2130 = vcmp.gt.f32.partialorder %v962, 0.5
    %vm2131 = vcmp.gt.f32.partialorder %v963, 0.5
    %vm2132 = vcmp.gt.f32.partialorder %v964, 0.5
    %vm2133 = vcmp.gt.f32.partialorder %v965, 0.5
    %vm2134 = vcmp.gt.f32.partialorder %v966, 0.5
    %vm2135 = vcmp.gt.f32.partialorder %v967, 0.5
    %vm2136 = vcmp.gt.f32.partialorder %v968, 0.5
    %vm2137 = vcmp.gt.f32.partialorder %v969, 0.5
    %v2138 = vsel %vm2106, %v2074, -1e+30
    %v2139 = vsel %vm2107, %v2075, -1e+30
    %v2140 = vsel %vm2108, %v2076, -1e+30
    %v2141 = vsel %vm2109, %v2077, -1e+30
    %v2142 = vsel %vm2110, %v2078, -1e+30
    %v2143 = vsel %vm2111, %v2079, -1e+30
    %v2144 = vsel %vm2112, %v2080, -1e+30
    %v2145 = vsel %vm2113, %v2081, -1e+30
    %v2146 = vsel %vm2114, %v2082, -1e+30
    %v2147 = vsel %vm2115, %v2083, -1e+30
    %v2148 = vsel %vm2116, %v2084, -1e+30
    %v2149 = vsel %vm2117, %v2085, -1e+30
    %v2150 = vsel %vm2118, %v2086, -1e+30
    %v2151 = vsel %vm2119, %v2087, -1e+30
    %v2152 = vsel %vm2120, %v2088, -1e+30
    %v2153 = vsel %vm2121, %v2089, -1e+30
    %v2154 = vsel %vm2122, %v2090, -1e+30
    %v2155 = vsel %vm2123, %v2091, -1e+30
    %v2156 = vsel %vm2124, %v2092, -1e+30
    %v2157 = vsel %vm2125, %v2093, -1e+30
    %v2158 = vsel %vm2126, %v2094, -1e+30
    %v2159 = vsel %vm2127, %v2095, -1e+30
    %v2160 = vsel %vm2128, %v2096, -1e+30
    %v2161 = vsel %vm2129, %v2097, -1e+30
    %v2162 = vsel %vm2130, %v2098, -1e+30
    %v2163 = vsel %vm2131, %v2099, -1e+30
    %v2164 = vsel %vm2132, %v2100, -1e+30
    %v2165 = vsel %vm2133, %v2101, -1e+30
    %v2166 = vsel %vm2134, %v2102, -1e+30
    %v2167 = vsel %vm2135, %v2103, -1e+30
    %v2168 = vsel %vm2136, %v2104, -1e+30
    %v2169 = vsel %vm2137, %v2105, -1e+30
    %vm2170 = vcmask 7168
    %v2171 = vsel %vm2170, %v2138, -inf
    %v2172 = vsel %vm2170, %v2146, -inf
    %v2173 = vmax.f32 %v2171, %v2172
    %v2174 = vsel %vm2170, %v2154, -inf
    %v2175 = vmax.f32 %v2173, %v2174
    %v2176 = vsel %vm2170, %v2162, -inf
    %v2177 = vmax.f32 %v2175, %v2176
    %v2178 = vsel %vm2170, %v2139, -inf
    %v2179 = vsel %vm2170, %v2147, -inf
    %v2180 = vmax.f32 %v2178, %v2179
    %v2181 = vsel %vm2170, %v2155, -inf
    %v2182 = vmax.f32 %v2180, %v2181
    %v2183 = vsel %vm2170, %v2163, -inf
    %v2184 = vmax.f32 %v2182, %v2183
    %v2185 = vsel %vm2170, %v2140, -inf
    %v2186 = vsel %vm2170, %v2148, -inf
    %v2187 = vmax.f32 %v2185, %v2186
    %v2188 = vsel %vm2170, %v2156, -inf
    %v2189 = vmax.f32 %v2187, %v2188
    %v2190 = vsel %vm2170, %v2164, -inf
    %v2191 = vmax.f32 %v2189, %v2190
    %v2192 = vsel %vm2170, %v2141, -inf
    %v2193 = vsel %vm2170, %v2149, -inf
    %v2194 = vmax.f32 %v2192, %v2193
    %v2195 = vsel %vm2170, %v2157, -inf
    %v2196 = vmax.f32 %v2194, %v2195
    %v2197 = vsel %vm2170, %v2165, -inf
    %v2198 = vmax.f32 %v2196, %v2197
    %v2199 = vsel %vm2170, %v2142, -inf
    %v2200 = vsel %vm2170, %v2150, -inf
    %v2201 = vmax.f32 %v2199, %v2200
    %v2202 = vsel %vm2170, %v2158, -inf
    %v2203 = vmax.f32 %v2201, %v2202
    %v2204 = vsel %vm2170, %v2166, -inf
    %v2205 = vmax.f32 %v2203, %v2204
    %v2206 = vsel %vm2170, %v2143, -inf
    %v2207 = vsel %vm2170, %v2151, -inf
    %v2208 = vmax.f32 %v2206, %v2207
    %v2209 = vsel %vm2170, %v2159, -inf
    %v2210 = vmax.f32 %v2208, %v2209
    %v2211 = vsel %vm2170, %v2167, -inf
    %v2212 = vmax.f32 %v2210, %v2211
    %v2213 = vsel %vm2170, %v2144, -inf
    %v2214 = vsel %vm2170, %v2152, -inf
    %v2215 = vmax.f32 %v2213, %v2214
    %v2216 = vsel %vm2170, %v2160, -inf
    %v2217 = vmax.f32 %v2215, %v2216
    %v2218 = vsel %vm2170, %v2168, -inf
    %v2219 = vmax.f32 %v2217, %v2218
    %v2220 = vsel %vm2170, %v2145, -inf
    %v2221 = vsel %vm2170, %v2153, -inf
    %v2222 = vmax.f32 %v2220, %v2221
    %v2223 = vsel %vm2170, %v2161, -inf
    %v2224 = vmax.f32 %v2222, %v2223
    %v2225 = vsel %vm2170, %v2169, -inf
    %v2226 = vmax.f32 %v2224, %v2225
    %v2227 = vmax.f32 %v1066, %v2177
    %v2228 = vmax.f32 %v1067, %v2184
    %v2229 = vmax.f32 %v1068, %v2191
    %v2230 = vmax.f32 %v1069, %v2198
    %v2231 = vmax.f32 %v1070, %v2205
    %v2232 = vmax.f32 %v1071, %v2212
    %v2233 = vmax.f32 %v1072, %v2219
    %v2234 = vmax.f32 %v1073, %v2226
    %v2235 = vsub.f32 %v1066, %v2227
    %v2236 = vsub.f32 %v1067, %v2228
    %v2237 = vsub.f32 %v1068, %v2229
    %v2238 = vsub.f32 %v1069, %v2230
    %v2239 = vsub.f32 %v1070, %v2231
    %v2240 = vsub.f32 %v1071, %v2232
    %v2241 = vsub.f32 %v1072, %v2233
    %v2242 = vsub.f32 %v1073, %v2234
    %v2243 = vmul.f32 %v2235, 1.442695
    %v2244 = vpow.pop %v2243
    %v2245 = vmul.f32 %v2236, 1.442695
    %v2246 = vpow.pop %v2245
    %v2247 = vmul.f32 %v2237, 1.442695
    %v2248 = vpow.pop %v2247
    %v2249 = vmul.f32 %v2238, 1.442695
    %v2250 = vpow.pop %v2249
    %v2251 = vmul.f32 %v2239, 1.442695
    %v2252 = vpow.pop %v2251
    %v2253 = vmul.f32 %v2240, 1.442695
    %v2254 = vpow.pop %v2253
    %v2255 = vmul.f32 %v2241, 1.442695
    %v2256 = vpow.pop %v2255
    %v2257 = vmul.f32 %v2242, 1.442695
    %v2258 = vpow.pop %v2257
    %v2259 = vsub.f32 %v2138, %v2227
    %v2260 = vsub.f32 %v2139, %v2228
    %v2261 = vsub.f32 %v2140, %v2229
    %v2262 = vsub.f32 %v2141, %v2230
    %v2263 = vsub.f32 %v2142, %v2231
    %v2264 = vsub.f32 %v2143, %v2232
    %v2265 = vsub.f32 %v2144, %v2233
    %v2266 = vsub.f32 %v2145, %v2234
    %v2267 = vsub.f32 %v2146, %v2227
    %v2268 = vsub.f32 %v2147, %v2228
    %v2269 = vsub.f32 %v2148, %v2229
    %v2270 = vsub.f32 %v2149, %v2230
    %v2271 = vsub.f32 %v2150, %v2231
    %v2272 = vsub.f32 %v2151, %v2232
    %v2273 = vsub.f32 %v2152, %v2233
    %v2274 = vsub.f32 %v2153, %v2234
    %v2275 = vsub.f32 %v2154, %v2227
    %v2276 = vsub.f32 %v2155, %v2228
    %v2277 = vsub.f32 %v2156, %v2229
    %v2278 = vsub.f32 %v2157, %v2230
    %v2279 = vsub.f32 %v2158, %v2231
    %v2280 = vsub.f32 %v2159, %v2232
    %v2281 = vsub.f32 %v2160, %v2233
    %v2282 = vsub.f32 %v2161, %v2234
    %v2283 = vsub.f32 %v2162, %v2227
    %v2284 = vsub.f32 %v2163, %v2228
    %v2285 = vsub.f32 %v2164, %v2229
    %v2286 = vsub.f32 %v2165, %v2230
    %v2287 = vsub.f32 %v2166, %v2231
    %v2288 = vsub.f32 %v2167, %v2232
    %v2289 = vsub.f32 %v2168, %v2233
    %v2290 = vsub.f32 %v2169, %v2234
    %v2291 = vmul.f32 %v2259, 1.442695
    %v2292 = vpow.pop %v2291
    %v2293 = vmul.f32 %v2260, 1.442695
    %v2294 = vpow.pop %v2293
    %v2295 = vmul.f32 %v2261, 1.442695
    %v2296 = vpow.pop %v2295
    %v2297 = vmul.f32 %v2262, 1.442695
    %v2298 = vpow.pop %v2297
    %v2299 = vmul.f32 %v2263, 1.442695
    %v2300 = vpow.pop %v2299
    %v2301 = vmul.f32 %v2264, 1.442695
    %v2302 = vpow.pop %v2301
    %v2303 = vmul.f32 %v2265, 1.442695
    %v2304 = vpow.pop %v2303
    %v2305 = vmul.f32 %v2266, 1.442695
    %v2306 = vpow.pop %v2305
    %v2307 = vmul.f32 %v2267, 1.442695
    %v2308 = vpow.pop %v2307
    %v2309 = vmul.f32 %v2268, 1.442695
    %v2310 = vpow.pop %v2309
    %v2311 = vmul.f32 %v2269, 1.442695
    %v2312 = vpow.pop %v2311
    %v2313 = vmul.f32 %v2270, 1.442695
    %v2314 = vpow.pop %v2313
    %v2315 = vmul.f32 %v2271, 1.442695
    %v2316 = vpow.pop %v2315
    %v2317 = vmul.f32 %v2272, 1.442695
    %v2318 = vpow.pop %v2317
    %v2319 = vmul.f32 %v2273, 1.442695
    %v2320 = vpow.pop %v2319
    %v2321 = vmul.f32 %v2274, 1.442695
    %v2322 = vpow.pop %v2321
    %v2323 = vmul.f32 %v2275, 1.442695
    %v2324 = vpow.pop %v2323
    %v2325 = vmul.f32 %v2276, 1.442695
    %v2326 = vpow.pop %v2325
    %v2327 = vmul.f32 %v2277, 1.442695
    %v2328 = vpow.pop %v2327
    %v2329 = vmul.f32 %v2278, 1.442695
    %v2330 = vpow.pop %v2329
    %v2331 = vmul.f32 %v2279, 1.442695
    %v2332 = vpow.pop %v2331
    %v2333 = vmul.f32 %v2280, 1.442695
    %v2334 = vpow.pop %v2333
    %v2335 = vmul.f32 %v2281, 1.442695
    %v2336 = vpow.pop %v2335
    %v2337 = vmul.f32 %v2282, 1.442695
    %v2338 = vpow.pop %v2337
    %v2339 = vmul.f32 %v2283, 1.442695
    %v2340 = vpow.pop %v2339
    %v2341 = vmul.f32 %v2284, 1.442695
    %v2342 = vpow.pop %v2341
    %v2343 = vmul.f32 %v2285, 1.442695
    %v2344 = vpow.pop %v2343
    %v2345 = vmul.f32 %v2286, 1.442695
    %v2346 = vpow.pop %v2345
    %v2347 = vmul.f32 %v2287, 1.442695
    %v2348 = vpow.pop %v2347
    %v2349 = vmul.f32 %v2288, 1.442695
    %v2350 = vpow.pop %v2349
    %v2351 = vmul.f32 %v2289, 1.442695
    %v2352 = vpow.pop %v2351
    %v2353 = vmul.f32 %v2290, 1.442695
    %v2354 = vpow.pop %v2353
    %v2355 = vsel %vm2170, %v2292, 0.0
    %v2356 = vsel %vm2170, %v2308, 0.0
    %v2357 = vadd.f32 %v2355, %v2356
    %v2358 = vsel %vm2170, %v2324, 0.0
    %v2359 = vadd.f32 %v2357, %v2358
    %v2360 = vsel %vm2170, %v2340, 0.0
    %v2361 = vadd.f32 %v2359, %v2360
    %v2362 = vsel %vm2170, %v2294, 0.0
    %v2363 = vsel %vm2170, %v2310, 0.0
    %v2364 = vadd.f32 %v2362, %v2363
    %v2365 = vsel %vm2170, %v2326, 0.0
    %v2366 = vadd.f32 %v2364, %v2365
    %v2367 = vsel %vm2170, %v2342, 0.0
    %v2368 = vadd.f32 %v2366, %v2367
    %v2369 = vsel %vm2170, %v2296, 0.0
    %v2370 = vsel %vm2170, %v2312, 0.0
    %v2371 = vadd.f32 %v2369, %v2370
    %v2372 = vsel %vm2170, %v2328, 0.0
    %v2373 = vadd.f32 %v2371, %v2372
    %v2374 = vsel %vm2170, %v2344, 0.0
    %v2375 = vadd.f32 %v2373, %v2374
    %v2376 = vsel %vm2170, %v2298, 0.0
    %v2377 = vsel %vm2170, %v2314, 0.0
    %v2378 = vadd.f32 %v2376, %v2377
    %v2379 = vsel %vm2170, %v2330, 0.0
    %v2380 = vadd.f32 %v2378, %v2379
    %v2381 = vsel %vm2170, %v2346, 0.0
    %v2382 = vadd.f32 %v2380, %v2381
    %v2383 = vsel %vm2170, %v2300, 0.0
    %v2384 = vsel %vm2170, %v2316, 0.0
    %v2385 = vadd.f32 %v2383, %v2384
    %v2386 = vsel %vm2170, %v2332, 0.0
    %v2387 = vadd.f32 %v2385, %v2386
    %v2388 = vsel %vm2170, %v2348, 0.0
    %v2389 = vadd.f32 %v2387, %v2388
    %v2390 = vsel %vm2170, %v2302, 0.0
    %v2391 = vsel %vm2170, %v2318, 0.0
    %v2392 = vadd.f32 %v2390, %v2391
    %v2393 = vsel %vm2170, %v2334, 0.0
    %v2394 = vadd.f32 %v2392, %v2393
    %v2395 = vsel %vm2170, %v2350, 0.0
    %v2396 = vadd.f32 %v2394, %v2395
    %v2397 = vsel %vm2170, %v2304, 0.0
    %v2398 = vsel %vm2170, %v2320, 0.0
    %v2399 = vadd.f32 %v2397, %v2398
    %v2400 = vsel %vm2170, %v2336, 0.0
    %v2401 = vadd.f32 %v2399, %v2400
    %v2402 = vsel %vm2170, %v2352, 0.0
    %v2403 = vadd.f32 %v2401, %v2402
    %v2404 = vsel %vm2170, %v2306, 0.0
    %v2405 = vsel %vm2170, %v2322, 0.0
    %v2406 = vadd.f32 %v2404, %v2405
    %v2407 = vsel %vm2170, %v2338, 0.0
    %v2408 = vadd.f32 %v2406, %v2407
    %v2409 = vsel %vm2170, %v2354, 0.0
    %v2410 = vadd.f32 %v2408, %v2409
    %v2411 = vadd.f32 %v2244, %v2361
    %v2412 = vadd.f32 %v2246, %v2368
    %v2413 = vadd.f32 %v2248, %v2375
    %v2414 = vadd.f32 %v2250, %v2382
    %v2415 = vadd.f32 %v2252, %v2389
    %v2416 = vadd.f32 %v2254, %v2396
    %v2417 = vadd.f32 %v2256, %v2403
    %v2418 = vadd.f32 %v2258, %v2410
    %2420 = vset.pattern.permute.xlu0 0
    %2421 = vperm.xlu0 %2420, %v2244
    %v2422 = vpop.permute.xlu0 %2421
    %2425 = vset.pattern.permute.xlu0 0
    %2426 = vperm.xlu0 %2425, %v2246
    %v2427 = vpop.permute.xlu0 %2426
    %2430 = vset.pattern.permute.xlu0 0
    %2431 = vperm.xlu0 %2430, %v2248
    %v2432 = vpop.permute.xlu0 %2431
    %2435 = vset.pattern.permute.xlu0 0
    %2436 = vperm.xlu0 %2435, %v2250
    %v2437 = vpop.permute.xlu0 %2436
    %2440 = vset.pattern.permute.xlu0 0
    %2441 = vperm.xlu0 %2440, %v2252
    %v2442 = vpop.permute.xlu0 %2441
    %2445 = vset.pattern.permute.xlu0 0
    %2446 = vperm.xlu0 %2445, %v2254
    %v2447 = vpop.permute.xlu0 %2446
    %2450 = vset.pattern.permute.xlu0 0
    %2451 = vperm.xlu0 %2450, %v2256
    %v2452 = vpop.permute.xlu0 %2451
    %2455 = vset.pattern.permute.xlu0 0
    %2456 = vperm.xlu0 %2455, %v2258
    %v2457 = vpop.permute.xlu0 %2456
    %v2459 = vmul.f32 %v2422, %v930
    %v2460 = vmul.f32 %v2427, %v931
    %v2461 = vmul.f32 %v2432, %v932
    %v2462 = vmul.f32 %v2437, %v933
    %v2463 = vmul.f32 %v2442, %v934
    %v2464 = vmul.f32 %v2447, %v935
    %v2465 = vmul.f32 %v2452, %v936
    %v2466 = vmul.f32 %v2457, %v937
    %2468 = vset.pattern.permute.xlu0 0
    %2469 = vperm.xlu0 %2468, %v2292
    %v2470 = vpop.permute.xlu0 %2469
    %2473 = vset.pattern.permute.xlu0 0
    %2474 = vperm.xlu0 %2473, %v2294
    %v2475 = vpop.permute.xlu0 %2474
    %2478 = vset.pattern.permute.xlu0 0
    %2479 = vperm.xlu0 %2478, %v2296
    %v2480 = vpop.permute.xlu0 %2479
    %2483 = vset.pattern.permute.xlu0 0
    %2484 = vperm.xlu0 %2483, %v2298
    %v2485 = vpop.permute.xlu0 %2484
    %2488 = vset.pattern.permute.xlu0 0
    %2489 = vperm.xlu0 %2488, %v2300
    %v2490 = vpop.permute.xlu0 %2489
    %2493 = vset.pattern.permute.xlu0 0
    %2494 = vperm.xlu0 %2493, %v2302
    %v2495 = vpop.permute.xlu0 %2494
    %2498 = vset.pattern.permute.xlu0 0
    %2499 = vperm.xlu0 %2498, %v2304
    %v2500 = vpop.permute.xlu0 %2499
    %2503 = vset.pattern.permute.xlu0 0
    %2504 = vperm.xlu0 %2503, %v2306
    %v2505 = vpop.permute.xlu0 %2504
    %2508 = vset.pattern.permute.xlu0 0
    %2509 = vperm.xlu0 %2508, %v2308
    %v2510 = vpop.permute.xlu0 %2509
    %2513 = vset.pattern.permute.xlu0 0
    %2514 = vperm.xlu0 %2513, %v2310
    %v2515 = vpop.permute.xlu0 %2514
    %2518 = vset.pattern.permute.xlu0 0
    %2519 = vperm.xlu0 %2518, %v2312
    %v2520 = vpop.permute.xlu0 %2519
    %2523 = vset.pattern.permute.xlu0 0
    %2524 = vperm.xlu0 %2523, %v2314
    %v2525 = vpop.permute.xlu0 %2524
    %2528 = vset.pattern.permute.xlu0 0
    %2529 = vperm.xlu0 %2528, %v2316
    %v2530 = vpop.permute.xlu0 %2529
    %2533 = vset.pattern.permute.xlu0 0
    %2534 = vperm.xlu0 %2533, %v2318
    %v2535 = vpop.permute.xlu0 %2534
    %2538 = vset.pattern.permute.xlu0 0
    %2539 = vperm.xlu0 %2538, %v2320
    %v2540 = vpop.permute.xlu0 %2539
    %2543 = vset.pattern.permute.xlu0 0
    %2544 = vperm.xlu0 %2543, %v2322
    %v2545 = vpop.permute.xlu0 %2544
    %2548 = vset.pattern.permute.xlu0 0
    %2549 = vperm.xlu0 %2548, %v2324
    %v2550 = vpop.permute.xlu0 %2549
    %2553 = vset.pattern.permute.xlu0 0
    %2554 = vperm.xlu0 %2553, %v2326
    %v2555 = vpop.permute.xlu0 %2554
    %2558 = vset.pattern.permute.xlu0 0
    %2559 = vperm.xlu0 %2558, %v2328
    %v2560 = vpop.permute.xlu0 %2559
    %2563 = vset.pattern.permute.xlu0 0
    %2564 = vperm.xlu0 %2563, %v2330
    %v2565 = vpop.permute.xlu0 %2564
    %2568 = vset.pattern.permute.xlu0 0
    %2569 = vperm.xlu0 %2568, %v2332
    %v2570 = vpop.permute.xlu0 %2569
    %2573 = vset.pattern.permute.xlu0 0
    %2574 = vperm.xlu0 %2573, %v2334
    %v2575 = vpop.permute.xlu0 %2574
    %2578 = vset.pattern.permute.xlu0 0
    %2579 = vperm.xlu0 %2578, %v2336
    %v2580 = vpop.permute.xlu0 %2579
    %2583 = vset.pattern.permute.xlu0 0
    %2584 = vperm.xlu0 %2583, %v2338
    %v2585 = vpop.permute.xlu0 %2584
    %2588 = vset.pattern.permute.xlu0 0
    %2589 = vperm.xlu0 %2588, %v2340
    %v2590 = vpop.permute.xlu0 %2589
    %2593 = vset.pattern.permute.xlu0 0
    %2594 = vperm.xlu0 %2593, %v2342
    %v2595 = vpop.permute.xlu0 %2594
    %2598 = vset.pattern.permute.xlu0 0
    %2599 = vperm.xlu0 %2598, %v2344
    %v2600 = vpop.permute.xlu0 %2599
    %2603 = vset.pattern.permute.xlu0 0
    %2604 = vperm.xlu0 %2603, %v2346
    %v2605 = vpop.permute.xlu0 %2604
    %2608 = vset.pattern.permute.xlu0 0
    %2609 = vperm.xlu0 %2608, %v2348
    %v2610 = vpop.permute.xlu0 %2609
    %2613 = vset.pattern.permute.xlu0 0
    %2614 = vperm.xlu0 %2613, %v2350
    %v2615 = vpop.permute.xlu0 %2614
    %2618 = vset.pattern.permute.xlu0 0
    %2619 = vperm.xlu0 %2618, %v2352
    %v2620 = vpop.permute.xlu0 %2619
    %2623 = vset.pattern.permute.xlu0 0
    %2624 = vperm.xlu0 %2623, %v2354
    %v2625 = vpop.permute.xlu0 %2624
    %v2627 = vmul.f32 %v2470, %v1818
    %v2628 = vmul.f32 %v2475, %v1819
    %v2629 = vmul.f32 %v2480, %v1820
    %v2630 = vmul.f32 %v2485, %v1821
    %v2631 = vmul.f32 %v2490, %v1822
    %v2632 = vmul.f32 %v2495, %v1823
    %v2633 = vmul.f32 %v2500, %v1824
    %v2634 = vmul.f32 %v2505, %v1825
    %v2635 = vmul.f32 %v2510, %v1826
    %v2636 = vmul.f32 %v2515, %v1827
    %v2637 = vmul.f32 %v2520, %v1828
    %v2638 = vmul.f32 %v2525, %v1829
    %v2639 = vmul.f32 %v2530, %v1830
    %v2640 = vmul.f32 %v2535, %v1831
    %v2641 = vmul.f32 %v2540, %v1832
    %v2642 = vmul.f32 %v2545, %v1833
    %v2643 = vmul.f32 %v2550, %v1834
    %v2644 = vmul.f32 %v2555, %v1835
    %v2645 = vmul.f32 %v2560, %v1836
    %v2646 = vmul.f32 %v2565, %v1837
    %v2647 = vmul.f32 %v2570, %v1838
    %v2648 = vmul.f32 %v2575, %v1839
    %v2649 = vmul.f32 %v2580, %v1840
    %v2650 = vmul.f32 %v2585, %v1841
    %v2651 = vmul.f32 %v2590, %v1842
    %v2652 = vmul.f32 %v2595, %v1843
    %v2653 = vmul.f32 %v2600, %v1844
    %v2654 = vmul.f32 %v2605, %v1845
    %v2655 = vmul.f32 %v2610, %v1846
    %v2656 = vmul.f32 %v2615, %v1847
    %v2657 = vmul.f32 %v2620, %v1848
    %v2658 = vmul.f32 %v2625, %v1849
    %v2659 = vsel %vm310, %v2627, 0.0
    %v2660 = vsel %vm310, %v2635, 0.0
    %v2661 = vadd.f32 %v2659, %v2660
    %v2662 = vsel %vm310, %v2643, 0.0
    %v2663 = vadd.f32 %v2661, %v2662
    %v2664 = vsel %vm310, %v2651, 0.0
    %v2665 = vadd.f32 %v2663, %v2664
    %v2666 = vsel %vm310, %v2628, 0.0
    %v2667 = vsel %vm310, %v2636, 0.0
    %v2668 = vadd.f32 %v2666, %v2667
    %v2669 = vsel %vm310, %v2644, 0.0
    %v2670 = vadd.f32 %v2668, %v2669
    %v2671 = vsel %vm310, %v2652, 0.0
    %v2672 = vadd.f32 %v2670, %v2671
    %v2673 = vsel %vm310, %v2629, 0.0
    %v2674 = vsel %vm310, %v2637, 0.0
    %v2675 = vadd.f32 %v2673, %v2674
    %v2676 = vsel %vm310, %v2645, 0.0
    %v2677 = vadd.f32 %v2675, %v2676
    %v2678 = vsel %vm310, %v2653, 0.0
    %v2679 = vadd.f32 %v2677, %v2678
    %v2680 = vsel %vm310, %v2630, 0.0
    %v2681 = vsel %vm310, %v2638, 0.0
    %v2682 = vadd.f32 %v2680, %v2681
    %v2683 = vsel %vm310, %v2646, 0.0
    %v2684 = vadd.f32 %v2682, %v2683
    %v2685 = vsel %vm310, %v2654, 0.0
    %v2686 = vadd.f32 %v2684, %v2685
    %v2687 = vsel %vm310, %v2631, 0.0
    %v2688 = vsel %vm310, %v2639, 0.0
    %v2689 = vadd.f32 %v2687, %v2688
    %v2690 = vsel %vm310, %v2647, 0.0
    %v2691 = vadd.f32 %v2689, %v2690
    %v2692 = vsel %vm310, %v2655, 0.0
    %v2693 = vadd.f32 %v2691, %v2692
    %v2694 = vsel %vm310, %v2632, 0.0
    %v2695 = vsel %vm310, %v2640, 0.0
    %v2696 = vadd.f32 %v2694, %v2695
    %v2697 = vsel %vm310, %v2648, 0.0
    %v2698 = vadd.f32 %v2696, %v2697
    %v2699 = vsel %vm310, %v2656, 0.0
    %v2700 = vadd.f32 %v2698, %v2699
    %v2701 = vsel %vm310, %v2633, 0.0
    %v2702 = vsel %vm310, %v2641, 0.0
    %v2703 = vadd.f32 %v2701, %v2702
    %v2704 = vsel %vm310, %v2649, 0.0
    %v2705 = vadd.f32 %v2703, %v2704
    %v2706 = vsel %vm310, %v2657, 0.0
    %v2707 = vadd.f32 %v2705, %v2706
    %v2708 = vsel %vm310, %v2634, 0.0
    %v2709 = vsel %vm310, %v2642, 0.0
    %v2710 = vadd.f32 %v2708, %v2709
    %v2711 = vsel %vm310, %v2650, 0.0
    %v2712 = vadd.f32 %v2710, %v2711
    %v2713 = vsel %vm310, %v2658, 0.0
    %v2714 = vadd.f32 %v2712, %v2713
    %v2715 = vadd.f32 %v2459, %v2665
    %v2716 = vadd.f32 %v2460, %v2672
    %v2717 = vadd.f32 %v2461, %v2679
    %v2718 = vadd.f32 %v2462, %v2686
    %v2719 = vadd.f32 %v2463, %v2693
    %v2720 = vadd.f32 %v2464, %v2700
    %v2721 = vadd.f32 %v2465, %v2707
    %v2722 = vadd.f32 %v2466, %v2714
    %v2723 = vpack.c.bf16 %v2716, %v2715
    %v2724 = vpack.c.bf16 %v2718, %v2717
    %v2725 = vpack.c.bf16 %v2720, %v2719
    %v2726 = vpack.c.bf16 %v2722, %v2721
    %v2731 = vunpack.c.l.b16 %v51
    %v2732 = vunpack.c.l.b16 %v52
    %v2733 = vunpack.c.l.b16 %v53
    %v2734 = vunpack.c.l.b16 %v54
    %v2735 = vpack.c.b16 %v2732, %v2731
    %v2736 = vpack.c.b16 %v2734, %v2733
    %v2740 = vsel %vm310, %v2723, 0
    %v2743 = vsel %vm310, %v2724, 0
    %v2746 = vsel %vm310, %v2725, 0
    %v2749 = vsel %vm310, %v2726, 0
    %2751 = vmatprep.subr.bf16.mxu0 0
    %2752 = vmatpush1.bf16.msra.mxu0 0
    %2753 = vmatprep.subr.bf16.mxu0 0
    %2754 = vmatpush1.bf16.msra.mxu0 0
    %2755 = vmatprep.subr.bf16.mxu0 0
    %2756 = vmatpush1.bf16.msra.mxu0 0
    %2757 = vmatprep.subr.bf16.mxu0 0
    %2758 = vmatpush1.bf16.msra.mxu0 0
    %2759 = vmatprep.subr.bf16.mxu0 0
    %2760 = vmatpush1.bf16.msra.mxu0 0
    %2761 = vmatprep.subr.bf16.mxu0 0
    %2762 = vmatpush1.bf16.msra.mxu0 0
    %2763 = vmatprep.subr.bf16.mxu0 0
    %2764 = vmatpush1.bf16.msra.mxu0 %v2736
    %2765 = vmatprep.subr.bf16.mxu0 0
    %2766 = vmatpush1.bf16.msra.mxu0 %v2735
    %2767 = vmatprep.subr.bf16.mxu0 0
    %2768 = vmatpush2.bf16.msra.mxu0 0
    %2769 = vmatprep.subr.bf16.mxu0 0
    %2770 = vmatpush2.bf16.msra.mxu0 0
    %2771 = vmatprep.subr.bf16.mxu0 0
    %2772 = vmatpush2.bf16.msra.mxu0 0
    %2773 = vmatprep.subr.bf16.mxu0 0
    %2774 = vmatpush2.bf16.msra.mxu0 0
    %2775 = vmatprep.subr.bf16.mxu0 0
    %2776 = vmatpush2.bf16.msra.mxu0 0
    %2777 = vmatprep.subr.bf16.mxu0 0
    %2778 = vmatpush2.bf16.msra.mxu0 0
    %2779 = vmatprep.subr.bf16.mxu0 0
    %2780 = vmatpush2.bf16.msra.mxu0 0
    %2781 = vmatprep.subr.bf16.mxu0 0
    %2782 = vmatpush2.bf16.msra.mxu0 0
    %2783 = vmatprep.mubr.bf16.mxu0 0
    %2784 = vmatmul.mubr.bf16.gmra.mxu0 %v2740
    %v2785 = vpop.f32.mrf.mxu0
    %v2786 = vadd.f32 0.0, %v2785
    %v2787 = vpop.f32.mrf.mxu0
    %v2788 = vpop.f32.mrf.mxu0
    %v2789 = vadd.f32 0.0, %v2788
    %v2790 = vpop.f32.mrf.mxu0
    %2791 = vmatprep.mubr.bf16.mxu0 0
    %2792 = vmatmul.mubr.bf16.gmra.mxu0 %v2743
    %v2793 = vpop.f32.mrf.mxu0
    %v2794 = vadd.f32 0.0, %v2793
    %v2795 = vpop.f32.mrf.mxu0
    %v2796 = vpop.f32.mrf.mxu0
    %v2797 = vadd.f32 0.0, %v2796
    %v2798 = vpop.f32.mrf.mxu0
    %2799 = vmatprep.mubr.bf16.mxu0 0
    %2800 = vmatmul.mubr.bf16.gmra.mxu0 %v2746
    %v2801 = vpop.f32.mrf.mxu0
    %v2802 = vadd.f32 0.0, %v2801
    %v2803 = vpop.f32.mrf.mxu0
    %v2804 = vpop.f32.mrf.mxu0
    %v2805 = vadd.f32 0.0, %v2804
    %v2806 = vpop.f32.mrf.mxu0
    %2807 = vmatprep.mubr.bf16.mxu0 0
    %2808 = vmatmul.mubr.bf16.gmra.mxu0 %v2749
    %v2809 = vpop.f32.mrf.mxu0
    %v2810 = vadd.f32 0.0, %v2809
    %v2811 = vpop.f32.mrf.mxu0
    %v2812 = vpop.f32.mrf.mxu0
    %v2813 = vadd.f32 0.0, %v2812
    %v2814 = vpop.f32.mrf.mxu0
    %2815 = vdwg.mxu0
    %v2816 = vrcp.pop %v2411
    %v2817 = vrcp.pop %v2412
    %v2818 = vrcp.pop %v2413
    %v2819 = vrcp.pop %v2414
    %v2820 = vrcp.pop %v2415
    %v2821 = vrcp.pop %v2416
    %v2822 = vrcp.pop %v2417
    %v2823 = vrcp.pop %v2418
    %2825 = vset.pattern.permute.xlu0 0
    %2826 = vperm.xlu0 %2825, %v2816
    %v2827 = vpop.permute.xlu0 %2826
    %2830 = vset.pattern.permute.xlu0 0
    %2831 = vperm.xlu0 %2830, %v2817
    %v2832 = vpop.permute.xlu0 %2831
    %2835 = vset.pattern.permute.xlu0 0
    %2836 = vperm.xlu0 %2835, %v2818
    %v2837 = vpop.permute.xlu0 %2836
    %2840 = vset.pattern.permute.xlu0 0
    %2841 = vperm.xlu0 %2840, %v2819
    %v2842 = vpop.permute.xlu0 %2841
    %2845 = vset.pattern.permute.xlu0 0
    %2846 = vperm.xlu0 %2845, %v2820
    %v2847 = vpop.permute.xlu0 %2846
    %2850 = vset.pattern.permute.xlu0 0
    %2851 = vperm.xlu0 %2850, %v2821
    %v2852 = vpop.permute.xlu0 %2851
    %2855 = vset.pattern.permute.xlu0 0
    %2856 = vperm.xlu0 %2855, %v2822
    %v2857 = vpop.permute.xlu0 %2856
    %2860 = vset.pattern.permute.xlu0 0
    %2861 = vperm.xlu0 %2860, %v2823
    %v2862 = vpop.permute.xlu0 %2861
    %v2864 = vmul.f32 %v2786, %v2827
    %v2865 = vmul.f32 %v2789, %v2832
    %v2866 = vmul.f32 %v2794, %v2837
    %v2867 = vmul.f32 %v2797, %v2842
    %v2868 = vmul.f32 %v2802, %v2847
    %v2869 = vmul.f32 %v2805, %v2852
    %v2870 = vmul.f32 %v2810, %v2857
    %v2871 = vmul.f32 %v2813, %v2862
    %v2872 = vlaneseq
    %v2873 = vshrl.u32 %v2872, 7
    %v2874 = vsub.s32 5, %v2873
    %v2875 = vrot.slane %v43, %v2874
    %v2876 = vadd.f32 %v2864, %v2875
    %v2877 = vadd.f32 %v2865, %v2875
    %v2878 = vadd.f32 %v2866, %v2875
    %v2879 = vadd.f32 %v2867, %v2875
    %v2880 = vadd.f32 %v2868, %v2875
    %v2881 = vadd.f32 %v2869, %v2875
    %v2882 = vadd.f32 %v2870, %v2875
    %v2883 = vadd.f32 %v2871, %v2875
    %v2884 = vsel %vm2106, 1, 0
    %v2885 = vsel %vm2107, 1, 0
    %v2886 = vsel %vm2108, 1, 0
    %v2887 = vsel %vm2109, 1, 0
    %v2888 = vsel %vm2110, 1, 0
    %v2889 = vsel %vm2111, 1, 0
    %v2890 = vsel %vm2112, 1, 0
    %v2891 = vsel %vm2113, 1, 0
    %2892 = vset.pattern.permute.xlu0 0
    %2893 = vperm.xlu0 %2892, %v2884
    %v2894 = vpop.permute.xlu0 %2893
    %2895 = vset.pattern.permute.xlu0 0
    %2896 = vperm.xlu0 %2895, %v2885
    %v2897 = vpop.permute.xlu0 %2896
    %2898 = vset.pattern.permute.xlu0 0
    %2899 = vperm.xlu0 %2898, %v2886
    %v2900 = vpop.permute.xlu0 %2899
    %2901 = vset.pattern.permute.xlu0 0
    %2902 = vperm.xlu0 %2901, %v2887
    %v2903 = vpop.permute.xlu0 %2902
    %2904 = vset.pattern.permute.xlu0 0
    %2905 = vperm.xlu0 %2904, %v2888
    %v2906 = vpop.permute.xlu0 %2905
    %2907 = vset.pattern.permute.xlu0 0
    %2908 = vperm.xlu0 %2907, %v2889
    %v2909 = vpop.permute.xlu0 %2908
    %2910 = vset.pattern.permute.xlu0 0
    %2911 = vperm.xlu0 %2910, %v2890
    %v2912 = vpop.permute.xlu0 %2911
    %2913 = vset.pattern.permute.xlu0 0
    %2914 = vperm.xlu0 %2913, %v2891
    %v2915 = vpop.permute.xlu0 %2914
    %vm2916 = vcmp.eq.s32.totalorder %v2894, 1
    %vm2917 = vcmp.eq.s32.totalorder %v2897, 1
    %vm2918 = vcmp.eq.s32.totalorder %v2900, 1
    %vm2919 = vcmp.eq.s32.totalorder %v2903, 1
    %vm2920 = vcmp.eq.s32.totalorder %v2906, 1
    %vm2921 = vcmp.eq.s32.totalorder %v2909, 1
    %vm2922 = vcmp.eq.s32.totalorder %v2912, 1
    %vm2923 = vcmp.eq.s32.totalorder %v2915, 1
    %v2924 = vsel %vm2916, %v2876, %v930
    %v2925 = vsel %vm2917, %v2877, %v931
    %v2926 = vsel %vm2918, %v2878, %v932
    %v2927 = vsel %vm2919, %v2879, %v933
    %v2928 = vsel %vm2920, %v2880, %v934
    %v2929 = vsel %vm2921, %v2881, %v935
    %v2930 = vsel %vm2922, %v2882, %v936
    %v2931 = vsel %vm2923, %v2883, %v937
    %v2932 = vpack.c.bf16 %v2925, %v2924
    %v2933 = vpack.c.bf16 %v2927, %v2926
    %v2934 = vpack.c.bf16 %v2929, %v2928
    %v2935 = vpack.c.bf16 %v2931, %v2930
    %v2936 = vlaneseq
    %v2937 = vshrl.u32 %v2936, 7
    %v2938 = vsub.s32 6, %v2937
    %v2939 = vrot.slane %v43, %v2938
    %v2944 = vunpack.c.l.b16 %v55
    %v2945 = vunpack.c.l.b16 %v56
    %v2946 = vunpack.c.l.b16 %v57
    %v2947 = vunpack.c.l.b16 %v58
    %v2948 = vpack.c.b16 %v2945, %v2944
    %v2949 = vpack.c.b16 %v2947, %v2946
    %v2953 = vsel %vm310, %v2932, 0
    %v2956 = vsel %vm310, %v2933, 0
    %v2959 = vsel %vm310, %v2934, 0
    %v2962 = vsel %vm310, %v2935, 0
    %2964 = vmatprep.subr.bf16.mxu0 0
    %2965 = vmatpush1.bf16.msra.mxu0 0
    %2966 = vmatprep.subr.bf16.mxu0 0
    %2967 = vmatpush1.bf16.msra.mxu0 0
    %2968 = vmatprep.subr.bf16.mxu0 0
    %2969 = vmatpush1.bf16.msra.mxu0 0
    %2970 = vmatprep.subr.bf16.mxu0 0
    %2971 = vmatpush1.bf16.msra.mxu0 0
    %2972 = vmatprep.subr.bf16.mxu0 0
    %2973 = vmatpush1.bf16.msra.mxu0 0
    %2974 = vmatprep.subr.bf16.mxu0 0
    %2975 = vmatpush1.bf16.msra.mxu0 0
    %2976 = vmatprep.subr.bf16.mxu0 0
    %2977 = vmatpush1.bf16.msra.mxu0 %v2949
    %2978 = vmatprep.subr.bf16.mxu0 0
    %2979 = vmatpush1.bf16.msra.mxu0 %v2948
    %2980 = vmatprep.subr.bf16.mxu0 0
    %2981 = vmatpush2.bf16.msra.mxu0 0
    %2982 = vmatprep.subr.bf16.mxu0 0
    %2983 = vmatpush2.bf16.msra.mxu0 0
    %2984 = vmatprep.subr.bf16.mxu0 0
    %2985 = vmatpush2.bf16.msra.mxu0 0
    %2986 = vmatprep.subr.bf16.mxu0 0
    %2987 = vmatpush2.bf16.msra.mxu0 0
    %2988 = vmatprep.subr.bf16.mxu0 0
    %2989 = vmatpush2.bf16.msra.mxu0 0
    %2990 = vmatprep.subr.bf16.mxu0 0
    %2991 = vmatpush2.bf16.msra.mxu0 0
    %2992 = vmatprep.subr.bf16.mxu0 0
    %2993 = vmatpush2.bf16.msra.mxu0 0
    %2994 = vmatprep.subr.bf16.mxu0 0
    %2995 = vmatpush2.bf16.msra.mxu0 0
    %2996 = vmatprep.mubr.bf16.mxu0 0
    %2997 = vmatmul.mubr.bf16.gmra.mxu0 %v2953
    %v2998 = vpop.f32.mrf.mxu0
    %v2999 = vadd.f32 %v2939, %v2998
    %v3000 = vpop.f32.mrf.mxu0
    %v3001 = vpop.f32.mrf.mxu0
    %v3002 = vadd.f32 %v2939, %v3001
    %v3003 = vpop.f32.mrf.mxu0
    %3004 = vmatprep.mubr.bf16.mxu0 0
    %3005 = vmatmul.mubr.bf16.gmra.mxu0 %v2956
    %v3006 = vpop.f32.mrf.mxu0
    %v3007 = vadd.f32 %v2939, %v3006
    %v3008 = vpop.f32.mrf.mxu0
    %v3009 = vpop.f32.mrf.mxu0
    %v3010 = vadd.f32 %v2939, %v3009
    %v3011 = vpop.f32.mrf.mxu0
    %3012 = vmatprep.mubr.bf16.mxu0 0
    %3013 = vmatmul.mubr.bf16.gmra.mxu0 %v2959
    %v3014 = vpop.f32.mrf.mxu0
    %v3015 = vadd.f32 %v2939, %v3014
    %v3016 = vpop.f32.mrf.mxu0
    %v3017 = vpop.f32.mrf.mxu0
    %v3018 = vadd.f32 %v2939, %v3017
    %v3019 = vpop.f32.mrf.mxu0
    %3020 = vmatprep.mubr.bf16.mxu0 0
    %3021 = vmatmul.mubr.bf16.gmra.mxu0 %v2962
    %v3022 = vpop.f32.mrf.mxu0
    %v3023 = vadd.f32 %v2939, %v3022
    %v3024 = vpop.f32.mrf.mxu0
    %v3025 = vpop.f32.mrf.mxu0
    %v3026 = vadd.f32 %v2939, %v3025
    %v3027 = vpop.f32.mrf.mxu0
    %3028 = vdwg.mxu0
    %3037 = vrot.lane.b32.xlu0 %v2999, 96
    %v3038 = vpop.permute.xlu0 %3037
    %3039 = vrot.lane.b32.xlu0 %v3002, 96
    %v3040 = vpop.permute.xlu0 %3039
    %3041 = vrot.lane.b32.xlu0 %v3007, 96
    %v3042 = vpop.permute.xlu0 %3041
    %3043 = vrot.lane.b32.xlu0 %v3010, 96
    %v3044 = vpop.permute.xlu0 %3043
    %3045 = vrot.lane.b32.xlu0 %v3015, 96
    %v3046 = vpop.permute.xlu0 %3045
    %3047 = vrot.lane.b32.xlu0 %v3018, 96
    %v3048 = vpop.permute.xlu0 %3047
    %3049 = vrot.lane.b32.xlu0 %v3023, 96
    %v3050 = vpop.permute.xlu0 %3049
    %3051 = vrot.lane.b32.xlu0 %v3026, 96
    %v3052 = vpop.permute.xlu0 %3051
    %v3061 = vmul.f32 %v3026, %v3038
    %v3062 = vmul.f32 %v3026, %v3040
    %v3063 = vmul.f32 %v3026, %v3042
    %v3064 = vmul.f32 %v3026, %v3044
    %v3065 = vmul.f32 %v3026, %v3046
    %v3066 = vmul.f32 %v3026, %v3048
    %v3067 = vmul.f32 %v3026, %v3050
    %v3068 = vmul.f32 %v3026, %v3052
    %v3069 = vsel %vm310, %v3061, 0.0
    %3070 = vadd.xlane.f32.xlu0 %v3069
    %v3071 = vpop.xlane.xlu0 %3070
    %v3072 = vsel %vm310, %v3062, 0.0
    %3073 = vadd.xlane.f32.xlu0 %v3072
    %v3074 = vpop.xlane.xlu0 %3073
    %v3075 = vsel %vm310, %v3063, 0.0
    %3076 = vadd.xlane.f32.xlu0 %v3075
    %v3077 = vpop.xlane.xlu0 %3076
    %v3078 = vsel %vm310, %v3064, 0.0
    %3079 = vadd.xlane.f32.xlu0 %v3078
    %v3080 = vpop.xlane.xlu0 %3079
    %v3081 = vsel %vm310, %v3065, 0.0
    %3082 = vadd.xlane.f32.xlu0 %v3081
    %v3083 = vpop.xlane.xlu0 %3082
    %v3084 = vsel %vm310, %v3066, 0.0
    %3085 = vadd.xlane.f32.xlu0 %v3084
    %v3086 = vpop.xlane.xlu0 %3085
    %v3087 = vsel %vm310, %v3067, 0.0
    %3088 = vadd.xlane.f32.xlu0 %v3087
    %v3089 = vpop.xlane.xlu0 %3088
    %v3090 = vsel %vm310, %v3068, 0.0
    %3091 = vadd.xlane.f32.xlu0 %v3090
    %v3092 = vpop.xlane.xlu0 %3091
    %v3093 = vmul.f32 %v3071, 0.17677669
    %v3094 = vmul.f32 %v3074, 0.17677669
    %v3095 = vmul.f32 %v3077, 0.17677669
    %v3096 = vmul.f32 %v3080, 0.17677669
    %v3097 = vmul.f32 %v3083, 0.17677669
    %v3098 = vmul.f32 %v3086, 0.17677669
    %v3099 = vmul.f32 %v3089, 0.17677669
    %v3100 = vmul.f32 %v3092, 0.17677669
    %v3101 = vmax.f32 %v3093, %v3097
    %v3102 = vmax.f32 %v3094, %v3098
    %v3103 = vmax.f32 %v3095, %v3099
    %v3104 = vmax.f32 %v3096, %v3100
    %v3105 = vmax.f32 %v3101, %v3102
    %v3106 = vmax.f32 %v3103, %v3104
    %v3107 = vmax.f32 %v3105, %v3106
    %v3108 = vsub.f32 %v3093, %v3107
    %v3109 = vsub.f32 %v3094, %v3107
    %v3110 = vsub.f32 %v3095, %v3107
    %v3111 = vsub.f32 %v3096, %v3107
    %v3112 = vsub.f32 %v3097, %v3107
    %v3113 = vsub.f32 %v3098, %v3107
    %v3114 = vsub.f32 %v3099, %v3107
    %v3115 = vsub.f32 %v3100, %v3107
    %v3116 = vmul.f32 %v3108, 1.442695
    %v3117 = vpow.pop %v3116
    %v3118 = vmul.f32 %v3109, 1.442695
    %v3119 = vpow.pop %v3118
    %v3120 = vmul.f32 %v3110, 1.442695
    %v3121 = vpow.pop %v3120
    %v3122 = vmul.f32 %v3111, 1.442695
    %v3123 = vpow.pop %v3122
    %v3124 = vmul.f32 %v3112, 1.442695
    %v3125 = vpow.pop %v3124
    %v3126 = vmul.f32 %v3113, 1.442695
    %v3127 = vpow.pop %v3126
    %v3128 = vmul.f32 %v3114, 1.442695
    %v3129 = vpow.pop %v3128
    %v3130 = vmul.f32 %v3115, 1.442695
    %v3131 = vpow.pop %v3130
    %v3132 = vadd.f32 %v3117, %v3119
    %v3133 = vadd.f32 %v3132, %v3121
    %v3134 = vadd.f32 %v3133, %v3123
    %v3135 = vadd.f32 %v3134, %v3125
    %v3136 = vadd.f32 %v3135, %v3127
    %v3137 = vadd.f32 %v3136, %v3129
    %v3138 = vadd.f32 %v3137, %v3131
    %v3139 = vrcp.pop %v3138
    %v3140 = vmul.f32 %v3117, %v3139
    %v3141 = vmul.f32 %v3119, %v3139
    %v3142 = vmul.f32 %v3121, %v3139
    %v3143 = vmul.f32 %v3123, %v3139
    %v3144 = vmul.f32 %v3125, %v3139
    %v3145 = vmul.f32 %v3127, %v3139
    %v3146 = vmul.f32 %v3129, %v3139
    %v3147 = vmul.f32 %v3131, %v3139
    %v3148 = vmul.f32 %v3140, %v2999
    %v3149 = vmul.f32 %v3141, %v3002
    %v3150 = vmul.f32 %v3142, %v3007
    %v3151 = vmul.f32 %v3143, %v3010
    %v3152 = vmul.f32 %v3144, %v3015
    %v3153 = vmul.f32 %v3145, %v3018
    %v3154 = vmul.f32 %v3146, %v3023
    %v3155 = vmul.f32 %v3147, %v3026
    %vm3156 = vcmask 785920
    %v3157 = vsel %vm3156, %v3148, 0.0
    %v3158 = vsel %vm3156, %v3149, 0.0
    %v3159 = vadd.f32 %v3157, %v3158
    %v3160 = vsel %vm3156, %v3150, 0.0
    %v3161 = vadd.f32 %v3159, %v3160
    %v3162 = vsel %vm3156, %v3151, 0.0
    %v3163 = vadd.f32 %v3161, %v3162
    %v3164 = vsel %vm3156, %v3152, 0.0
    %v3165 = vadd.f32 %v3163, %v3164
    %v3166 = vsel %vm3156, %v3153, 0.0
    %v3167 = vadd.f32 %v3165, %v3166
    %v3168 = vsel %vm3156, %v3154, 0.0
    %v3169 = vadd.f32 %v3167, %v3168
    %v3170 = vsel %vm3156, %v3155, 0.0
    %v3171 = vadd.f32 %v3169, %v3170
    %v3172 = vpack.c.bf16 %v3171, %v3171
    %v3173 = vlaneseq
    %v3174 = vshrl.u32 %v3173, 7
    %v3175 = vsub.s32 7, %v3174
    %v3176 = vrot.slane %v43, %v3175
    %3178 = vrot.lane.b32.xlu0 %v3172, 64
    %v3179 = vpop.permute.xlu0 %3178
    %v3184 = vunpack.c.l.b16 %v59
    %v3185 = vunpack.c.l.b16 %v60
    %v3186 = vunpack.c.l.b16 %v61
    %v3187 = vunpack.c.l.b16 %v62
    %v3188 = vpack.c.b16 %v3185, %v3184
    %v3189 = vpack.c.b16 %v3187, %v3186
    %v3193 = vsel %vm310, %v3179, 0
    %3195 = vmatprep.subr.bf16.mxu0 0
    %3196 = vmatpush1.bf16.msra.mxu0 0
    %3197 = vmatprep.subr.bf16.mxu0 0
    %3198 = vmatpush1.bf16.msra.mxu0 0
    %3199 = vmatprep.subr.bf16.mxu0 0
    %3200 = vmatpush1.bf16.msra.mxu0 0
    %3201 = vmatprep.subr.bf16.mxu0 0
    %3202 = vmatpush1.bf16.msra.mxu0 0
    %3203 = vmatprep.subr.bf16.mxu0 0
    %3204 = vmatpush1.bf16.msra.mxu0 0
    %3205 = vmatprep.subr.bf16.mxu0 0
    %3206 = vmatpush1.bf16.msra.mxu0 0
    %3207 = vmatprep.subr.bf16.mxu0 0
    %3208 = vmatpush1.bf16.msra.mxu0 %v3189
    %3209 = vmatprep.subr.bf16.mxu0 0
    %3210 = vmatpush1.bf16.msra.mxu0 %v3188
    %3211 = vmatprep.subr.bf16.mxu0 0
    %3212 = vmatpush2.bf16.msra.mxu0 0
    %3213 = vmatprep.subr.bf16.mxu0 0
    %3214 = vmatpush2.bf16.msra.mxu0 0
    %3215 = vmatprep.subr.bf16.mxu0 0
    %3216 = vmatpush2.bf16.msra.mxu0 0
    %3217 = vmatprep.subr.bf16.mxu0 0
    %3218 = vmatpush2.bf16.msra.mxu0 0
    %3219 = vmatprep.subr.bf16.mxu0 0
    %3220 = vmatpush2.bf16.msra.mxu0 0
    %3221 = vmatprep.subr.bf16.mxu0 0
    %3222 = vmatpush2.bf16.msra.mxu0 0
    %3223 = vmatprep.subr.bf16.mxu0 0
    %3224 = vmatpush2.bf16.msra.mxu0 0
    %3225 = vmatprep.subr.bf16.mxu0 0
    %3226 = vmatpush2.bf16.msra.mxu0 0
    %3227 = vmatprep.mubr.bf16.mxu0 0
    %3228 = vmatmul.mubr.bf16.gmra.mxu0 %v3193
    %v3229 = vpop.f32.mrf.mxu0
    %v3230 = vadd.f32 %v3176, %v3229
    %v3231 = vpop.f32.mrf.mxu0
    %v3232 = vpop.f32.mrf.mxu0
    %v3233 = vpop.f32.mrf.mxu0
    %3234 = vdwg.mxu0
    %v3235 = vpack.c.bf16 %v3230, %v3230
    %v3236 = vlaneseq
    %v3237 = vshrl.u32 %v3236, 7
    %v3238 = vsub.s32 0, %v3237
    %v3239 = vrot.slane %v44, %v3238
    %v3244 = vunpack.c.l.b16 %v63
    %v3245 = vunpack.c.l.b16 %v64
    %v3246 = vunpack.c.l.b16 %v65
    %v3247 = vunpack.c.l.b16 %v66
    %v3248 = vpack.c.b16 %v3245, %v3244
    %v3249 = vpack.c.b16 %v3247, %v3246
    %v3253 = vsel %vm310, %v3235, 0
    %3255 = vmatprep.subr.bf16.mxu0 0
    %3256 = vmatpush1.bf16.msra.mxu0 0
    %3257 = vmatprep.subr.bf16.mxu0 0
    %3258 = vmatpush1.bf16.msra.mxu0 0
    %3259 = vmatprep.subr.bf16.mxu0 0
    %3260 = vmatpush1.bf16.msra.mxu0 0
    %3261 = vmatprep.subr.bf16.mxu0 0
    %3262 = vmatpush1.bf16.msra.mxu0 0
    %3263 = vmatprep.subr.bf16.mxu0 0
    %3264 = vmatpush1.bf16.msra.mxu0 0
    %3265 = vmatprep.subr.bf16.mxu0 0
    %3266 = vmatpush1.bf16.msra.mxu0 0
    %3267 = vmatprep.subr.bf16.mxu0 0
    %3268 = vmatpush1.bf16.msra.mxu0 %v3249
    %3269 = vmatprep.subr.bf16.mxu0 0
    %3270 = vmatpush1.bf16.msra.mxu0 %v3248
    %3271 = vmatprep.subr.bf16.mxu0 0
    %3272 = vmatpush2.bf16.msra.mxu0 0
    %3273 = vmatprep.subr.bf16.mxu0 0
    %3274 = vmatpush2.bf16.msra.mxu0 0
    %3275 = vmatprep.subr.bf16.mxu0 0
    %3276 = vmatpush2.bf16.msra.mxu0 0
    %3277 = vmatprep.subr.bf16.mxu0 0
    %3278 = vmatpush2.bf16.msra.mxu0 0
    %3279 = vmatprep.subr.bf16.mxu0 0
    %3280 = vmatpush2.bf16.msra.mxu0 0
    %3281 = vmatprep.subr.bf16.mxu0 0
    %3282 = vmatpush2.bf16.msra.mxu0 0
    %3283 = vmatprep.subr.bf16.mxu0 0
    %3284 = vmatpush2.bf16.msra.mxu0 0
    %3285 = vmatprep.subr.bf16.mxu0 0
    %3286 = vmatpush2.bf16.msra.mxu0 0
    %3287 = vmatprep.mubr.bf16.mxu0 0
    %3288 = vmatmul.mubr.bf16.gmra.mxu0 %v3253
    %v3289 = vpop.f32.mrf.mxu0
    %v3290 = vadd.f32 %v3239, %v3289
    %v3291 = vpop.f32.mrf.mxu0
    %v3292 = vpop.f32.mrf.mxu0
    %v3293 = vpop.f32.mrf.mxu0
    %3294 = vdwg.mxu0
    %v3295 = vmax.f32 %v3290, 0.0
    %v3296 = vpack.c.bf16 %v3295, %v3295
    %v3297 = vlaneseq
    %v3298 = vshrl.u32 %v3297, 7
    %v3299 = vsub.s32 1, %v3298
    %v3300 = vrot.slane %v44, %v3299
    %v3305 = vunpack.c.l.b16 %v67
    %v3306 = vunpack.c.l.b16 %v68
    %v3307 = vunpack.c.l.b16 %v69
    %v3308 = vunpack.c.l.b16 %v70
    %v3309 = vpack.c.b16 %v3306, %v3305
    %v3310 = vpack.c.b16 %v3308, %v3307
    %v3314 = vsel %vm310, %v3296, 0
    %3316 = vmatprep.subr.bf16.mxu0 0
    %3317 = vmatpush1.bf16.msra.mxu0 0
    %3318 = vmatprep.subr.bf16.mxu0 0
    %3319 = vmatpush1.bf16.msra.mxu0 0
    %3320 = vmatprep.subr.bf16.mxu0 0
    %3321 = vmatpush1.bf16.msra.mxu0 0
    %3322 = vmatprep.subr.bf16.mxu0 0
    %3323 = vmatpush1.bf16.msra.mxu0 0
    %3324 = vmatprep.subr.bf16.mxu0 0
    %3325 = vmatpush1.bf16.msra.mxu0 0
    %3326 = vmatprep.subr.bf16.mxu0 0
    %3327 = vmatpush1.bf16.msra.mxu0 0
    %3328 = vmatprep.subr.bf16.mxu0 0
    %3329 = vmatpush1.bf16.msra.mxu0 %v3310
    %3330 = vmatprep.subr.bf16.mxu0 0
    %3331 = vmatpush1.bf16.msra.mxu0 %v3309
    %3332 = vmatprep.subr.bf16.mxu0 0
    %3333 = vmatpush2.bf16.msra.mxu0 0
    %3334 = vmatprep.subr.bf16.mxu0 0
    %3335 = vmatpush2.bf16.msra.mxu0 0
    %3336 = vmatprep.subr.bf16.mxu0 0
    %3337 = vmatpush2.bf16.msra.mxu0 0
    %3338 = vmatprep.subr.bf16.mxu0 0
    %3339 = vmatpush2.bf16.msra.mxu0 0
    %3340 = vmatprep.subr.bf16.mxu0 0
    %3341 = vmatpush2.bf16.msra.mxu0 0
    %3342 = vmatprep.subr.bf16.mxu0 0
    %3343 = vmatpush2.bf16.msra.mxu0 0
    %3344 = vmatprep.subr.bf16.mxu0 0
    %3345 = vmatpush2.bf16.msra.mxu0 0
    %3346 = vmatprep.subr.bf16.mxu0 0
    %3347 = vmatpush2.bf16.msra.mxu0 0
    %3348 = vmatprep.mubr.bf16.mxu0 0
    %3349 = vmatmul.mubr.bf16.gmra.mxu0 %v3314
    %v3350 = vpop.f32.mrf.mxu0
    %v3351 = vadd.f32 %v3300, %v3350
    %v3352 = vpop.f32.mrf.mxu0
    %v3353 = vpop.f32.mrf.mxu0
    %v3354 = vpop.f32.mrf.mxu0
    %3355 = vdwg.mxu0
    %3356 = vst [vmem:[#allocation3] sm:$0xff] %v3351
    // Predicated region
    $region50: #{tpu_custom_call.1} parent=1 // pred_check
      _
    $region51: #{tpu_custom_call.1} parent=1 // pred_check_branch
      %3358 = sbr.rel (0) target = $region53
    $region52: #{tpu_custom_call.1} parent=1 // pred_region
      %s3360 = ssub.s32 128, 128
      %3361 = vsyncadd [#allocation4], %s3360
      %s3363 = sshll.u32 [#allocation3], 4
      %s3364 = int_to_ptr.vmem [resolvable:$true] %s3363
      %3366 = dma.vmem_to_hbm [thread:$0]  %s3364, 128, %s12, [#allocation4]
    $region53: #{tpu_custom_call.1} parent=1 // pred_fallthru
      _
    // Predicated region
    $region54: #{tpu_custom_call.1} parent=1 // pred_check
      _
    $region55: #{tpu_custom_call.1} parent=1 // pred_check_branch
      %3368 = sbr.rel (0) target = $region57
    $region56: #{tpu_custom_call.1} parent=1 // pred_region
      %3369 = dma.done [#allocation4], 128
    $region57: #{tpu_custom_call.1} parent=1 // pred_fallthru
      _
    %3370 = vsyncpa [#allocation4], 1

</llo_original>
